<compile_context>
chip_gen: v7x
topology: tpu7x:2x2x1
jax: 0.10.0
libtpu: 0.0.40
codegen_flags: <defaults>
</compile_context>

<pallas_src>
import jax
import jax.numpy as jnp
from jax import lax
from jax.experimental import pallas as pl
from jax.experimental.pallas import tpu as pltpu

LANE = 128


def _vmem_budget_bytes():
    """Per-generation VMEM limit: ~80% of physical (v5e/v6e ~102 MiB, v7x ~51 MiB)."""
    try:
        cap = int(pltpu.get_tpu_info().vmem_capacity_bytes)
    except Exception:
        cap = 64 * 1024 * 1024          # conservative (v7x-sized) fallback
    return int(cap * 0.8)


def _pick_tile_rows(N, H, W, Cin, Cout_pad, use_im2col, vmem_limit, target_m=1024):
    """Row-tile TH: aim TH*W ~ target_m, shrink until the VMEM estimate fits."""
    th = max(1, min(H, target_m // max(W, 1)))
    if N == 1:
        # keep >= 2 row tiles so both v7x TensorCores get work at batch=1
        th = min(th, max(1, -(-H // 2)))

    def vmem_bytes(th_):
        hp = -(-H // th_) * th_
        img = (hp + 2) * (W + 2) * Cin * 2 * 2        # bf16 image, 2 pipeline bufs
        wgt = 9 * Cin * Cout_pad * 2                  # bf16 weights (single-buffered)
        bias = Cout_pad * 4
        outb = th_ * W * Cout_pad * 2 * 2             # bf16 out tile, 2 bufs
        col = th_ * W * 9 * Cin * 2 if use_im2col else 0
        return img + wgt + bias + outb + col

    budget = int(vmem_limit * 0.85)                    # headroom for Mosaic scratch
    while th > 1 and vmem_bytes(th) > budget:
        th -= 1
    if vmem_bytes(th) > budget:
        # TODO(synk): switch to K-tiled accumulation / halo-window DMA here.
        raise ValueError("DUC kernel does not fit VMEM at this shape; "
                         "needs K-tiling / halo-window DMA")
    return th


def _duc_kernel_direct(x_ref, w_ref, b_ref, o_ref):
    """3x3 conv + folded-BN bias + ReLU, one row tile — small-Cin path.

    Accumulates the 9 taps as 9 small-K MXU dots into an f32 value (no im2col
    scratch -> no lane-sparse scratch stores).

    x_ref: (1, Hp+2, W+2, Cin)    full padded image (bf16), batch-resident
    w_ref: (3, 3, Cin, Cout_pad)  BN-folded weights (bf16)
    b_ref: (1, Cout_pad)          BN-folded bias (f32)
    o_ref: (1, TH, W, Cout_pad)   output tile (bf16, lane-dense)
    """
    TH, W, Cout = o_ref.shape[1], o_ref.shape[2], o_ref.shape[3]
    Cin = x_ref.shape[3]

    row0 = pl.multiple_of(pl.program_id(1) * TH, TH)
    xv = x_ref[0, pl.ds(row0, TH + 2), :, :]                 # (TH+2, W+2, Cin)

    acc = None
    for t in range(9):
        dy, dx = divmod(t, 3)
        tap = xv[dy:dy + TH, dx:dx + W, :].reshape(TH * W, Cin)
        part = jnp.dot(tap, w_ref[dy, dx], preferred_element_type=jnp.float32)
        acc = part if acc is None else acc + part
    acc = jnp.maximum(acc + b_ref[...], 0.0)                 # bias + ReLU (f32)
    o_ref[...] = acc.reshape(1, TH, W, Cout).astype(o_ref.dtype)


def _duc_kernel_im2col(x_ref, w_ref, b_ref, o_ref, col_ref):
    """Same op, large-Cin path: one fat-K (9*Cin) MXU matmul over a VMEM im2col patch.

    x_ref:   (1, Hp+2, W+2, Cin)   w_ref: (9*Cin, Cout_pad)   b_ref: (1, Cout_pad)
    o_ref:   (1, TH, W, Cout_pad)  col_ref: (TH*W, 9*Cin) VMEM scratch (bf16)
    """
    TH, W, Cout = o_ref.shape[1], o_ref.shape[2], o_ref.shape[3]
    Cin = x_ref.shape[3]

    row0 = pl.multiple_of(pl.program_id(1) * TH, TH)
    xv = x_ref[0, pl.ds(row0, TH + 2), :, :]                 # (TH+2, W+2, Cin)

    for t in range(9):
        dy, dx = divmod(t, 3)
        col_ref[:, t * Cin:(t + 1) * Cin] = \
            xv[dy:dy + TH, dx:dx + W, :].reshape(TH * W, Cin)

    acc = jnp.dot(col_ref[...], w_ref[...], preferred_element_type=jnp.float32)
    acc = jnp.maximum(acc + b_ref[...], 0.0)
    o_ref[...] = acc.reshape(1, TH, W, Cout).astype(o_ref.dtype)


def dense_upsampling_convolution(x_nchw, w, b, bn_gamma, bn_beta, bn_mean, bn_var,
                                 planes, upscale_factor=2, eps=1e-5):
    """Forward pass matching the PyTorch DenseUpsamplingConvolution module.

    x_nchw: (N, Cin, H, W) float32
    w:      (Cout, Cin, 3, 3) with Cout = planes * r * r   (PyTorch OIHW layout)
    b:      (Cout,)
    Returns (N, planes, H*r, W*r) float32 (NCHW), like nn.PixelShuffle.
    """
    r = upscale_factor
    N, Cin, H, W = x_nchw.shape
    Cout = planes * r * r
    assert w.shape == (Cout, Cin, 3, 3)
    Cout_pad = -(-Cout // LANE) * LANE

    # ---- Fold eval-mode BatchNorm into conv weight/bias (plain-JAX glue) ----
    scale = bn_gamma / jnp.sqrt(bn_var + eps)                    # (Cout,)
    w_eff = w * scale[:, None, None, None]                       # (Cout, Cin, 3, 3)
    b_eff = (b - bn_mean) * scale + bn_beta                      # (Cout,)

    # (Cout, Cin, kh, kw) -> (kh, kw, Cin, Cout_pad), bf16.
    w_hwio = jnp.transpose(w_eff, (2, 3, 1, 0))
    w_hwio = jnp.pad(w_hwio, ((0, 0), (0, 0), (0, 0), (0, Cout_pad - Cout)))
    w_hwio = w_hwio.astype(jnp.bfloat16)
    b_k = jnp.pad(b_eff, (0, Cout_pad - Cout)).reshape(1, Cout_pad).astype(jnp.float32)

    vmem_limit = _vmem_budget_bytes()
    use_im2col = Cin >= LANE
    TH = _pick_tile_rows(N, H, W, Cin, Cout_pad, use_im2col, vmem_limit)
    Hp = -(-H // TH) * TH                      # row-pad so TH need not divide H

    # NCHW -> NHWC (bf16); zero-pad: 1 halo top/left/right, 1 + (Hp-H) bottom.
    x_nhwc = jnp.transpose(x_nchw, (0, 2, 3, 1)).astype(jnp.bfloat16)
    x_pad = jnp.pad(x_nhwc, ((0, 0), (1, 1 + Hp - H), (1, 1), (0, 0)))

    if use_im2col:
        kernel = _duc_kernel_im2col
        w_dev = w_hwio.reshape(9 * Cin, Cout_pad)
        w_block = (9 * Cin, Cout_pad)
        w_idx = lambda n, t: (0, 0)
        scratch = (pltpu.VMEM((TH * W, 9 * Cin), jnp.bfloat16),)
    else:
        kernel = _duc_kernel_direct
        w_dev = w_hwio
        w_block = (3, 3, Cin, Cout_pad)
        w_idx = lambda n, t: (0, 0, 0, 0)
        scratch = ()

    cost = pl.CostEstimate(
        flops=2 * N * Hp * W * 9 * Cin * Cout_pad,
        transcendentals=0,
        bytes_accessed=int(x_pad.size) * 2 + int(w_dev.size) * 2
        + int(b_k.size) * 4 + N * Hp * W * Cout_pad * 2,
    )

    def run(single_buffer_consts):
        # Constant-index blocks (weights/bias) don't need double buffering.
        const_kw = ({"pipeline_mode": pl.Buffered(1)}
                    if single_buffer_consts else {})
        grid_spec = pltpu.PrefetchScalarGridSpec(
            num_scalar_prefetch=0,
            grid=(N, Hp // TH),
            in_specs=[
                # Full padded image per batch; block index depends only on n,
                # so it stays VMEM-resident across the row-tile axis.
                pl.BlockSpec((1, Hp + 2, W + 2, Cin), lambda n, t: (n, 0, 0, 0)),
                pl.BlockSpec(w_block, w_idx, **const_kw),
                pl.BlockSpec((1, Cout_pad), lambda n, t: (0, 0), **const_kw),
            ],
            out_specs=pl.BlockSpec((1, TH, W, Cout_pad), lambda n, t: (n, t, 0, 0)),
            scratch_shapes=scratch,
        )
        return pl.pallas_call(
            kernel,
            out_shape=jax.ShapeDtypeStruct((N, Hp, W, Cout_pad), jnp.bfloat16),
            grid_spec=grid_spec,
            compiler_params=pltpu.CompilerParams(
                dimension_semantics=("parallel", "parallel"),
                vmem_limit_bytes=vmem_limit,
            ),
            cost_estimate=cost,
        )(x_pad, w_dev, b_k)

    try:
        conv_out = run(True)
    except Exception:
        # pipeline_mode=Buffered(1) unsupported on this jax version -> default buffering.
        conv_out = run(False)

    # ---- Drop row/lane padding, PixelShuffle(r), back to f32 NCHW ----
    y = conv_out[:, :H, :, :Cout]                       # (N, H, W, Cout) bf16
    y = y.reshape(N, H, W, planes, r, r)                # (N,H,W,C,i,j)
    y = jnp.transpose(y, (0, 3, 1, 4, 2, 5))            # (N,C,H,i,W,j)
    y = y.reshape(N, planes, H * r, W * r)              # NCHW output
    return y.astype(x_nchw.dtype)


def _reference_forward(x_nchw, w, b, bn_gamma, bn_beta, bn_mean, bn_var,
                       planes, r=2, eps=1e-5):
    """Pure-JAX f32 reference (lax conv) for correctness checking."""
    conv = lax.conv_general_dilated(
        x_nchw, w, window_strides=(1, 1), padding=((1, 1), (1, 1)),
        dimension_numbers=("NCHW", "OIHW", "NCHW"))
    conv = conv + b[None, :, None, None]
    scale = bn_gamma / jnp.sqrt(bn_var + eps)
    bn = (conv - bn_mean[None, :, None, None]) * scale[None, :, None, None] \
        + bn_beta[None, :, None, None]
    act = jnp.maximum(bn, 0.0)
    N, C, H, W = act.shape
    y = act.reshape(N, planes, r, r, H, W)
    y = jnp.transpose(y, (0, 1, 4, 2, 5, 3))
    return y.reshape(N, planes, H * r, W * r)


if __name__ == "__main__":
    key = jax.random.PRNGKey(0)
    k1, k2, k3, k4, k5, k6 = jax.random.split(key, 6)

    # Small shapes consistent with the module: inplanes=4, planes=4, r=2.
    N, Cin, H, W = 2, 4, 16, 16
    planes, r = 4, 2
    Cout = planes * r * r  # 16

    x = jax.random.normal(k1, (N, Cin, H, W), jnp.float32)

    # Deterministic synthetic parameters (conv + BN).
    w = jax.random.normal(k2, (Cout, Cin, 3, 3), jnp.float32) * 0.1
    b = jax.random.normal(k3, (Cout,), jnp.float32) * 0.1
    bn_gamma = 1.0 + 0.1 * jax.random.normal(k4, (Cout,), jnp.float32)
    bn_beta = 0.1 * jax.random.normal(k5, (Cout,), jnp.float32)
    bn_mean = 0.05 * jax.random.normal(k6, (Cout,), jnp.float32)
    bn_var = jnp.abs(1.0 + 0.1 * jax.random.normal(k6, (Cout,), jnp.float32))

    out = dense_upsampling_convolution(x, w, b, bn_gamma, bn_beta, bn_mean,
                                       bn_var, planes, upscale_factor=r)
    out = jax.block_until_ready(out)

    ref = _reference_forward(x, w, b, bn_gamma, bn_beta, bn_mean, bn_var,
                             planes, r)
    assert out.shape == (N, planes, H * r, W * r), out.shape
    # bf16 matmul inputs + bf16 output store (f32 accumulate) -> relaxed tolerance.
    assert jnp.allclose(out, ref, rtol=5e-2, atol=5e-2), \
        float(jnp.max(jnp.abs(out - ref)))

    print("KERNEL_OK")
</pallas_src>

<mosaic_0001>
module attributes {stable_mosaic.version = 11 : i64} {
  func.func @_duc_kernel_direct(%arg0: i32, %arg1: i32, %arg2: memref<1x18x18x4xbf16, #tpu.memory_space<vmem>>, %arg3: memref<3x3x4x128xbf16, #tpu.memory_space<vmem>>, %arg4: memref<1x128xf32, #tpu.memory_space<vmem>>, %arg5: memref<1x16x16x128xbf16, #tpu.memory_space<vmem>>) attributes {dimension_semantics = [#tpu.dimension_semantics<parallel>, #tpu.dimension_semantics<parallel>], iteration_bounds = array<i64: 2, 1>, scalar_prefetch = 0 : i64, scratch_operands = 0 : i64, tpu.core_type = #tpu.core_type<tc>, window_params = [{transform_indices = @transform_0, window_bounds = array<i64: 1, 18, 18, 4>}, {pipeline_mode = #tpu.pipeline_mode<synchronous>, transform_indices = @transform_1, window_bounds = array<i64: 3, 3, 4, 128>}, {pipeline_mode = #tpu.pipeline_mode<synchronous>, transform_indices = @transform_2, window_bounds = array<i64: 1, 128>}, {transform_indices = @transform_3, window_bounds = array<i64: 1, 16, 16, 128>}]} {
    %c16_i32 = arith.constant 16 : i32
    %0 = arith.muli %arg1, %c16_i32 : i32
    %1 = tpu.assume_multiple %0, 16 : i32
    %c0 = arith.constant 0 : index
    %2 = arith.index_cast %1 : i32 to index
    %c0_0 = arith.constant 0 : index
    %c0_1 = arith.constant 0 : index
    %3 = vector.load %arg2[%c0, %2, %c0_0, %c0_1] : memref<1x18x18x4xbf16, #tpu.memory_space<vmem>>, vector<1x18x18x4xbf16>
    %4 = vector.shape_cast %3 : vector<1x18x18x4xbf16> to vector<18x18x4xbf16>
    %5 = vector.extract_strided_slice %4 {offsets = [0, 0, 0], sizes = [16, 16, 4], strides = [1, 1, 1]} : vector<18x18x4xbf16> to vector<16x16x4xbf16>
    %6 = vector.shape_cast %5 : vector<16x16x4xbf16> to vector<256x4xbf16>
    %c0_2 = arith.constant 0 : index
    %c0_3 = arith.constant 0 : index
    %c0_4 = arith.constant 0 : index
    %c0_5 = arith.constant 0 : index
    %7 = vector.load %arg3[%c0_2, %c0_3, %c0_4, %c0_5] : memref<3x3x4x128xbf16, #tpu.memory_space<vmem>>, vector<1x1x4x128xbf16>
    %8 = vector.shape_cast %7 : vector<1x1x4x128xbf16> to vector<4x128xbf16>
    %cst = arith.constant dense<0.000000e+00> : vector<256x128xf32>
    %9 = tpu.matmul %6, %8, %cst {dimension_numbers = #tpu.dot_dimension_numbers<[1], [0], [0], [1], [0, 0, 1, 1], [], []>} : vector<256x4xbf16>, vector<4x128xbf16>, vector<256x128xf32> -> vector<256x128xf32>
    %10 = vector.extract_strided_slice %4 {offsets = [0, 1, 0], sizes = [16, 16, 4], strides = [1, 1, 1]} : vector<18x18x4xbf16> to vector<16x16x4xbf16>
    %11 = vector.shape_cast %10 : vector<16x16x4xbf16> to vector<256x4xbf16>
    %c0_6 = arith.constant 0 : index
    %c1 = arith.constant 1 : index
    %c0_7 = arith.constant 0 : index
    %c0_8 = arith.constant 0 : index
    %12 = vector.load %arg3[%c0_6, %c1, %c0_7, %c0_8] : memref<3x3x4x128xbf16, #tpu.memory_space<vmem>>, vector<1x1x4x128xbf16>
    %13 = vector.shape_cast %12 : vector<1x1x4x128xbf16> to vector<4x128xbf16>
    %cst_9 = arith.constant dense<0.000000e+00> : vector<256x128xf32>
    %14 = tpu.matmul %11, %13, %cst_9 {dimension_numbers = #tpu.dot_dimension_numbers<[1], [0], [0], [1], [0, 0, 1, 1], [], []>} : vector<256x4xbf16>, vector<4x128xbf16>, vector<256x128xf32> -> vector<256x128xf32>
    %15 = arith.addf %9, %14 : vector<256x128xf32>
    %16 = vector.extract_strided_slice %4 {offsets = [0, 2, 0], sizes = [16, 16, 4], strides = [1, 1, 1]} : vector<18x18x4xbf16> to vector<16x16x4xbf16>
    %17 = vector.shape_cast %16 : vector<16x16x4xbf16> to vector<256x4xbf16>
    %c0_10 = arith.constant 0 : index
    %c2 = arith.constant 2 : index
    %c0_11 = arith.constant 0 : index
    %c0_12 = arith.constant 0 : index
    %18 = vector.load %arg3[%c0_10, %c2, %c0_11, %c0_12] : memref<3x3x4x128xbf16, #tpu.memory_space<vmem>>, vector<1x1x4x128xbf16>
    %19 = vector.shape_cast %18 : vector<1x1x4x128xbf16> to vector<4x128xbf16>
    %cst_13 = arith.constant dense<0.000000e+00> : vector<256x128xf32>
    %20 = tpu.matmul %17, %19, %cst_13 {dimension_numbers = #tpu.dot_dimension_numbers<[1], [0], [0], [1], [0, 0, 1, 1], [], []>} : vector<256x4xbf16>, vector<4x128xbf16>, vector<256x128xf32> -> vector<256x128xf32>
    %21 = arith.addf %15, %20 : vector<256x128xf32>
    %22 = vector.extract_strided_slice %4 {offsets = [1, 0, 0], sizes = [16, 16, 4], strides = [1, 1, 1]} : vector<18x18x4xbf16> to vector<16x16x4xbf16>
    %23 = vector.shape_cast %22 : vector<16x16x4xbf16> to vector<256x4xbf16>
    %c1_14 = arith.constant 1 : index
    %c0_15 = arith.constant 0 : index
    %c0_16 = arith.constant 0 : index
    %c0_17 = arith.constant 0 : index
    %24 = vector.load %arg3[%c1_14, %c0_15, %c0_16, %c0_17] : memref<3x3x4x128xbf16, #tpu.memory_space<vmem>>, vector<1x1x4x128xbf16>
    %25 = vector.shape_cast %24 : vector<1x1x4x128xbf16> to vector<4x128xbf16>
    %cst_18 = arith.constant dense<0.000000e+00> : vector<256x128xf32>
    %26 = tpu.matmul %23, %25, %cst_18 {dimension_numbers = #tpu.dot_dimension_numbers<[1], [0], [0], [1], [0, 0, 1, 1], [], []>} : vector<256x4xbf16>, vector<4x128xbf16>, vector<256x128xf32> -> vector<256x128xf32>
    %27 = arith.addf %21, %26 : vector<256x128xf32>
    %28 = vector.extract_strided_slice %4 {offsets = [1, 1, 0], sizes = [16, 16, 4], strides = [1, 1, 1]} : vector<18x18x4xbf16> to vector<16x16x4xbf16>
    %29 = vector.shape_cast %28 : vector<16x16x4xbf16> to vector<256x4xbf16>
    %c1_19 = arith.constant 1 : index
    %c1_20 = arith.constant 1 : index
    %c0_21 = arith.constant 0 : index
    %c0_22 = arith.constant 0 : index
    %30 = vector.load %arg3[%c1_19, %c1_20, %c0_21, %c0_22] : memref<3x3x4x128xbf16, #tpu.memory_space<vmem>>, vector<1x1x4x128xbf16>
    %31 = vector.shape_cast %30 : vector<1x1x4x128xbf16> to vector<4x128xbf16>
    %cst_23 = arith.constant dense<0.000000e+00> : vector<256x128xf32>
    %32 = tpu.matmul %29, %31, %cst_23 {dimension_numbers = #tpu.dot_dimension_numbers<[1], [0], [0], [1], [0, 0, 1, 1], [], []>} : vector<256x4xbf16>, vector<4x128xbf16>, vector<256x128xf32> -> vector<256x128xf32>
    %33 = arith.addf %27, %32 : vector<256x128xf32>
    %34 = vector.extract_strided_slice %4 {offsets = [1, 2, 0], sizes = [16, 16, 4], strides = [1, 1, 1]} : vector<18x18x4xbf16> to vector<16x16x4xbf16>
    %35 = vector.shape_cast %34 : vector<16x16x4xbf16> to vector<256x4xbf16>
    %c1_24 = arith.constant 1 : index
    %c2_25 = arith.constant 2 : index
    %c0_26 = arith.constant 0 : index
    %c0_27 = arith.constant 0 : index
    %36 = vector.load %arg3[%c1_24, %c2_25, %c0_26, %c0_27] : memref<3x3x4x128xbf16, #tpu.memory_space<vmem>>, vector<1x1x4x128xbf16>
    %37 = vector.shape_cast %36 : vector<1x1x4x128xbf16> to vector<4x128xbf16>
    %cst_28 = arith.constant dense<0.000000e+00> : vector<256x128xf32>
    %38 = tpu.matmul %35, %37, %cst_28 {dimension_numbers = #tpu.dot_dimension_numbers<[1], [0], [0], [1], [0, 0, 1, 1], [], []>} : vector<256x4xbf16>, vector<4x128xbf16>, vector<256x128xf32> -> vector<256x128xf32>
    %39 = arith.addf %33, %38 : vector<256x128xf32>
    %40 = vector.extract_strided_slice %4 {offsets = [2, 0, 0], sizes = [16, 16, 4], strides = [1, 1, 1]} : vector<18x18x4xbf16> to vector<16x16x4xbf16>
    %41 = vector.shape_cast %40 : vector<16x16x4xbf16> to vector<256x4xbf16>
    %c2_29 = arith.constant 2 : index
    %c0_30 = arith.constant 0 : index
    %c0_31 = arith.constant 0 : index
    %c0_32 = arith.constant 0 : index
    %42 = vector.load %arg3[%c2_29, %c0_30, %c0_31, %c0_32] : memref<3x3x4x128xbf16, #tpu.memory_space<vmem>>, vector<1x1x4x128xbf16>
    %43 = vector.shape_cast %42 : vector<1x1x4x128xbf16> to vector<4x128xbf16>
    %cst_33 = arith.constant dense<0.000000e+00> : vector<256x128xf32>
    %44 = tpu.matmul %41, %43, %cst_33 {dimension_numbers = #tpu.dot_dimension_numbers<[1], [0], [0], [1], [0, 0, 1, 1], [], []>} : vector<256x4xbf16>, vector<4x128xbf16>, vector<256x128xf32> -> vector<256x128xf32>
    %45 = arith.addf %39, %44 : vector<256x128xf32>
    %46 = vector.extract_strided_slice %4 {offsets = [2, 1, 0], sizes = [16, 16, 4], strides = [1, 1, 1]} : vector<18x18x4xbf16> to vector<16x16x4xbf16>
    %47 = vector.shape_cast %46 : vector<16x16x4xbf16> to vector<256x4xbf16>
    %c2_34 = arith.constant 2 : index
    %c1_35 = arith.constant 1 : index
    %c0_36 = arith.constant 0 : index
    %c0_37 = arith.constant 0 : index
    %48 = vector.load %arg3[%c2_34, %c1_35, %c0_36, %c0_37] : memref<3x3x4x128xbf16, #tpu.memory_space<vmem>>, vector<1x1x4x128xbf16>
    %49 = vector.shape_cast %48 : vector<1x1x4x128xbf16> to vector<4x128xbf16>
    %cst_38 = arith.constant dense<0.000000e+00> : vector<256x128xf32>
    %50 = tpu.matmul %47, %49, %cst_38 {dimension_numbers = #tpu.dot_dimension_numbers<[1], [0], [0], [1], [0, 0, 1, 1], [], []>} : vector<256x4xbf16>, vector<4x128xbf16>, vector<256x128xf32> -> vector<256x128xf32>
    %51 = arith.addf %45, %50 : vector<256x128xf32>
    %52 = vector.extract_strided_slice %4 {offsets = [2, 2, 0], sizes = [16, 16, 4], strides = [1, 1, 1]} : vector<18x18x4xbf16> to vector<16x16x4xbf16>
    %53 = vector.shape_cast %52 : vector<16x16x4xbf16> to vector<256x4xbf16>
    %c2_39 = arith.constant 2 : index
    %c2_40 = arith.constant 2 : index
    %c0_41 = arith.constant 0 : index
    %c0_42 = arith.constant 0 : index
    %54 = vector.load %arg3[%c2_39, %c2_40, %c0_41, %c0_42] : memref<3x3x4x128xbf16, #tpu.memory_space<vmem>>, vector<1x1x4x128xbf16>
    %55 = vector.shape_cast %54 : vector<1x1x4x128xbf16> to vector<4x128xbf16>
    %cst_43 = arith.constant dense<0.000000e+00> : vector<256x128xf32>
    %56 = tpu.matmul %53, %55, %cst_43 {dimension_numbers = #tpu.dot_dimension_numbers<[1], [0], [0], [1], [0, 0, 1, 1], [], []>} : vector<256x4xbf16>, vector<4x128xbf16>, vector<256x128xf32> -> vector<256x128xf32>
    %57 = arith.addf %51, %56 : vector<256x128xf32>
    %c0_44 = arith.constant 0 : index
    %c0_45 = arith.constant 0 : index
    %58 = vector.load %arg4[%c0_44, %c0_45] : memref<1x128xf32, #tpu.memory_space<vmem>>, vector<1x128xf32>
    %59 = vector.broadcast %58 : vector<1x128xf32> to vector<256x128xf32>
    %60 = arith.addf %57, %59 : vector<256x128xf32>
    %cst_46 = arith.constant 0.000000e+00 : f32
    %61 = vector.broadcast %cst_46 : f32 to vector<256x128xf32>
    %62 = arith.maximumf %60, %61 : vector<256x128xf32>
    %63 = vector.shape_cast %62 : vector<256x128xf32> to vector<1x16x16x128xf32>
    %64 = arith.truncf %63 : vector<1x16x16x128xf32> to vector<1x16x16x128xbf16>
    %c0_47 = arith.constant 0 : index
    %c0_48 = arith.constant 0 : index
    %c0_49 = arith.constant 0 : index
    %c0_50 = arith.constant 0 : index
    %65 = vector.load %arg5[%c0_47, %c0_48, %c0_49, %c0_50] : memref<1x16x16x128xbf16, #tpu.memory_space<vmem>>, vector<1x16x16x128xbf16>
    tpu.vector_store %arg5[%c0_47, %c0_48, %c0_49, %c0_50], %64 {strides = array<i32>} : memref<1x16x16x128xbf16, #tpu.memory_space<vmem>>, vector<1x16x16x128xbf16>,
    return
  }
  func.func @transform_0(%arg0: i32, %arg1: i32) -> (i32, i32, i32, i32) {
    %c0_i32 = arith.constant 0 : i32
    %c0_i32_0 = arith.constant 0 : i32
    %c0_i32_1 = arith.constant 0 : i32
    %c0_i32_2 = arith.constant 0 : i32
    return %arg0, %c0_i32, %c0_i32_0, %c0_i32_1 : i32, i32, i32, i32
  }
  func.func @transform_1(%arg0: i32, %arg1: i32) -> (i32, i32, i32, i32) {
    %c0_i32 = arith.constant 0 : i32
    %c0_i32_0 = arith.constant 0 : i32
    %c0_i32_1 = arith.constant 0 : i32
    %c0_i32_2 = arith.constant 0 : i32
    %c0_i32_3 = arith.constant 0 : i32
    return %c0_i32, %c0_i32_0, %c0_i32_1, %c0_i32_2 : i32, i32, i32, i32
  }
  func.func @transform_2(%arg0: i32, %arg1: i32) -> (i32, i32) {
    %c0_i32 = arith.constant 0 : i32
    %c0_i32_0 = arith.constant 0 : i32
    %c0_i32_1 = arith.constant 0 : i32
    return %c0_i32, %c0_i32_0 : i32, i32
  }
  func.func @transform_3(%arg0: i32, %arg1: i32) -> (i32, i32, i32, i32) {
    %c0_i32 = arith.constant 0 : i32
    %c0_i32_0 = arith.constant 0 : i32
    %c0_i32_1 = arith.constant 0 : i32
    return %arg0, %arg1, %c0_i32, %c0_i32_0 : i32, i32, i32, i32
  }
}

module attributes {stable_mosaic.version = 11 : i64} {
  func.func @_duc_kernel_direct(%arg0: i32, %arg1: i32, %arg2: memref<1x18x18x4xbf16, #tpu.memory_space<vmem>>, %arg3: memref<3x3x4x128xbf16, #tpu.memory_space<vmem>>, %arg4: memref<1x128xf32, #tpu.memory_space<vmem>>, %arg5: memref<1x16x16x128xbf16, #tpu.memory_space<vmem>>) attributes {dimension_semantics = [#tpu.dimension_semantics<parallel>, #tpu.dimension_semantics<parallel>], iteration_bounds = array<i64: 2, 1>, scalar_prefetch = 0 : i64, scratch_operands = 0 : i64, tpu.core_type = #tpu.core_type<tc>, window_params = [{transform_indices = @transform_0, window_bounds = array<i64: 1, 18, 18, 4>}, {pipeline_mode = #tpu.pipeline_mode<synchronous>, transform_indices = @transform_1, window_bounds = array<i64: 3, 3, 4, 128>}, {pipeline_mode = #tpu.pipeline_mode<synchronous>, transform_indices = @transform_2, window_bounds = array<i64: 1, 128>}, {transform_indices = @transform_3, window_bounds = array<i64: 1, 16, 16, 128>}]} {
    %c16_i32 = arith.constant 16 : i32
    %0 = arith.muli %arg1, %c16_i32 : i32
    %1 = tpu.assume_multiple %0, 16 : i32
    %c0 = arith.constant 0 : index
    %2 = arith.index_cast %1 : i32 to index
    %c0_0 = arith.constant 0 : index
    %c0_1 = arith.constant 0 : index
    %3 = vector.load %arg2[%c0, %2, %c0_0, %c0_1] : memref<1x18x18x4xbf16, #tpu.memory_space<vmem>>, vector<1x18x18x4xbf16>
    %4 = vector.shape_cast %3 : vector<1x18x18x4xbf16> to vector<18x18x4xbf16>
    %5 = vector.extract_strided_slice %4 {offsets = [0, 0, 0], sizes = [16, 16, 4], strides = [1, 1, 1]} : vector<18x18x4xbf16> to vector<16x16x4xbf16>
    %6 = vector.shape_cast %5 : vector<16x16x4xbf16> to vector<256x4xbf16>
    %c0_2 = arith.constant 0 : index
    %c0_3 = arith.constant 0 : index
    %c0_4 = arith.constant 0 : index
    %c0_5 = arith.constant 0 : index
    %7 = vector.load %arg3[%c0_2, %c0_3, %c0_4, %c0_5] : memref<3x3x4x128xbf16, #tpu.memory_space<vmem>>, vector<1x1x4x128xbf16>
    %8 = vector.shape_cast %7 : vector<1x1x4x128xbf16> to vector<4x128xbf16>
    %cst = arith.constant dense<0.000000e+00> : vector<256x128xf32>
    %9 = tpu.matmul %6, %8, %cst {dimension_numbers = #tpu.dot_dimension_numbers<[1], [0], [0], [1], [0, 0, 1, 1], [], []>} : vector<256x4xbf16>, vector<4x128xbf16>, vector<256x128xf32> -> vector<256x128xf32>
    %10 = vector.extract_strided_slice %4 {offsets = [0, 1, 0], sizes = [16, 16, 4], strides = [1, 1, 1]} : vector<18x18x4xbf16> to vector<16x16x4xbf16>
    %11 = vector.shape_cast %10 : vector<16x16x4xbf16> to vector<256x4xbf16>
    %c0_6 = arith.constant 0 : index
    %c1 = arith.constant 1 : index
    %c0_7 = arith.constant 0 : index
    %c0_8 = arith.constant 0 : index
    %12 = vector.load %arg3[%c0_6, %c1, %c0_7, %c0_8] : memref<3x3x4x128xbf16, #tpu.memory_space<vmem>>, vector<1x1x4x128xbf16>
    %13 = vector.shape_cast %12 : vector<1x1x4x128xbf16> to vector<4x128xbf16>
    %cst_9 = arith.constant dense<0.000000e+00> : vector<256x128xf32>
    %14 = tpu.matmul %11, %13, %cst_9 {dimension_numbers = #tpu.dot_dimension_numbers<[1], [0], [0], [1], [0, 0, 1, 1], [], []>} : vector<256x4xbf16>, vector<4x128xbf16>, vector<256x128xf32> -> vector<256x128xf32>
    %15 = arith.addf %9, %14 : vector<256x128xf32>
    %16 = vector.extract_strided_slice %4 {offsets = [0, 2, 0], sizes = [16, 16, 4], strides = [1, 1, 1]} : vector<18x18x4xbf16> to vector<16x16x4xbf16>
    %17 = vector.shape_cast %16 : vector<16x16x4xbf16> to vector<256x4xbf16>
    %c0_10 = arith.constant 0 : index
    %c2 = arith.constant 2 : index
    %c0_11 = arith.constant 0 : index
    %c0_12 = arith.constant 0 : index
    %18 = vector.load %arg3[%c0_10, %c2, %c0_11, %c0_12] : memref<3x3x4x128xbf16, #tpu.memory_space<vmem>>, vector<1x1x4x128xbf16>
    %19 = vector.shape_cast %18 : vector<1x1x4x128xbf16> to vector<4x128xbf16>
    %cst_13 = arith.constant dense<0.000000e+00> : vector<256x128xf32>
    %20 = tpu.matmul %17, %19, %cst_13 {dimension_numbers = #tpu.dot_dimension_numbers<[1], [0], [0], [1], [0, 0, 1, 1], [], []>} : vector<256x4xbf16>, vector<4x128xbf16>, vector<256x128xf32> -> vector<256x128xf32>
    %21 = arith.addf %15, %20 : vector<256x128xf32>
    %22 = vector.extract_strided_slice %4 {offsets = [1, 0, 0], sizes = [16, 16, 4], strides = [1, 1, 1]} : vector<18x18x4xbf16> to vector<16x16x4xbf16>
    %23 = vector.shape_cast %22 : vector<16x16x4xbf16> to vector<256x4xbf16>
    %c1_14 = arith.constant 1 : index
    %c0_15 = arith.constant 0 : index
    %c0_16 = arith.constant 0 : index
    %c0_17 = arith.constant 0 : index
    %24 = vector.load %arg3[%c1_14, %c0_15, %c0_16, %c0_17] : memref<3x3x4x128xbf16, #tpu.memory_space<vmem>>, vector<1x1x4x128xbf16>
    %25 = vector.shape_cast %24 : vector<1x1x4x128xbf16> to vector<4x128xbf16>
    %cst_18 = arith.constant dense<0.000000e+00> : vector<256x128xf32>
    %26 = tpu.matmul %23, %25, %cst_18 {dimension_numbers = #tpu.dot_dimension_numbers<[1], [0], [0], [1], [0, 0, 1, 1], [], []>} : vector<256x4xbf16>, vector<4x128xbf16>, vector<256x128xf32> -> vector<256x128xf32>
    %27 = arith.addf %21, %26 : vector<256x128xf32>
    %28 = vector.extract_strided_slice %4 {offsets = [1, 1, 0], sizes = [16, 16, 4], strides = [1, 1, 1]} : vector<18x18x4xbf16> to vector<16x16x4xbf16>
    %29 = vector.shape_cast %28 : vector<16x16x4xbf16> to vector<256x4xbf16>
    %c1_19 = arith.constant 1 : index
    %c1_20 = arith.constant 1 : index
    %c0_21 = arith.constant 0 : index
    %c0_22 = arith.constant 0 : index
    %30 = vector.load %arg3[%c1_19, %c1_20, %c0_21, %c0_22] : memref<3x3x4x128xbf16, #tpu.memory_space<vmem>>, vector<1x1x4x128xbf16>
    %31 = vector.shape_cast %30 : vector<1x1x4x128xbf16> to vector<4x128xbf16>
    %cst_23 = arith.constant dense<0.000000e+00> : vector<256x128xf32>
    %32 = tpu.matmul %29, %31, %cst_23 {dimension_numbers = #tpu.dot_dimension_numbers<[1], [0], [0], [1], [0, 0, 1, 1], [], []>} : vector<256x4xbf16>, vector<4x128xbf16>, vector<256x128xf32> -> vector<256x128xf32>
    %33 = arith.addf %27, %32 : vector<256x128xf32>
    %34 = vector.extract_strided_slice %4 {offsets = [1, 2, 0], sizes = [16, 16, 4], strides = [1, 1, 1]} : vector<18x18x4xbf16> to vector<16x16x4xbf16>
    %35 = vector.shape_cast %34 : vector<16x16x4xbf16> to vector<256x4xbf16>
    %c1_24 = arith.constant 1 : index
    %c2_25 = arith.constant 2 : index
    %c0_26 = arith.constant 0 : index
    %c0_27 = arith.constant 0 : index
    %36 = vector.load %arg3[%c1_24, %c2_25, %c0_26, %c0_27] : memref<3x3x4x128xbf16, #tpu.memory_space<vmem>>, vector<1x1x4x128xbf16>
    %37 = vector.shape_cast %36 : vector<1x1x4x128xbf16> to vector<4x128xbf16>
    %cst_28 = arith.constant dense<0.000000e+00> : vector<256x128xf32>
    %38 = tpu.matmul %35, %37, %cst_28 {dimension_numbers = #tpu.dot_dimension_numbers<[1], [0], [0], [1], [0, 0, 1, 1], [], []>} : vector<256x4xbf16>, vector<4x128xbf16>, vector<256x128xf32> -> vector<256x128xf32>
    %39 = arith.addf %33, %38 : vector<256x128xf32>
    %40 = vector.extract_strided_slice %4 {offsets = [2, 0, 0], sizes = [16, 16, 4], strides = [1, 1, 1]} : vector<18x18x4xbf16> to vector<16x16x4xbf16>
    %41 = vector.shape_cast %40 : vector<16x16x4xbf16> to vector<256x4xbf16>
    %c2_29 = arith.constant 2 : index
    %c0_30 = arith.constant 0 : index
    %c0_31 = arith.constant 0 : index
    %c0_32 = arith.constant 0 : index
    %42 = vector.load %arg3[%c2_29, %c0_30, %c0_31, %c0_32] : memref<3x3x4x128xbf16, #tpu.memory_space<vmem>>, vector<1x1x4x128xbf16>
    %43 = vector.shape_cast %42 : vector<1x1x4x128xbf16> to vector<4x128xbf16>
    %cst_33 = arith.constant dense<0.000000e+00> : vector<256x128xf32>
    %44 = tpu.matmul %41, %43, %cst_33 {dimension_numbers = #tpu.dot_dimension_numbers<[1], [0], [0], [1], [0, 0, 1, 1], [], []>} : vector<256x4xbf16>, vector<4x128xbf16>, vector<256x128xf32> -> vector<256x128xf32>
    %45 = arith.addf %39, %44 : vector<256x128xf32>
    %46 = vector.extract_strided_slice %4 {offsets = [2, 1, 0], sizes = [16, 16, 4], strides = [1, 1, 1]} : vector<18x18x4xbf16> to vector<16x16x4xbf16>
    %47 = vector.shape_cast %46 : vector<16x16x4xbf16> to vector<256x4xbf16>
    %c2_34 = arith.constant 2 : index
    %c1_35 = arith.constant 1 : index
    %c0_36 = arith.constant 0 : index
    %c0_37 = arith.constant 0 : index
    %48 = vector.load %arg3[%c2_34, %c1_35, %c0_36, %c0_37] : memref<3x3x4x128xbf16, #tpu.memory_space<vmem>>, vector<1x1x4x128xbf16>
    %49 = vector.shape_cast %48 : vector<1x1x4x128xbf16> to vector<4x128xbf16>
    %cst_38 = arith.constant dense<0.000000e+00> : vector<256x128xf32>
    %50 = tpu.matmul %47, %49, %cst_38 {dimension_numbers = #tpu.dot_dimension_numbers<[1], [0], [0], [1], [0, 0, 1, 1], [], []>} : vector<256x4xbf16>, vector<4x128xbf16>, vector<256x128xf32> -> vector<256x128xf32>
    %51 = arith.addf %45, %50 : vector<256x128xf32>
    %52 = vector.extract_strided_slice %4 {offsets = [2, 2, 0], sizes = [16, 16, 4], strides = [1, 1, 1]} : vector<18x18x4xbf16> to vector<16x16x4xbf16>
    %53 = vector.shape_cast %52 : vector<16x16x4xbf16> to vector<256x4xbf16>
    %c2_39 = arith.constant 2 : index
    %c2_40 = arith.constant 2 : index
    %c0_41 = arith.constant 0 : index
    %c0_42 = arith.constant 0 : index
    %54 = vector.load %arg3[%c2_39, %c2_40, %c0_41, %c0_42] : memref<3x3x4x128xbf16, #tpu.memory_space<vmem>>, vector<1x1x4x128xbf16>
    %55 = vector.shape_cast %54 : vector<1x1x4x128xbf16> to vector<4x128xbf16>
    %cst_43 = arith.constant dense<0.000000e+00> : vector<256x128xf32>
    %56 = tpu.matmul %53, %55, %cst_43 {dimension_numbers = #tpu.dot_dimension_numbers<[1], [0], [0], [1], [0, 0, 1, 1], [], []>} : vector<256x4xbf16>, vector<4x128xbf16>, vector<256x128xf32> -> vector<256x128xf32>
    %57 = arith.addf %51, %56 : vector<256x128xf32>
    %c0_44 = arith.constant 0 : index
    %c0_45 = arith.constant 0 : index
    %58 = vector.load %arg4[%c0_44, %c0_45] : memref<1x128xf32, #tpu.memory_space<vmem>>, vector<1x128xf32>
    %59 = vector.broadcast %58 : vector<1x128xf32> to vector<256x128xf32>
    %60 = arith.addf %57, %59 : vector<256x128xf32>
    %cst_46 = arith.constant 0.000000e+00 : f32
    %61 = vector.broadcast %cst_46 : f32 to vector<256x128xf32>
    %62 = arith.maximumf %60, %61 : vector<256x128xf32>
    %63 = vector.shape_cast %62 : vector<256x128xf32> to vector<1x16x16x128xf32>
    %64 = arith.truncf %63 : vector<1x16x16x128xf32> to vector<1x16x16x128xbf16>
    %c0_47 = arith.constant 0 : index
    %c0_48 = arith.constant 0 : index
    %c0_49 = arith.constant 0 : index
    %c0_50 = arith.constant 0 : index
    %65 = vector.load %arg5[%c0_47, %c0_48, %c0_49, %c0_50] : memref<1x16x16x128xbf16, #tpu.memory_space<vmem>>, vector<1x16x16x128xbf16>
    tpu.vector_store %arg5[%c0_47, %c0_48, %c0_49, %c0_50], %64 {strides = array<i32>} : memref<1x16x16x128xbf16, #tpu.memory_space<vmem>>, vector<1x16x16x128xbf16>,
    return
  }
  func.func @transform_0(%arg0: i32, %arg1: i32) -> (i32, i32, i32, i32) {
    %c0_i32 = arith.constant 0 : i32
    %c0_i32_0 = arith.constant 0 : i32
    %c0_i32_1 = arith.constant 0 : i32
    %c0_i32_2 = arith.constant 0 : i32
    return %arg0, %c0_i32, %c0_i32_0, %c0_i32_1 : i32, i32, i32, i32
  }
  func.func @transform_1(%arg0: i32, %arg1: i32) -> (i32, i32, i32, i32) {
    %c0_i32 = arith.constant 0 : i32
    %c0_i32_0 = arith.constant 0 : i32
    %c0_i32_1 = arith.constant 0 : i32
    %c0_i32_2 = arith.constant 0 : i32
    %c0_i32_3 = arith.constant 0 : i32
    return %c0_i32, %c0_i32_0, %c0_i32_1, %c0_i32_2 : i32, i32, i32, i32
  }
  func.func @transform_2(%arg0: i32, %arg1: i32) -> (i32, i32) {
    %c0_i32 = arith.constant 0 : i32
    %c0_i32_0 = arith.constant 0 : i32
    %c0_i32_1 = arith.constant 0 : i32
    return %c0_i32, %c0_i32_0 : i32, i32
  }
  func.func @transform_3(%arg0: i32, %arg1: i32) -> (i32, i32, i32, i32) {
    %c0_i32 = arith.constant 0 : i32
    %c0_i32_0 = arith.constant 0 : i32
    %c0_i32_1 = arith.constant 0 : i32
    return %arg0, %arg1, %c0_i32, %c0_i32_0 : i32, i32, i32, i32
  }
}

</mosaic_0001>

<llo_original>
// kernel: tpu_custom_call.1
$region0: #{tpu_custom_call.1}
  #allocation0 [shape = 'u32[]', space=smem, size = 0x4, offset = 0x4, fixed_abs, tag = 'smem constant byte address 0x4 - core index']
  #allocation1 [shape = 'u32[144,128]{1,0:T(1,128)}', space=vmem, size = 0x12000, scoped, tag = 'internal scratch']
  %s0 = inlined_call_operand.vmem [shape: bf16[2,18,18,4], index: 0, kind: input, shape index: {}]
  %s1 = inlined_call_operand.vmem [shape: bf16[3,3,4,128], index: 1, kind: input, shape index: {}]
  %s2 = inlined_call_operand.vmem [shape: f32[1,128], index: 2, kind: input, shape index: {}]
  %s3 = inlined_call_operand.hbm [shape: bf16[2,16,16,128], index: 3, kind: output, shape index: {}]
  %s4 = sld [smem:[#allocation0]]
  $region45: #{tpu_custom_call.1} parent=0
    _
  %s6 = ssub.s32 1, %s4
  %s7 = scalar_select 0, %s6, %s4
  $region1: #{tpu_custom_call.1} parent=0
    #allocation2 [shape = 'u8[131072]{0}', space=vmem, size = 0x20000, scoped, tag = 'output window, operand 0']
    #allocation3 [shape = 's32[2]{0}', space=sflag, size = 0x8, scoped, tag = 'scoped memory for tpu_custom_call.1']
    %8 = vsyncpa [#allocation3], 0
    %s9 = scalar_lea.sflag [#allocation3], 1
    %10 = vsyncpa %s9, 0
    loop: start=0, step=1, limit=4
    $region2: #{tpu_custom_call.1} parent=1 // loop_pre_header
      _
    $region3: #{tpu_custom_call.1} parent=1 // loop_header
      %s12 = sphi 0, %s16
      %p13 = scmp.ge.s32.totalorder %s12, 4
      %s19 = sphi 0, %s31
      %s20 = sphi 0, %s27
      %s21 = sphi 0, %s19
      %s22 = sphi 0, %s20
      %s23 = sphi 0, %s21
      %s24 = sphi 0, %s22
      %s34 = sphi 0, %s36
      %s37 = sphi 0, %s34
      %s38 = sphi 0, %s37
      %s54 = sphi 0, %s38
      %s58 = sphi 0, %s58
      %s60 = sphi 0, %s58
      %s61 = sphi 0, %s60
      %s75 = sphi 0, %s61
      %s79 = sphi 0, %s79
      %s81 = sphi 0, %s79
      %s82 = sphi 0, %s81
      %s96 = sphi 0, %s82
      %s104 = sphi 0, %s106
      %s107 = sphi 0, %s104
      %s108 = sphi 0, %s107
      %s124 = sphi 0, %s108
    $region4: #{tpu_custom_call.1} parent=1 // loop_header_branch
      %15 = sbr.rel (%p13) target = $region8
    $region5: #{tpu_custom_call.1} parent=1 // loop_body
      %s17 = ssub.s32 %s12, 1
      %s18 = ssub.s32 %s12, 2
      %s25 = sadd.s32 1, %s20
      %p26 = scmp.ge.s32.totalorder %s25, 1
      %s27 = scalar_select %p26, 0, %s25
      %s28 = sadd.s32 1, %s19
      %s29 = scalar_select %p26, %s28, %s19
      %p30 = scmp.ge.s32.totalorder %s29, 2
      %s31 = scalar_select %p30, 0, %s29
      %s32 = ssub.s32 %s19, %s31
      %p33 = scmp.eq.s32.totalorder %s32, 0
      %s35 = sadd.s32 %s34, 1
      %s36 = scalar_select %p33, %s34, %s35
      %p39 = pneg %p33
      %p40 = scmp.eq.s32.totalorder %s12, 1
      %p41 = por %p39, %p40
      %p42 = scmp.ne.s32.totalorder %s34, %s37
      %p43 = scmp.eq.s32.totalorder %s12, 0
      %p44 = por %p42, %p43
      %p45 = scmp.ne.s32.totalorder %s34, %s37
      %p46 = scmp.eq.s32.totalorder %s17, 1
      %p47 = por %p45, %p46
      %p48 = scmp.ne.s32.totalorder %s37, %s38
      %p49 = scmp.eq.s32.totalorder %s17, 0
      %p50 = por %p48, %p49
      %p51 = scmp.ne.s32.totalorder %s37, %s38
      %p52 = scmp.eq.s32.totalorder %s18, 1
      %p53 = por %p51, %p52
      %p55 = scmp.ne.s32.totalorder %s38, %s54
      %p56 = scmp.eq.s32.totalorder %s18, 0
      %p57 = por %p55, %p56
      %s59 = sadd.s32 %s58, 1
      %p62 = scmp.eq.s32.totalorder %s12, 1
      %p63 = scmp.ne.s32.totalorder %s58, %s60
      %p64 = scmp.eq.s32.totalorder %s12, 0
      %p65 = por %p63, %p64
      %p66 = scmp.ne.s32.totalorder %s58, %s60
      %p67 = scmp.eq.s32.totalorder %s17, 1
      %p68 = por %p66, %p67
      %p69 = scmp.ne.s32.totalorder %s60, %s61
      %p70 = scmp.eq.s32.totalorder %s17, 0
      %p71 = por %p69, %p70
      %p72 = scmp.ne.s32.totalorder %s60, %s61
      %p73 = scmp.eq.s32.totalorder %s18, 1
      %p74 = por %p72, %p73
      %p76 = scmp.ne.s32.totalorder %s61, %s75
      %p77 = scmp.eq.s32.totalorder %s18, 0
      %p78 = por %p76, %p77
      %s80 = sadd.s32 %s79, 1
      %p83 = scmp.eq.s32.totalorder %s12, 1
      %p84 = scmp.ne.s32.totalorder %s79, %s81
      %p85 = scmp.eq.s32.totalorder %s12, 0
      %p86 = por %p84, %p85
      %p87 = scmp.ne.s32.totalorder %s79, %s81
      %p88 = scmp.eq.s32.totalorder %s17, 1
      %p89 = por %p87, %p88
      %p90 = scmp.ne.s32.totalorder %s81, %s82
      %p91 = scmp.eq.s32.totalorder %s17, 0
      %p92 = por %p90, %p91
      %p93 = scmp.ne.s32.totalorder %s81, %s82
      %p94 = scmp.eq.s32.totalorder %s18, 1
      %p95 = por %p93, %p94
      %p97 = scmp.ne.s32.totalorder %s82, %s96
      %p98 = scmp.eq.s32.totalorder %s18, 0
      %p99 = por %p97, %p98
      %s100 = ssub.s32 %s19, %s31
      %s101 = ssub.s32 %s20, %s27
      %s102 = sor.u32 %s100, %s101
      %p103 = scmp.eq.s32.totalorder %s102, 0
      %s105 = sadd.s32 %s104, 1
      %s106 = scalar_select %p103, %s104, %s105
      %p109 = pneg %p103
      %p110 = scmp.eq.s32.totalorder %s12, 1
      %p111 = por %p109, %p110
      %p112 = scmp.ne.s32.totalorder %s104, %s107
      %p113 = scmp.eq.s32.totalorder %s12, 0
      %p114 = por %p112, %p113
      %p115 = scmp.ne.s32.totalorder %s104, %s107
      %p116 = scmp.eq.s32.totalorder %s17, 1
      %p117 = por %p115, %p116
      %p118 = scmp.ne.s32.totalorder %s107, %s108
      %p119 = scmp.eq.s32.totalorder %s17, 0
      %p120 = por %p118, %p119
      %p121 = scmp.ne.s32.totalorder %s107, %s108
      %p122 = scmp.eq.s32.totalorder %s18, 1
      %p123 = por %p121, %p122
      %p125 = scmp.ne.s32.totalorder %s108, %s124
      %p126 = scmp.eq.s32.totalorder %s18, 0
      %p127 = por %p125, %p126
      %p128 = scmp.le.s32.totalorder 1, %s12
      %p129 = scmp.lt.s32.totalorder %s12, 3
      %p130 = pnand %p128, %p129
      %p131 = pneg %p130
      // Predicated region
      $region9: #{tpu_custom_call.1} parent=5 // pred_check
        _
      $region10: #{tpu_custom_call.1} parent=5 // pred_check_branch
        %133 = sbr.rel (%p130) target = $region12
      $region11: #{tpu_custom_call.1} parent=5 // pred_region
        %s134 = ssub.s32 %s12, 1
        // Predicated region
        $region13: #{tpu_custom_call.1} parent=11 // pred_check
          %p135 = pneg %p71
        $region14: #{tpu_custom_call.1} parent=11 // pred_check_branch
          %137 = sbr.rel (%p135) target = $region16
        $region15: #{tpu_custom_call.1} parent=11 // pred_region
          _
        $region16: #{tpu_custom_call.1} parent=11 // pred_fallthru
          _
        // Predicated region
        $region17: #{tpu_custom_call.1} parent=11 // pred_check
          %p138 = pneg %p92
        $region18: #{tpu_custom_call.1} parent=11 // pred_check_branch
          %140 = sbr.rel (%p138) target = $region20
        $region19: #{tpu_custom_call.1} parent=11 // pred_region
          _
        $region20: #{tpu_custom_call.1} parent=11 // pred_fallthru
          _
      $region12: #{tpu_custom_call.1} parent=5 // pred_fallthru
        _
      %p141 = scmp.lt.s32.totalorder %s12, 2
      // Predicated region
      $region21: #{tpu_custom_call.1} parent=5 // pred_check
        %p142 = pneg %p141
      $region22: #{tpu_custom_call.1} parent=5 // pred_check_branch
        %144 = sbr.rel (%p142) target = $region24
      $region23: #{tpu_custom_call.1} parent=5 // pred_region
        // Predicated region
        $region25: #{tpu_custom_call.1} parent=23 // pred_check
          %p145 = pneg %p44
        $region26: #{tpu_custom_call.1} parent=23 // pred_check_branch
          %147 = sbr.rel (%p145) target = $region28
        $region27: #{tpu_custom_call.1} parent=23 // pred_region
          %p148 = scmp.lt.s32.totalorder %s19, 1
          %s149 = scalar_select %p148, %s19, 1
          %s150 = smul.addr %s149, 54
          %s151 = smul.addr %s150, 4
          %s152 = scalar_lea.vmem %s0, %s151
        $region28: #{tpu_custom_call.1} parent=23 // pred_fallthru
          _
      $region24: #{tpu_custom_call.1} parent=5 // pred_fallthru
        _
      %p153 = scmp.le.s32.totalorder 1, %s12
      %p154 = scmp.lt.s32.totalorder %s12, 3
      %p155 = pnand %p153, %p154
      %p156 = pneg %p155
      // Predicated region
      $region29: #{tpu_custom_call.1} parent=5 // pred_check
        _
      $region30: #{tpu_custom_call.1} parent=5 // pred_check_branch
        %158 = sbr.rel (%p155) target = $region32
      $region31: #{tpu_custom_call.1} parent=5 // pred_region
        %s159 = ssub.s32 %s12, 1
        %p160 = scmp.lt.s32.totalorder %s21, 1
        %s161 = scalar_select %p160, %s21, 1
        %s162 = smul.addr %s161, 54
        %s163 = smul.addr %s162, 4
        %s164 = scalar_lea.vmem %s0, %s163
        %p165 = pneg %p50
        %p166 = pneg %p47
        %p167 = pneg %p71
        %p168 = pneg %p68
        %p169 = pneg %p92
        %p170 = pneg %p89
        %p171 = pneg %p120
        %p172 = pneg %p117
        %s173 = sand.u32 %s107, 1
        %s174 = scalar_lea.sflag [#allocation3], %s173
        %s175 = sand.u32 %s107, 1
        %s176 = smul.addr %s175, 128
        %s177 = scalar_lea.vmem [#allocation2], %s176
        %p178 = scmp.lt.s32.totalorder %s21, 1
        %s179 = scalar_select %p178, %s21, 1
        %s180 = smul.addr %s179, 54
        %s181 = smul.addr %s180, 4
        %s182 = scalar_lea.vmem %s0, %s181
        %s183 = smul.u32 16, %s22
        %s185 = smul.u32 %s22, 16
        %s186 = smul.u32 %s185, 3
        %s187 = smul.addr %s186, 4
        %s188 = scalar_lea.vmem %s182, %s187
        %v189 = vld [vmem:[%s188] sm:$0xf]
        %v190 = vld [vmem:[%s188 + $0x4] sm:$0xf]
        %v191 = vld [vmem:[%s188 + $0x8] sm:$0x1]
        %v192 = vld [vmem:[%s188 + $0xc] sm:$0xf]
        %v193 = vld [vmem:[%s188 + $0x10] sm:$0xf]
        %v194 = vld [vmem:[%s188 + $0x14] sm:$0x1]
        %v195 = vld [vmem:[%s188 + $0x18] sm:$0xf]
        %v196 = vld [vmem:[%s188 + $0x1c] sm:$0xf]
        %v197 = vld [vmem:[%s188 + $0x20] sm:$0x1]
        %v198 = vld [vmem:[%s188 + $0x24] sm:$0xf]
        %v199 = vld [vmem:[%s188 + $0x28] sm:$0xf]
        %v200 = vld [vmem:[%s188 + $0x2c] sm:$0x1]
        %v201 = vld [vmem:[%s188 + $0x30] sm:$0xf]
        %v202 = vld [vmem:[%s188 + $0x34] sm:$0xf]
        %v203 = vld [vmem:[%s188 + $0x38] sm:$0x1]
        %v204 = vld [vmem:[%s188 + $0x3c] sm:$0xf]
        %v205 = vld [vmem:[%s188 + $0x40] sm:$0xf]
        %v206 = vld [vmem:[%s188 + $0x44] sm:$0x1]
        %v207 = vld [vmem:[%s188 + $0x48] sm:$0xf]
        %v208 = vld [vmem:[%s188 + $0x4c] sm:$0xf]
        %v209 = vld [vmem:[%s188 + $0x50] sm:$0x1]
        %v210 = vld [vmem:[%s188 + $0x54] sm:$0xf]
        %v211 = vld [vmem:[%s188 + $0x58] sm:$0xf]
        %v212 = vld [vmem:[%s188 + $0x5c] sm:$0x1]
        %v213 = vld [vmem:[%s188 + $0x60] sm:$0xf]
        %v214 = vld [vmem:[%s188 + $0x64] sm:$0xf]
        %v215 = vld [vmem:[%s188 + $0x68] sm:$0x1]
        %v216 = vld [vmem:[%s188 + $0x6c] sm:$0xf]
        %v217 = vld [vmem:[%s188 + $0x70] sm:$0xf]
        %v218 = vld [vmem:[%s188 + $0x74] sm:$0x1]
        %v219 = vld [vmem:[%s188 + $0x78] sm:$0xf]
        %v220 = vld [vmem:[%s188 + $0x7c] sm:$0xf]
        %v221 = vld [vmem:[%s188 + $0x80] sm:$0x1]
        %v222 = vld [vmem:[%s188 + $0x84] sm:$0xf]
        %v223 = vld [vmem:[%s188 + $0x88] sm:$0xf]
        %v224 = vld [vmem:[%s188 + $0x8c] sm:$0x1]
        %v225 = vld [vmem:[%s188 + $0x90] sm:$0xf]
        %v226 = vld [vmem:[%s188 + $0x94] sm:$0xf]
        %v227 = vld [vmem:[%s188 + $0x98] sm:$0x1]
        %v228 = vld [vmem:[%s188 + $0x9c] sm:$0xf]
        %v229 = vld [vmem:[%s188 + $0xa0] sm:$0xf]
        %v230 = vld [vmem:[%s188 + $0xa4] sm:$0x1]
        %v231 = vld [vmem:[%s188 + $0xa8] sm:$0xf]
        %v232 = vld [vmem:[%s188 + $0xac] sm:$0xf]
        %v233 = vld [vmem:[%s188 + $0xb0] sm:$0x1]
        %v234 = vld [vmem:[%s188 + $0xb4] sm:$0xf]
        %v235 = vld [vmem:[%s188 + $0xb8] sm:$0xf]
        %v236 = vld [vmem:[%s188 + $0xbc] sm:$0x1]
        %v237 = vld [vmem:[%s188 + $0xc0] sm:$0xf]
        %v238 = vld [vmem:[%s188 + $0xc4] sm:$0xf]
        %v239 = vld [vmem:[%s188 + $0xc8] sm:$0x1]
        %v240 = vld [vmem:[%s188 + $0xcc] sm:$0xf]
        %v241 = vld [vmem:[%s188 + $0xd0] sm:$0xf]
        %v242 = vld [vmem:[%s188 + $0xd4] sm:$0x1]
        %v243 = vld [vmem:[%s1] sm:$0x3]
        %vm244 = vsmask.f32 3328
        %vm245 = vsmask.f32 7440
        %vm246 = vmor %vm244, %vm245
        %v248 = vshrl.u32 %v189, 16
        %v250 = vrot.slane %v248, 4
        %v251 = vshll.u32 %v189, 16
        %v253 = vrot.slane %v251, 5
        %v254 = vor.u32 %v250, %v253
        %v255 = vrot.slane %v254, 4
        %v257 = vshll.u32 %v190, 16
        %v259 = vrot.slane %v257, 5
        %v260 = vsel %vm246, %v255, %v259
        %v261 = vshrl.u32 %v190, 16
        %v263 = vrot.slane %v261, 4
        %v264 = vor.u32 %v263, %v259
        %v265 = vrot.slane %v264, 4
        %v267 = vshll.u32 %v191, 16
        %v269 = vrot.slane %v267, 5
        %v270 = vsel %vm246, %v265, %v269
        %v272 = vshrl.u32 %v192, 16
        %v274 = vrot.slane %v272, 4
        %v275 = vshll.u32 %v192, 16
        %v277 = vrot.slane %v275, 5
        %v278 = vor.u32 %v274, %v277
        %v279 = vrot.slane %v278, 4
        %v281 = vshll.u32 %v193, 16
        %v283 = vrot.slane %v281, 5
        %v284 = vsel %vm246, %v279, %v283
        %v285 = vshrl.u32 %v193, 16
        %v287 = vrot.slane %v285, 4
        %v288 = vor.u32 %v287, %v283
        %v289 = vrot.slane %v288, 4
        %v291 = vshll.u32 %v194, 16
        %v293 = vrot.slane %v291, 5
        %v294 = vsel %vm246, %v289, %v293
        %v296 = vshrl.u32 %v195, 16
        %v298 = vrot.slane %v296, 4
        %v299 = vshll.u32 %v195, 16
        %v301 = vrot.slane %v299, 5
        %v302 = vor.u32 %v298, %v301
        %v303 = vrot.slane %v302, 4
        %v305 = vshll.u32 %v196, 16
        %v307 = vrot.slane %v305, 5
        %v308 = vsel %vm246, %v303, %v307
        %v309 = vshrl.u32 %v196, 16
        %v311 = vrot.slane %v309, 4
        %v312 = vor.u32 %v311, %v307
        %v313 = vrot.slane %v312, 4
        %v315 = vshll.u32 %v197, 16
        %v317 = vrot.slane %v315, 5
        %v318 = vsel %vm246, %v313, %v317
        %v320 = vshrl.u32 %v198, 16
        %v322 = vrot.slane %v320, 4
        %v323 = vshll.u32 %v198, 16
        %v325 = vrot.slane %v323, 5
        %v326 = vor.u32 %v322, %v325
        %v327 = vrot.slane %v326, 4
        %v329 = vshll.u32 %v199, 16
        %v331 = vrot.slane %v329, 5
        %v332 = vsel %vm246, %v327, %v331
        %v333 = vshrl.u32 %v199, 16
        %v335 = vrot.slane %v333, 4
        %v336 = vor.u32 %v335, %v331
        %v337 = vrot.slane %v336, 4
        %v339 = vshll.u32 %v200, 16
        %v341 = vrot.slane %v339, 5
        %v342 = vsel %vm246, %v337, %v341
        %v344 = vshrl.u32 %v201, 16
        %v346 = vrot.slane %v344, 4
        %v347 = vshll.u32 %v201, 16
        %v349 = vrot.slane %v347, 5
        %v350 = vor.u32 %v346, %v349
        %v351 = vrot.slane %v350, 4
        %v353 = vshll.u32 %v202, 16
        %v355 = vrot.slane %v353, 5
        %v356 = vsel %vm246, %v351, %v355
        %v357 = vshrl.u32 %v202, 16
        %v359 = vrot.slane %v357, 4
        %v360 = vor.u32 %v359, %v355
        %v361 = vrot.slane %v360, 4
        %v363 = vshll.u32 %v203, 16
        %v365 = vrot.slane %v363, 5
        %v366 = vsel %vm246, %v361, %v365
        %v368 = vshrl.u32 %v204, 16
        %v370 = vrot.slane %v368, 4
        %v371 = vshll.u32 %v204, 16
        %v373 = vrot.slane %v371, 5
        %v374 = vor.u32 %v370, %v373
        %v375 = vrot.slane %v374, 4
        %v377 = vshll.u32 %v205, 16
        %v379 = vrot.slane %v377, 5
        %v380 = vsel %vm246, %v375, %v379
        %v381 = vshrl.u32 %v205, 16
        %v383 = vrot.slane %v381, 4
        %v384 = vor.u32 %v383, %v379
        %v385 = vrot.slane %v384, 4
        %v387 = vshll.u32 %v206, 16
        %v389 = vrot.slane %v387, 5
        %v390 = vsel %vm246, %v385, %v389
        %v392 = vshrl.u32 %v207, 16
        %v394 = vrot.slane %v392, 4
        %v395 = vshll.u32 %v207, 16
        %v397 = vrot.slane %v395, 5
        %v398 = vor.u32 %v394, %v397
        %v399 = vrot.slane %v398, 4
        %v401 = vshll.u32 %v208, 16
        %v403 = vrot.slane %v401, 5
        %v404 = vsel %vm246, %v399, %v403
        %v405 = vshrl.u32 %v208, 16
        %v407 = vrot.slane %v405, 4
        %v408 = vor.u32 %v407, %v403
        %v409 = vrot.slane %v408, 4
        %v411 = vshll.u32 %v209, 16
        %v413 = vrot.slane %v411, 5
        %v414 = vsel %vm246, %v409, %v413
        %v416 = vshrl.u32 %v210, 16
        %v418 = vrot.slane %v416, 4
        %v419 = vshll.u32 %v210, 16
        %v421 = vrot.slane %v419, 5
        %v422 = vor.u32 %v418, %v421
        %v423 = vrot.slane %v422, 4
        %v425 = vshll.u32 %v211, 16
        %v427 = vrot.slane %v425, 5
        %v428 = vsel %vm246, %v423, %v427
        %v429 = vshrl.u32 %v211, 16
        %v431 = vrot.slane %v429, 4
        %v432 = vor.u32 %v431, %v427
        %v433 = vrot.slane %v432, 4
        %v435 = vshll.u32 %v212, 16
        %v437 = vrot.slane %v435, 5
        %v438 = vsel %vm246, %v433, %v437
        %v440 = vshrl.u32 %v213, 16
        %v442 = vrot.slane %v440, 4
        %v443 = vshll.u32 %v213, 16
        %v445 = vrot.slane %v443, 5
        %v446 = vor.u32 %v442, %v445
        %v447 = vrot.slane %v446, 4
        %v449 = vshll.u32 %v214, 16
        %v451 = vrot.slane %v449, 5
        %v452 = vsel %vm246, %v447, %v451
        %v453 = vshrl.u32 %v214, 16
        %v455 = vrot.slane %v453, 4
        %v456 = vor.u32 %v455, %v451
        %v457 = vrot.slane %v456, 4
        %v459 = vshll.u32 %v215, 16
        %v461 = vrot.slane %v459, 5
        %v462 = vsel %vm246, %v457, %v461
        %v464 = vshrl.u32 %v216, 16
        %v466 = vrot.slane %v464, 4
        %v467 = vshll.u32 %v216, 16
        %v469 = vrot.slane %v467, 5
        %v470 = vor.u32 %v466, %v469
        %v471 = vrot.slane %v470, 4
        %v473 = vshll.u32 %v217, 16
        %v475 = vrot.slane %v473, 5
        %v476 = vsel %vm246, %v471, %v475
        %v477 = vshrl.u32 %v217, 16
        %v479 = vrot.slane %v477, 4
        %v480 = vor.u32 %v479, %v475
        %v481 = vrot.slane %v480, 4
        %v483 = vshll.u32 %v218, 16
        %v485 = vrot.slane %v483, 5
        %v486 = vsel %vm246, %v481, %v485
        %v488 = vshrl.u32 %v219, 16
        %v490 = vrot.slane %v488, 4
        %v491 = vshll.u32 %v219, 16
        %v493 = vrot.slane %v491, 5
        %v494 = vor.u32 %v490, %v493
        %v495 = vrot.slane %v494, 4
        %v497 = vshll.u32 %v220, 16
        %v499 = vrot.slane %v497, 5
        %v500 = vsel %vm246, %v495, %v499
        %v501 = vshrl.u32 %v220, 16
        %v503 = vrot.slane %v501, 4
        %v504 = vor.u32 %v503, %v499
        %v505 = vrot.slane %v504, 4
        %v507 = vshll.u32 %v221, 16
        %v509 = vrot.slane %v507, 5
        %v510 = vsel %vm246, %v505, %v509
        %v512 = vshrl.u32 %v222, 16
        %v514 = vrot.slane %v512, 4
        %v515 = vshll.u32 %v222, 16
        %v517 = vrot.slane %v515, 5
        %v518 = vor.u32 %v514, %v517
        %v519 = vrot.slane %v518, 4
        %v521 = vshll.u32 %v223, 16
        %v523 = vrot.slane %v521, 5
        %v524 = vsel %vm246, %v519, %v523
        %v525 = vshrl.u32 %v223, 16
        %v527 = vrot.slane %v525, 4
        %v528 = vor.u32 %v527, %v523
        %v529 = vrot.slane %v528, 4
        %v531 = vshll.u32 %v224, 16
        %v533 = vrot.slane %v531, 5
        %v534 = vsel %vm246, %v529, %v533
        %v536 = vshrl.u32 %v225, 16
        %v538 = vrot.slane %v536, 4
        %v539 = vshll.u32 %v225, 16
        %v541 = vrot.slane %v539, 5
        %v542 = vor.u32 %v538, %v541
        %v543 = vrot.slane %v542, 4
        %v545 = vshll.u32 %v226, 16
        %v547 = vrot.slane %v545, 5
        %v548 = vsel %vm246, %v543, %v547
        %v549 = vshrl.u32 %v226, 16
        %v551 = vrot.slane %v549, 4
        %v552 = vor.u32 %v551, %v547
        %v553 = vrot.slane %v552, 4
        %v555 = vshll.u32 %v227, 16
        %v557 = vrot.slane %v555, 5
        %v558 = vsel %vm246, %v553, %v557
        %v560 = vshrl.u32 %v228, 16
        %v562 = vrot.slane %v560, 4
        %v563 = vshll.u32 %v228, 16
        %v565 = vrot.slane %v563, 5
        %v566 = vor.u32 %v562, %v565
        %v567 = vrot.slane %v566, 4
        %v569 = vshll.u32 %v229, 16
        %v571 = vrot.slane %v569, 5
        %v572 = vsel %vm246, %v567, %v571
        %v573 = vshrl.u32 %v229, 16
        %v575 = vrot.slane %v573, 4
        %v576 = vor.u32 %v575, %v571
        %v577 = vrot.slane %v576, 4
        %v579 = vshll.u32 %v230, 16
        %v581 = vrot.slane %v579, 5
        %v582 = vsel %vm246, %v577, %v581
        %v584 = vshrl.u32 %v231, 16
        %v586 = vrot.slane %v584, 4
        %v587 = vshll.u32 %v231, 16
        %v589 = vrot.slane %v587, 5
        %v590 = vor.u32 %v586, %v589
        %v591 = vrot.slane %v590, 4
        %v593 = vshll.u32 %v232, 16
        %v595 = vrot.slane %v593, 5
        %v596 = vsel %vm246, %v591, %v595
        %v597 = vshrl.u32 %v232, 16
        %v599 = vrot.slane %v597, 4
        %v600 = vor.u32 %v599, %v595
        %v601 = vrot.slane %v600, 4
        %v603 = vshll.u32 %v233, 16
        %v605 = vrot.slane %v603, 5
        %v606 = vsel %vm246, %v601, %v605
        %v608 = vshrl.u32 %v234, 16
        %v610 = vrot.slane %v608, 4
        %v611 = vshll.u32 %v234, 16
        %v613 = vrot.slane %v611, 5
        %v614 = vor.u32 %v610, %v613
        %v615 = vrot.slane %v614, 4
        %v617 = vshll.u32 %v235, 16
        %v619 = vrot.slane %v617, 5
        %v620 = vsel %vm246, %v615, %v619
        %v621 = vshrl.u32 %v235, 16
        %v623 = vrot.slane %v621, 4
        %v624 = vor.u32 %v623, %v619
        %v625 = vrot.slane %v624, 4
        %v627 = vshll.u32 %v236, 16
        %v629 = vrot.slane %v627, 5
        %v630 = vsel %vm246, %v625, %v629
        %s631 = scalar_lea.vmem %s1, 2
        %v632 = vld [vmem:[%s631] sm:$0x3]
        %v633 = vunpack.c.l.b16 %v260
        %v634 = vunpack.c.l.b16 %v270
        %v635 = vunpack.c.l.b16 %v284
        %v636 = vunpack.c.l.b16 %v294
        %v637 = vunpack.c.l.b16 %v308
        %v638 = vunpack.c.l.b16 %v318
        %v639 = vunpack.c.l.b16 %v332
        %v640 = vunpack.c.l.b16 %v342
        %v641 = vunpack.c.l.b16 %v356
        %v642 = vunpack.c.l.b16 %v366
        %v643 = vunpack.c.l.b16 %v380
        %v644 = vunpack.c.l.b16 %v390
        %v645 = vunpack.c.l.b16 %v404
        %v646 = vunpack.c.l.b16 %v414
        %v647 = vunpack.c.l.b16 %v428
        %v648 = vunpack.c.l.b16 %v438
        %v649 = vunpack.c.l.b16 %v452
        %v650 = vunpack.c.l.b16 %v462
        %v651 = vunpack.c.l.b16 %v476
        %v652 = vunpack.c.l.b16 %v486
        %v653 = vunpack.c.l.b16 %v500
        %v654 = vunpack.c.l.b16 %v510
        %v655 = vunpack.c.l.b16 %v524
        %v656 = vunpack.c.l.b16 %v534
        %v657 = vunpack.c.l.b16 %v548
        %v658 = vunpack.c.l.b16 %v558
        %v659 = vunpack.c.l.b16 %v572
        %v660 = vunpack.c.l.b16 %v582
        %v661 = vunpack.c.l.b16 %v596
        %v662 = vunpack.c.l.b16 %v606
        %v663 = vunpack.c.l.b16 %v620
        %v664 = vunpack.c.l.b16 %v630
        %v665 = vpack.c.b16 %v634, %v633
        %v666 = vpack.c.b16 %v636, %v635
        %v667 = vpack.c.b16 %v638, %v637
        %v668 = vpack.c.b16 %v640, %v639
        %v669 = vpack.c.b16 %v642, %v641
        %v670 = vpack.c.b16 %v644, %v643
        %v671 = vpack.c.b16 %v646, %v645
        %v672 = vpack.c.b16 %v648, %v647
        %v673 = vpack.c.b16 %v650, %v649
        %v674 = vpack.c.b16 %v652, %v651
        %v675 = vpack.c.b16 %v654, %v653
        %v676 = vpack.c.b16 %v656, %v655
        %v677 = vpack.c.b16 %v658, %v657
        %v678 = vpack.c.b16 %v660, %v659
        %v679 = vpack.c.b16 %v662, %v661
        %v680 = vpack.c.b16 %v664, %v663
        %vm681 = vcmask 31744
        %v683 = vsel %vm681, %v665, 0
        %v686 = vsel %vm681, %v666, 0
        %v689 = vsel %vm681, %v667, 0
        %v692 = vsel %vm681, %v668, 0
        %v695 = vsel %vm681, %v669, 0
        %v698 = vsel %vm681, %v670, 0
        %v701 = vsel %vm681, %v671, 0
        %v704 = vsel %vm681, %v672, 0
        %v707 = vsel %vm681, %v673, 0
        %v710 = vsel %vm681, %v674, 0
        %v713 = vsel %vm681, %v675, 0
        %v716 = vsel %vm681, %v676, 0
        %v719 = vsel %vm681, %v677, 0
        %v722 = vsel %vm681, %v678, 0
        %v725 = vsel %vm681, %v679, 0
        %v728 = vsel %vm681, %v680, 0
        %vm730 = vcmask 1041408
        %v732 = vsel %vm730, %v632, 0
        %734 = vmatprep.subr.bf16.mxu0 0
        %735 = vmatpush1.bf16.msra.mxu0 %v732
        %736 = vmatprep.subr.bf16.mxu0 0
        %737 = vmatpush1.bf16.msra.mxu0 0
        %738 = vmatprep.subr.bf16.mxu0 0
        %739 = vmatpush1.bf16.msra.mxu0 0
        %740 = vmatprep.subr.bf16.mxu0 0
        %741 = vmatpush1.bf16.msra.mxu0 0
        %742 = vmatprep.subr.bf16.mxu0 0
        %743 = vmatpush1.bf16.msra.mxu0 0
        %744 = vmatprep.subr.bf16.mxu0 0
        %745 = vmatpush1.bf16.msra.mxu0 0
        %746 = vmatprep.subr.bf16.mxu0 0
        %747 = vmatpush1.bf16.msra.mxu0 0
        %748 = vmatprep.subr.bf16.mxu0 0
        %749 = vmatpush1.bf16.msra.mxu0 0
        %750 = vmatprep.subr.bf16.mxu0 0
        %751 = vmatpush1.bf16.msra.mxu0 0
        %752 = vmatprep.subr.bf16.mxu0 0
        %753 = vmatpush1.bf16.msra.mxu0 0
        %754 = vmatprep.subr.bf16.mxu0 0
        %755 = vmatpush1.bf16.msra.mxu0 0
        %756 = vmatprep.subr.bf16.mxu0 0
        %757 = vmatpush1.bf16.msra.mxu0 0
        %758 = vmatprep.subr.bf16.mxu0 0
        %759 = vmatpush1.bf16.msra.mxu0 0
        %760 = vmatprep.subr.bf16.mxu0 0
        %761 = vmatpush1.bf16.msra.mxu0 0
        %762 = vmatprep.subr.bf16.mxu0 0
        %763 = vmatpush1.bf16.msra.mxu0 0
        %764 = vmatprep.subr.bf16.mxu0 0
        %765 = vmatpush1.bf16.msra.mxu0 0
        %766 = vmatprep.mubr.bf16.mxu0 0
        %767 = vmatmul.mubr.bf16.gmra.mrb[0].mxu0 %v683
        %v768 = vpop.f32.mrb[0].mxu0
        %v769 = vadd.f32 0.0, %v768
        %v770 = vpop.f32.mrb[0].mxu0
        %v771 = vpop.f32.mrb[0].mxu0
        %v772 = vadd.f32 0.0, %v771
        %v773 = vpop.f32.mrb[0].mxu0
        %774 = vmatprep.mubr.bf16.mxu0 0
        %775 = vmatmul.mubr.bf16.gmra.mrb[0].mxu0 %v686
        %v776 = vpop.f32.mrb[0].mxu0
        %v777 = vadd.f32 0.0, %v776
        %v778 = vpop.f32.mrb[0].mxu0
        %v779 = vpop.f32.mrb[0].mxu0
        %v780 = vadd.f32 0.0, %v779
        %v781 = vpop.f32.mrb[0].mxu0
        %782 = vmatprep.mubr.bf16.mxu0 0
        %783 = vmatmul.mubr.bf16.gmra.mrb[0].mxu0 %v689
        %v784 = vpop.f32.mrb[0].mxu0
        %v785 = vadd.f32 0.0, %v784
        %v786 = vpop.f32.mrb[0].mxu0
        %v787 = vpop.f32.mrb[0].mxu0
        %v788 = vadd.f32 0.0, %v787
        %v789 = vpop.f32.mrb[0].mxu0
        %790 = vmatprep.mubr.bf16.mxu0 0
        %791 = vmatmul.mubr.bf16.gmra.mrb[0].mxu0 %v692
        %v792 = vpop.f32.mrb[0].mxu0
        %v793 = vadd.f32 0.0, %v792
        %v794 = vpop.f32.mrb[0].mxu0
        %v795 = vpop.f32.mrb[0].mxu0
        %v796 = vadd.f32 0.0, %v795
        %v797 = vpop.f32.mrb[0].mxu0
        %798 = vmatprep.mubr.bf16.mxu0 0
        %799 = vmatmul.mubr.bf16.gmra.mrb[0].mxu0 %v695
        %v800 = vpop.f32.mrb[0].mxu0
        %v801 = vadd.f32 0.0, %v800
        %v802 = vpop.f32.mrb[0].mxu0
        %v803 = vpop.f32.mrb[0].mxu0
        %v804 = vadd.f32 0.0, %v803
        %v805 = vpop.f32.mrb[0].mxu0
        %806 = vmatprep.mubr.bf16.mxu0 0
        %807 = vmatmul.mubr.bf16.gmra.mrb[0].mxu0 %v698
        %v808 = vpop.f32.mrb[0].mxu0
        %v809 = vadd.f32 0.0, %v808
        %v810 = vpop.f32.mrb[0].mxu0
        %v811 = vpop.f32.mrb[0].mxu0
        %v812 = vadd.f32 0.0, %v811
        %v813 = vpop.f32.mrb[0].mxu0
        %814 = vmatprep.mubr.bf16.mxu0 0
        %815 = vmatmul.mubr.bf16.gmra.mrb[0].mxu0 %v701
        %v816 = vpop.f32.mrb[0].mxu0
        %v817 = vadd.f32 0.0, %v816
        %v818 = vpop.f32.mrb[0].mxu0
        %v819 = vpop.f32.mrb[0].mxu0
        %v820 = vadd.f32 0.0, %v819
        %v821 = vpop.f32.mrb[0].mxu0
        %822 = vmatprep.mubr.bf16.mxu0 0
        %823 = vmatmul.mubr.bf16.gmra.mrb[0].mxu0 %v704
        %v824 = vpop.f32.mrb[0].mxu0
        %v825 = vadd.f32 0.0, %v824
        %v826 = vpop.f32.mrb[0].mxu0
        %v827 = vpop.f32.mrb[0].mxu0
        %v828 = vadd.f32 0.0, %v827
        %v829 = vpop.f32.mrb[0].mxu0
        %830 = vmatprep.mubr.bf16.mxu0 0
        %831 = vmatmul.mubr.bf16.gmra.mrb[0].mxu0 %v707
        %v832 = vpop.f32.mrb[0].mxu0
        %v833 = vadd.f32 0.0, %v832
        %v834 = vpop.f32.mrb[0].mxu0
        %v835 = vpop.f32.mrb[0].mxu0
        %v836 = vadd.f32 0.0, %v835
        %v837 = vpop.f32.mrb[0].mxu0
        %838 = vmatprep.mubr.bf16.mxu0 0
        %839 = vmatmul.mubr.bf16.gmra.mrb[0].mxu0 %v710
        %v840 = vpop.f32.mrb[0].mxu0
        %v841 = vadd.f32 0.0, %v840
        %v842 = vpop.f32.mrb[0].mxu0
        %v843 = vpop.f32.mrb[0].mxu0
        %v844 = vadd.f32 0.0, %v843
        %v845 = vpop.f32.mrb[0].mxu0
        %846 = vmatprep.mubr.bf16.mxu0 0
        %847 = vmatmul.mubr.bf16.gmra.mrb[0].mxu0 %v713
        %v848 = vpop.f32.mrb[0].mxu0
        %v849 = vadd.f32 0.0, %v848
        %v850 = vpop.f32.mrb[0].mxu0
        %v851 = vpop.f32.mrb[0].mxu0
        %v852 = vadd.f32 0.0, %v851
        %v853 = vpop.f32.mrb[0].mxu0
        %854 = vmatprep.mubr.bf16.mxu0 0
        %855 = vmatmul.mubr.bf16.gmra.mrb[0].mxu0 %v716
        %v856 = vpop.f32.mrb[0].mxu0
        %v857 = vadd.f32 0.0, %v856
        %v858 = vpop.f32.mrb[0].mxu0
        %v859 = vpop.f32.mrb[0].mxu0
        %v860 = vadd.f32 0.0, %v859
        %v861 = vpop.f32.mrb[0].mxu0
        %862 = vmatprep.mubr.bf16.mxu0 0
        %863 = vmatmul.mubr.bf16.gmra.mrb[0].mxu0 %v719
        %v864 = vpop.f32.mrb[0].mxu0
        %v865 = vadd.f32 0.0, %v864
        %v866 = vpop.f32.mrb[0].mxu0
        %v867 = vpop.f32.mrb[0].mxu0
        %v868 = vadd.f32 0.0, %v867
        %v869 = vpop.f32.mrb[0].mxu0
        %870 = vmatprep.mubr.bf16.mxu0 0
        %871 = vmatmul.mubr.bf16.gmra.mrb[0].mxu0 %v722
        %v872 = vpop.f32.mrb[0].mxu0
        %v873 = vadd.f32 0.0, %v872
        %v874 = vpop.f32.mrb[0].mxu0
        %v875 = vpop.f32.mrb[0].mxu0
        %v876 = vadd.f32 0.0, %v875
        %v877 = vpop.f32.mrb[0].mxu0
        %878 = vmatprep.mubr.bf16.mxu0 0
        %879 = vmatmul.mubr.bf16.gmra.mrb[0].mxu0 %v725
        %v880 = vpop.f32.mrb[0].mxu0
        %v881 = vadd.f32 0.0, %v880
        %v882 = vpop.f32.mrb[0].mxu0
        %v883 = vpop.f32.mrb[0].mxu0
        %v884 = vadd.f32 0.0, %v883
        %v885 = vpop.f32.mrb[0].mxu0
        %886 = vmatprep.mubr.bf16.mxu0 0
        %887 = vmatmul.mubr.bf16.gmra.mrb[0].mxu0 %v728
        %v888 = vpop.f32.mrb[0].mxu0
        %v889 = vadd.f32 0.0, %v888
        %v890 = vpop.f32.mrb[0].mxu0
        %v891 = vpop.f32.mrb[0].mxu0
        %v892 = vadd.f32 0.0, %v891
        %v893 = vpop.f32.mrb[0].mxu0
        %894 = vdwg.mxu0
        %v927 = vunpack.c.l.b16 %v189
        %v928 = vunpack.c.l.b16 %v190
        %v929 = vunpack.c.l.b16 %v192
        %v930 = vunpack.c.l.b16 %v193
        %v931 = vunpack.c.l.b16 %v195
        %v932 = vunpack.c.l.b16 %v196
        %v933 = vunpack.c.l.b16 %v198
        %v934 = vunpack.c.l.b16 %v199
        %v935 = vunpack.c.l.b16 %v201
        %v936 = vunpack.c.l.b16 %v202
        %v937 = vunpack.c.l.b16 %v204
        %v938 = vunpack.c.l.b16 %v205
        %v939 = vunpack.c.l.b16 %v207
        %v940 = vunpack.c.l.b16 %v208
        %v941 = vunpack.c.l.b16 %v210
        %v942 = vunpack.c.l.b16 %v211
        %v943 = vunpack.c.l.b16 %v213
        %v944 = vunpack.c.l.b16 %v214
        %v945 = vunpack.c.l.b16 %v216
        %v946 = vunpack.c.l.b16 %v217
        %v947 = vunpack.c.l.b16 %v219
        %v948 = vunpack.c.l.b16 %v220
        %v949 = vunpack.c.l.b16 %v222
        %v950 = vunpack.c.l.b16 %v223
        %v951 = vunpack.c.l.b16 %v225
        %v952 = vunpack.c.l.b16 %v226
        %v953 = vunpack.c.l.b16 %v228
        %v954 = vunpack.c.l.b16 %v229
        %v955 = vunpack.c.l.b16 %v231
        %v956 = vunpack.c.l.b16 %v232
        %v957 = vunpack.c.l.b16 %v234
        %v958 = vunpack.c.l.b16 %v235
        %v959 = vpack.c.b16 %v928, %v927
        %v960 = vpack.c.b16 %v930, %v929
        %v961 = vpack.c.b16 %v932, %v931
        %v962 = vpack.c.b16 %v934, %v933
        %v963 = vpack.c.b16 %v936, %v935
        %v964 = vpack.c.b16 %v938, %v937
        %v965 = vpack.c.b16 %v940, %v939
        %v966 = vpack.c.b16 %v942, %v941
        %v967 = vpack.c.b16 %v944, %v943
        %v968 = vpack.c.b16 %v946, %v945
        %v969 = vpack.c.b16 %v948, %v947
        %v970 = vpack.c.b16 %v950, %v949
        %v971 = vpack.c.b16 %v952, %v951
        %v972 = vpack.c.b16 %v954, %v953
        %v973 = vpack.c.b16 %v956, %v955
        %v974 = vpack.c.b16 %v958, %v957
        %v976 = vsel %vm681, %v959, 0
        %v979 = vsel %vm681, %v960, 0
        %v982 = vsel %vm681, %v961, 0
        %v985 = vsel %vm681, %v962, 0
        %v988 = vsel %vm681, %v963, 0
        %v991 = vsel %vm681, %v964, 0
        %v994 = vsel %vm681, %v965, 0
        %v997 = vsel %vm681, %v966, 0
        %v1000 = vsel %vm681, %v967, 0
        %v1003 = vsel %vm681, %v968, 0
        %v1006 = vsel %vm681, %v969, 0
        %v1009 = vsel %vm681, %v970, 0
        %v1012 = vsel %vm681, %v971, 0
        %v1015 = vsel %vm681, %v972, 0
        %v1018 = vsel %vm681, %v973, 0
        %v1021 = vsel %vm681, %v974, 0
        %v1024 = vsel %vm730, %v243, 0
        %1026 = vmatprep.subr.bf16.mxu0 0
        %1027 = vmatpush1.bf16.msra.mxu0 %v1024
        %1028 = vmatprep.subr.bf16.mxu0 0
        %1029 = vmatpush1.bf16.msra.mxu0 0
        %1030 = vmatprep.subr.bf16.mxu0 0
        %1031 = vmatpush1.bf16.msra.mxu0 0
        %1032 = vmatprep.subr.bf16.mxu0 0
        %1033 = vmatpush1.bf16.msra.mxu0 0
        %1034 = vmatprep.subr.bf16.mxu0 0
        %1035 = vmatpush1.bf16.msra.mxu0 0
        %1036 = vmatprep.subr.bf16.mxu0 0
        %1037 = vmatpush1.bf16.msra.mxu0 0
        %1038 = vmatprep.subr.bf16.mxu0 0
        %1039 = vmatpush1.bf16.msra.mxu0 0
        %1040 = vmatprep.subr.bf16.mxu0 0
        %1041 = vmatpush1.bf16.msra.mxu0 0
        %1042 = vmatprep.subr.bf16.mxu0 0
        %1043 = vmatpush1.bf16.msra.mxu0 0
        %1044 = vmatprep.subr.bf16.mxu0 0
        %1045 = vmatpush1.bf16.msra.mxu0 0
        %1046 = vmatprep.subr.bf16.mxu0 0
        %1047 = vmatpush1.bf16.msra.mxu0 0
        %1048 = vmatprep.subr.bf16.mxu0 0
        %1049 = vmatpush1.bf16.msra.mxu0 0
        %1050 = vmatprep.subr.bf16.mxu0 0
        %1051 = vmatpush1.bf16.msra.mxu0 0
        %1052 = vmatprep.subr.bf16.mxu0 0
        %1053 = vmatpush1.bf16.msra.mxu0 0
        %1054 = vmatprep.subr.bf16.mxu0 0
        %1055 = vmatpush1.bf16.msra.mxu0 0
        %1056 = vmatprep.subr.bf16.mxu0 0
        %1057 = vmatpush1.bf16.msra.mxu0 0
        %1058 = vmatprep.mubr.bf16.mxu0 0
        %1059 = vmatmul.mubr.bf16.gmra.mrb[0].mxu0 %v976
        %v1060 = vpop.f32.mrb[0].mxu0
        %v1061 = vadd.f32 %v769, %v1060
        %v1062 = vpop.f32.mrb[0].mxu0
        %v1063 = vpop.f32.mrb[0].mxu0
        %v1064 = vadd.f32 %v772, %v1063
        %v1065 = vpop.f32.mrb[0].mxu0
        %1066 = vmatprep.mubr.bf16.mxu0 0
        %1067 = vmatmul.mubr.bf16.gmra.mrb[0].mxu0 %v979
        %v1068 = vpop.f32.mrb[0].mxu0
        %v1069 = vadd.f32 %v777, %v1068
        %v1070 = vpop.f32.mrb[0].mxu0
        %v1071 = vpop.f32.mrb[0].mxu0
        %v1072 = vadd.f32 %v780, %v1071
        %v1073 = vpop.f32.mrb[0].mxu0
        %1074 = vmatprep.mubr.bf16.mxu0 0
        %1075 = vmatmul.mubr.bf16.gmra.mrb[0].mxu0 %v982
        %v1076 = vpop.f32.mrb[0].mxu0
        %v1077 = vadd.f32 %v785, %v1076
        %v1078 = vpop.f32.mrb[0].mxu0
        %v1079 = vpop.f32.mrb[0].mxu0
        %v1080 = vadd.f32 %v788, %v1079
        %v1081 = vpop.f32.mrb[0].mxu0
        %1082 = vmatprep.mubr.bf16.mxu0 0
        %1083 = vmatmul.mubr.bf16.gmra.mrb[0].mxu0 %v985
        %v1084 = vpop.f32.mrb[0].mxu0
        %v1085 = vadd.f32 %v793, %v1084
        %v1086 = vpop.f32.mrb[0].mxu0
        %v1087 = vpop.f32.mrb[0].mxu0
        %v1088 = vadd.f32 %v796, %v1087
        %v1089 = vpop.f32.mrb[0].mxu0
        %1090 = vmatprep.mubr.bf16.mxu0 0
        %1091 = vmatmul.mubr.bf16.gmra.mrb[0].mxu0 %v988
        %v1092 = vpop.f32.mrb[0].mxu0
        %v1093 = vadd.f32 %v801, %v1092
        %v1094 = vpop.f32.mrb[0].mxu0
        %v1095 = vpop.f32.mrb[0].mxu0
        %v1096 = vadd.f32 %v804, %v1095
        %v1097 = vpop.f32.mrb[0].mxu0
        %1098 = vmatprep.mubr.bf16.mxu0 0
        %1099 = vmatmul.mubr.bf16.gmra.mrb[0].mxu0 %v991
        %v1100 = vpop.f32.mrb[0].mxu0
        %v1101 = vadd.f32 %v809, %v1100
        %v1102 = vpop.f32.mrb[0].mxu0
        %v1103 = vpop.f32.mrb[0].mxu0
        %v1104 = vadd.f32 %v812, %v1103
        %v1105 = vpop.f32.mrb[0].mxu0
        %1106 = vmatprep.mubr.bf16.mxu0 0
        %1107 = vmatmul.mubr.bf16.gmra.mrb[0].mxu0 %v994
        %v1108 = vpop.f32.mrb[0].mxu0
        %v1109 = vadd.f32 %v817, %v1108
        %v1110 = vpop.f32.mrb[0].mxu0
        %v1111 = vpop.f32.mrb[0].mxu0
        %v1112 = vadd.f32 %v820, %v1111
        %v1113 = vpop.f32.mrb[0].mxu0
        %1114 = vmatprep.mubr.bf16.mxu0 0
        %1115 = vmatmul.mubr.bf16.gmra.mrb[0].mxu0 %v997
        %v1116 = vpop.f32.mrb[0].mxu0
        %v1117 = vadd.f32 %v825, %v1116
        %v1118 = vpop.f32.mrb[0].mxu0
        %v1119 = vpop.f32.mrb[0].mxu0
        %v1120 = vadd.f32 %v828, %v1119
        %v1121 = vpop.f32.mrb[0].mxu0
        %1122 = vmatprep.mubr.bf16.mxu0 0
        %1123 = vmatmul.mubr.bf16.gmra.mrb[0].mxu0 %v1000
        %v1124 = vpop.f32.mrb[0].mxu0
        %v1125 = vadd.f32 %v833, %v1124
        %v1126 = vpop.f32.mrb[0].mxu0
        %v1127 = vpop.f32.mrb[0].mxu0
        %v1128 = vadd.f32 %v836, %v1127
        %v1129 = vpop.f32.mrb[0].mxu0
        %1130 = vmatprep.mubr.bf16.mxu0 0
        %1131 = vmatmul.mubr.bf16.gmra.mrb[0].mxu0 %v1003
        %v1132 = vpop.f32.mrb[0].mxu0
        %v1133 = vadd.f32 %v841, %v1132
        %v1134 = vpop.f32.mrb[0].mxu0
        %v1135 = vpop.f32.mrb[0].mxu0
        %v1136 = vadd.f32 %v844, %v1135
        %v1137 = vpop.f32.mrb[0].mxu0
        %1138 = vmatprep.mubr.bf16.mxu0 0
        %1139 = vmatmul.mubr.bf16.gmra.mrb[0].mxu0 %v1006
        %v1140 = vpop.f32.mrb[0].mxu0
        %v1141 = vadd.f32 %v849, %v1140
        %v1142 = vpop.f32.mrb[0].mxu0
        %v1143 = vpop.f32.mrb[0].mxu0
        %v1144 = vadd.f32 %v852, %v1143
        %v1145 = vpop.f32.mrb[0].mxu0
        %1146 = vmatprep.mubr.bf16.mxu0 0
        %1147 = vmatmul.mubr.bf16.gmra.mrb[0].mxu0 %v1009
        %v1148 = vpop.f32.mrb[0].mxu0
        %v1149 = vadd.f32 %v857, %v1148
        %v1150 = vpop.f32.mrb[0].mxu0
        %v1151 = vpop.f32.mrb[0].mxu0
        %v1152 = vadd.f32 %v860, %v1151
        %v1153 = vpop.f32.mrb[0].mxu0
        %1154 = vmatprep.mubr.bf16.mxu0 0
        %1155 = vmatmul.mubr.bf16.gmra.mrb[0].mxu0 %v1012
        %v1156 = vpop.f32.mrb[0].mxu0
        %v1157 = vadd.f32 %v865, %v1156
        %v1158 = vpop.f32.mrb[0].mxu0
        %v1159 = vpop.f32.mrb[0].mxu0
        %v1160 = vadd.f32 %v868, %v1159
        %v1161 = vpop.f32.mrb[0].mxu0
        %1162 = vmatprep.mubr.bf16.mxu0 0
        %1163 = vmatmul.mubr.bf16.gmra.mrb[0].mxu0 %v1015
        %v1164 = vpop.f32.mrb[0].mxu0
        %v1165 = vadd.f32 %v873, %v1164
        %v1166 = vpop.f32.mrb[0].mxu0
        %v1167 = vpop.f32.mrb[0].mxu0
        %v1168 = vadd.f32 %v876, %v1167
        %v1169 = vpop.f32.mrb[0].mxu0
        %1170 = vmatprep.mubr.bf16.mxu0 0
        %1171 = vmatmul.mubr.bf16.gmra.mrb[0].mxu0 %v1018
        %v1172 = vpop.f32.mrb[0].mxu0
        %v1173 = vadd.f32 %v881, %v1172
        %v1174 = vpop.f32.mrb[0].mxu0
        %v1175 = vpop.f32.mrb[0].mxu0
        %v1176 = vadd.f32 %v884, %v1175
        %v1177 = vpop.f32.mrb[0].mxu0
        %1178 = vmatprep.mubr.bf16.mxu0 0
        %1179 = vmatmul.mubr.bf16.gmra.mrb[0].mxu0 %v1021
        %v1180 = vpop.f32.mrb[0].mxu0
        %v1181 = vadd.f32 %v889, %v1180
        %v1182 = vpop.f32.mrb[0].mxu0
        %v1183 = vpop.f32.mrb[0].mxu0
        %v1184 = vadd.f32 %v892, %v1183
        %v1185 = vpop.f32.mrb[0].mxu0
        %1186 = vdwg.mxu0
        %vm1203 = vcmask 1042432
        %vm1204 = vcmask 1046532
        %vm1205 = vmor %vm1203, %vm1204
        %v1206 = vrot.slane %v189, 5
        %v1207 = vrot.slane %v1206, 4
        %v1208 = vrot.slane %v190, 5
        %v1209 = vsel %vm1205, %v1207, %v1208
        %v1210 = vrot.slane %v1208, 4
        %v1211 = vrot.slane %v191, 5
        %v1212 = vsel %vm1205, %v1210, %v1211
        %v1213 = vrot.slane %v192, 5
        %v1214 = vrot.slane %v1213, 4
        %v1215 = vrot.slane %v193, 5
        %v1216 = vsel %vm1205, %v1214, %v1215
        %v1217 = vrot.slane %v1215, 4
        %v1218 = vrot.slane %v194, 5
        %v1219 = vsel %vm1205, %v1217, %v1218
        %v1220 = vrot.slane %v195, 5
        %v1221 = vrot.slane %v1220, 4
        %v1222 = vrot.slane %v196, 5
        %v1223 = vsel %vm1205, %v1221, %v1222
        %v1224 = vrot.slane %v1222, 4
        %v1225 = vrot.slane %v197, 5
        %v1226 = vsel %vm1205, %v1224, %v1225
        %v1227 = vrot.slane %v198, 5
        %v1228 = vrot.slane %v1227, 4
        %v1229 = vrot.slane %v199, 5
        %v1230 = vsel %vm1205, %v1228, %v1229
        %v1231 = vrot.slane %v1229, 4
        %v1232 = vrot.slane %v200, 5
        %v1233 = vsel %vm1205, %v1231, %v1232
        %v1234 = vrot.slane %v201, 5
        %v1235 = vrot.slane %v1234, 4
        %v1236 = vrot.slane %v202, 5
        %v1237 = vsel %vm1205, %v1235, %v1236
        %v1238 = vrot.slane %v1236, 4
        %v1239 = vrot.slane %v203, 5
        %v1240 = vsel %vm1205, %v1238, %v1239
        %v1241 = vrot.slane %v204, 5
        %v1242 = vrot.slane %v1241, 4
        %v1243 = vrot.slane %v205, 5
        %v1244 = vsel %vm1205, %v1242, %v1243
        %v1245 = vrot.slane %v1243, 4
        %v1246 = vrot.slane %v206, 5
        %v1247 = vsel %vm1205, %v1245, %v1246
        %v1248 = vrot.slane %v207, 5
        %v1249 = vrot.slane %v1248, 4
        %v1250 = vrot.slane %v208, 5
        %v1251 = vsel %vm1205, %v1249, %v1250
        %v1252 = vrot.slane %v1250, 4
        %v1253 = vrot.slane %v209, 5
        %v1254 = vsel %vm1205, %v1252, %v1253
        %v1255 = vrot.slane %v210, 5
        %v1256 = vrot.slane %v1255, 4
        %v1257 = vrot.slane %v211, 5
        %v1258 = vsel %vm1205, %v1256, %v1257
        %v1259 = vrot.slane %v1257, 4
        %v1260 = vrot.slane %v212, 5
        %v1261 = vsel %vm1205, %v1259, %v1260
        %v1262 = vrot.slane %v213, 5
        %v1263 = vrot.slane %v1262, 4
        %v1264 = vrot.slane %v214, 5
        %v1265 = vsel %vm1205, %v1263, %v1264
        %v1266 = vrot.slane %v1264, 4
        %v1267 = vrot.slane %v215, 5
        %v1268 = vsel %vm1205, %v1266, %v1267
        %v1269 = vrot.slane %v216, 5
        %v1270 = vrot.slane %v1269, 4
        %v1271 = vrot.slane %v217, 5
        %v1272 = vsel %vm1205, %v1270, %v1271
        %v1273 = vrot.slane %v1271, 4
        %v1274 = vrot.slane %v218, 5
        %v1275 = vsel %vm1205, %v1273, %v1274
        %v1276 = vrot.slane %v219, 5
        %v1277 = vrot.slane %v1276, 4
        %v1278 = vrot.slane %v220, 5
        %v1279 = vsel %vm1205, %v1277, %v1278
        %v1280 = vrot.slane %v1278, 4
        %v1281 = vrot.slane %v221, 5
        %v1282 = vsel %vm1205, %v1280, %v1281
        %v1283 = vrot.slane %v222, 5
        %v1284 = vrot.slane %v1283, 4
        %v1285 = vrot.slane %v223, 5
        %v1286 = vsel %vm1205, %v1284, %v1285
        %v1287 = vrot.slane %v1285, 4
        %v1288 = vrot.slane %v224, 5
        %v1289 = vsel %vm1205, %v1287, %v1288
        %v1290 = vrot.slane %v225, 5
        %v1291 = vrot.slane %v1290, 4
        %v1292 = vrot.slane %v226, 5
        %v1293 = vsel %vm1205, %v1291, %v1292
        %v1294 = vrot.slane %v1292, 4
        %v1295 = vrot.slane %v227, 5
        %v1296 = vsel %vm1205, %v1294, %v1295
        %v1297 = vrot.slane %v228, 5
        %v1298 = vrot.slane %v1297, 4
        %v1299 = vrot.slane %v229, 5
        %v1300 = vsel %vm1205, %v1298, %v1299
        %v1301 = vrot.slane %v1299, 4
        %v1302 = vrot.slane %v230, 5
        %v1303 = vsel %vm1205, %v1301, %v1302
        %v1304 = vrot.slane %v231, 5
        %v1305 = vrot.slane %v1304, 4
        %v1306 = vrot.slane %v232, 5
        %v1307 = vsel %vm1205, %v1305, %v1306
        %v1308 = vrot.slane %v1306, 4
        %v1309 = vrot.slane %v233, 5
        %v1310 = vsel %vm1205, %v1308, %v1309
        %v1311 = vrot.slane %v234, 5
        %v1312 = vrot.slane %v1311, 4
        %v1313 = vrot.slane %v235, 5
        %v1314 = vsel %vm1205, %v1312, %v1313
        %v1315 = vrot.slane %v1313, 4
        %v1316 = vrot.slane %v236, 5
        %v1317 = vsel %vm1205, %v1315, %v1316
        %s1318 = scalar_lea.vmem %s1, 4
        %v1319 = vld [vmem:[%s1318] sm:$0x3]
        %v1320 = vunpack.c.l.b16 %v1209
        %v1321 = vunpack.c.l.b16 %v1212
        %v1322 = vunpack.c.l.b16 %v1216
        %v1323 = vunpack.c.l.b16 %v1219
        %v1324 = vunpack.c.l.b16 %v1223
        %v1325 = vunpack.c.l.b16 %v1226
        %v1326 = vunpack.c.l.b16 %v1230
        %v1327 = vunpack.c.l.b16 %v1233
        %v1328 = vunpack.c.l.b16 %v1237
        %v1329 = vunpack.c.l.b16 %v1240
        %v1330 = vunpack.c.l.b16 %v1244
        %v1331 = vunpack.c.l.b16 %v1247
        %v1332 = vunpack.c.l.b16 %v1251
        %v1333 = vunpack.c.l.b16 %v1254
        %v1334 = vunpack.c.l.b16 %v1258
        %v1335 = vunpack.c.l.b16 %v1261
        %v1336 = vunpack.c.l.b16 %v1265
        %v1337 = vunpack.c.l.b16 %v1268
        %v1338 = vunpack.c.l.b16 %v1272
        %v1339 = vunpack.c.l.b16 %v1275
        %v1340 = vunpack.c.l.b16 %v1279
        %v1341 = vunpack.c.l.b16 %v1282
        %v1342 = vunpack.c.l.b16 %v1286
        %v1343 = vunpack.c.l.b16 %v1289
        %v1344 = vunpack.c.l.b16 %v1293
        %v1345 = vunpack.c.l.b16 %v1296
        %v1346 = vunpack.c.l.b16 %v1300
        %v1347 = vunpack.c.l.b16 %v1303
        %v1348 = vunpack.c.l.b16 %v1307
        %v1349 = vunpack.c.l.b16 %v1310
        %v1350 = vunpack.c.l.b16 %v1314
        %v1351 = vunpack.c.l.b16 %v1317
        %v1352 = vpack.c.b16 %v1321, %v1320
        %v1353 = vpack.c.b16 %v1323, %v1322
        %v1354 = vpack.c.b16 %v1325, %v1324
        %v1355 = vpack.c.b16 %v1327, %v1326
        %v1356 = vpack.c.b16 %v1329, %v1328
        %v1357 = vpack.c.b16 %v1331, %v1330
        %v1358 = vpack.c.b16 %v1333, %v1332
        %v1359 = vpack.c.b16 %v1335, %v1334
        %v1360 = vpack.c.b16 %v1337, %v1336
        %v1361 = vpack.c.b16 %v1339, %v1338
        %v1362 = vpack.c.b16 %v1341, %v1340
        %v1363 = vpack.c.b16 %v1343, %v1342
        %v1364 = vpack.c.b16 %v1345, %v1344
        %v1365 = vpack.c.b16 %v1347, %v1346
        %v1366 = vpack.c.b16 %v1349, %v1348
        %v1367 = vpack.c.b16 %v1351, %v1350
        %v1369 = vsel %vm681, %v1352, 0
        %v1372 = vsel %vm681, %v1353, 0
        %v1375 = vsel %vm681, %v1354, 0
        %v1378 = vsel %vm681, %v1355, 0
        %v1381 = vsel %vm681, %v1356, 0
        %v1384 = vsel %vm681, %v1357, 0
        %v1387 = vsel %vm681, %v1358, 0
        %v1390 = vsel %vm681, %v1359, 0
        %v1393 = vsel %vm681, %v1360, 0
        %v1396 = vsel %vm681, %v1361, 0
        %v1399 = vsel %vm681, %v1362, 0
        %v1402 = vsel %vm681, %v1363, 0
        %v1405 = vsel %vm681, %v1364, 0
        %v1408 = vsel %vm681, %v1365, 0
        %v1411 = vsel %vm681, %v1366, 0
        %v1414 = vsel %vm681, %v1367, 0
        %v1417 = vsel %vm730, %v1319, 0
        %1419 = vmatprep.subr.bf16.mxu0 0
        %1420 = vmatpush1.bf16.msra.mxu0 %v1417
        %1421 = vmatprep.subr.bf16.mxu0 0
        %1422 = vmatpush1.bf16.msra.mxu0 0
        %1423 = vmatprep.subr.bf16.mxu0 0
        %1424 = vmatpush1.bf16.msra.mxu0 0
        %1425 = vmatprep.subr.bf16.mxu0 0
        %1426 = vmatpush1.bf16.msra.mxu0 0
        %1427 = vmatprep.subr.bf16.mxu0 0
        %1428 = vmatpush1.bf16.msra.mxu0 0
        %1429 = vmatprep.subr.bf16.mxu0 0
        %1430 = vmatpush1.bf16.msra.mxu0 0
        %1431 = vmatprep.subr.bf16.mxu0 0
        %1432 = vmatpush1.bf16.msra.mxu0 0
        %1433 = vmatprep.subr.bf16.mxu0 0
        %1434 = vmatpush1.bf16.msra.mxu0 0
        %1435 = vmatprep.subr.bf16.mxu0 0
        %1436 = vmatpush1.bf16.msra.mxu0 0
        %1437 = vmatprep.subr.bf16.mxu0 0
        %1438 = vmatpush1.bf16.msra.mxu0 0
        %1439 = vmatprep.subr.bf16.mxu0 0
        %1440 = vmatpush1.bf16.msra.mxu0 0
        %1441 = vmatprep.subr.bf16.mxu0 0
        %1442 = vmatpush1.bf16.msra.mxu0 0
        %1443 = vmatprep.subr.bf16.mxu0 0
        %1444 = vmatpush1.bf16.msra.mxu0 0
        %1445 = vmatprep.subr.bf16.mxu0 0
        %1446 = vmatpush1.bf16.msra.mxu0 0
        %1447 = vmatprep.subr.bf16.mxu0 0
        %1448 = vmatpush1.bf16.msra.mxu0 0
        %1449 = vmatprep.subr.bf16.mxu0 0
        %1450 = vmatpush1.bf16.msra.mxu0 0
        %1451 = vmatprep.mubr.bf16.mxu0 0
        %1452 = vmatmul.mubr.bf16.gmra.mrb[0].mxu0 %v1369
        %v1453 = vpop.f32.mrb[0].mxu0
        %v1454 = vadd.f32 0.0, %v1453
        %v1455 = vpop.f32.mrb[0].mxu0
        %v1456 = vpop.f32.mrb[0].mxu0
        %v1457 = vadd.f32 0.0, %v1456
        %v1458 = vpop.f32.mrb[0].mxu0
        %1459 = vmatprep.mubr.bf16.mxu0 0
        %1460 = vmatmul.mubr.bf16.gmra.mrb[0].mxu0 %v1372
        %v1461 = vpop.f32.mrb[0].mxu0
        %v1462 = vadd.f32 0.0, %v1461
        %v1463 = vpop.f32.mrb[0].mxu0
        %v1464 = vpop.f32.mrb[0].mxu0
        %v1465 = vadd.f32 0.0, %v1464
        %v1466 = vpop.f32.mrb[0].mxu0
        %1467 = vmatprep.mubr.bf16.mxu0 0
        %1468 = vmatmul.mubr.bf16.gmra.mrb[0].mxu0 %v1375
        %v1469 = vpop.f32.mrb[0].mxu0
        %v1470 = vadd.f32 0.0, %v1469
        %v1471 = vpop.f32.mrb[0].mxu0
        %v1472 = vpop.f32.mrb[0].mxu0
        %v1473 = vadd.f32 0.0, %v1472
        %v1474 = vpop.f32.mrb[0].mxu0
        %1475 = vmatprep.mubr.bf16.mxu0 0
        %1476 = vmatmul.mubr.bf16.gmra.mrb[0].mxu0 %v1378
        %v1477 = vpop.f32.mrb[0].mxu0
        %v1478 = vadd.f32 0.0, %v1477
        %v1479 = vpop.f32.mrb[0].mxu0
        %v1480 = vpop.f32.mrb[0].mxu0
        %v1481 = vadd.f32 0.0, %v1480
        %v1482 = vpop.f32.mrb[0].mxu0
        %1483 = vmatprep.mubr.bf16.mxu0 0
        %1484 = vmatmul.mubr.bf16.gmra.mrb[0].mxu0 %v1381
        %v1485 = vpop.f32.mrb[0].mxu0
        %v1486 = vadd.f32 0.0, %v1485
        %v1487 = vpop.f32.mrb[0].mxu0
        %v1488 = vpop.f32.mrb[0].mxu0
        %v1489 = vadd.f32 0.0, %v1488
        %v1490 = vpop.f32.mrb[0].mxu0
        %1491 = vmatprep.mubr.bf16.mxu0 0
        %1492 = vmatmul.mubr.bf16.gmra.mrb[0].mxu0 %v1384
        %v1493 = vpop.f32.mrb[0].mxu0
        %v1494 = vadd.f32 0.0, %v1493
        %v1495 = vpop.f32.mrb[0].mxu0
        %v1496 = vpop.f32.mrb[0].mxu0
        %v1497 = vadd.f32 0.0, %v1496
        %v1498 = vpop.f32.mrb[0].mxu0
        %1499 = vmatprep.mubr.bf16.mxu0 0
        %1500 = vmatmul.mubr.bf16.gmra.mrb[0].mxu0 %v1387
        %v1501 = vpop.f32.mrb[0].mxu0
        %v1502 = vadd.f32 0.0, %v1501
        %v1503 = vpop.f32.mrb[0].mxu0
        %v1504 = vpop.f32.mrb[0].mxu0
        %v1505 = vadd.f32 0.0, %v1504
        %v1506 = vpop.f32.mrb[0].mxu0
        %1507 = vmatprep.mubr.bf16.mxu0 0
        %1508 = vmatmul.mubr.bf16.gmra.mrb[0].mxu0 %v1390
        %v1509 = vpop.f32.mrb[0].mxu0
        %v1510 = vadd.f32 0.0, %v1509
        %v1511 = vpop.f32.mrb[0].mxu0
        %v1512 = vpop.f32.mrb[0].mxu0
        %v1513 = vadd.f32 0.0, %v1512
        %v1514 = vpop.f32.mrb[0].mxu0
        %1515 = vmatprep.mubr.bf16.mxu0 0
        %1516 = vmatmul.mubr.bf16.gmra.mrb[0].mxu0 %v1393
        %v1517 = vpop.f32.mrb[0].mxu0
        %v1518 = vadd.f32 0.0, %v1517
        %v1519 = vpop.f32.mrb[0].mxu0
        %v1520 = vpop.f32.mrb[0].mxu0
        %v1521 = vadd.f32 0.0, %v1520
        %v1522 = vpop.f32.mrb[0].mxu0
        %1523 = vmatprep.mubr.bf16.mxu0 0
        %1524 = vmatmul.mubr.bf16.gmra.mrb[0].mxu0 %v1396
        %v1525 = vpop.f32.mrb[0].mxu0
        %v1526 = vadd.f32 0.0, %v1525
        %v1527 = vpop.f32.mrb[0].mxu0
        %v1528 = vpop.f32.mrb[0].mxu0
        %v1529 = vadd.f32 0.0, %v1528
        %v1530 = vpop.f32.mrb[0].mxu0
        %1531 = vmatprep.mubr.bf16.mxu0 0
        %1532 = vmatmul.mubr.bf16.gmra.mrb[0].mxu0 %v1399
        %v1533 = vpop.f32.mrb[0].mxu0
        %v1534 = vadd.f32 0.0, %v1533
        %v1535 = vpop.f32.mrb[0].mxu0
        %v1536 = vpop.f32.mrb[0].mxu0
        %v1537 = vadd.f32 0.0, %v1536
        %v1538 = vpop.f32.mrb[0].mxu0
        %1539 = vmatprep.mubr.bf16.mxu0 0
        %1540 = vmatmul.mubr.bf16.gmra.mrb[0].mxu0 %v1402
        %v1541 = vpop.f32.mrb[0].mxu0
        %v1542 = vadd.f32 0.0, %v1541
        %v1543 = vpop.f32.mrb[0].mxu0
        %v1544 = vpop.f32.mrb[0].mxu0
        %v1545 = vadd.f32 0.0, %v1544
        %v1546 = vpop.f32.mrb[0].mxu0
        %1547 = vmatprep.mubr.bf16.mxu0 0
        %1548 = vmatmul.mubr.bf16.gmra.mrb[0].mxu0 %v1405
        %v1549 = vpop.f32.mrb[0].mxu0
        %v1550 = vadd.f32 0.0, %v1549
        %v1551 = vpop.f32.mrb[0].mxu0
        %v1552 = vpop.f32.mrb[0].mxu0
        %v1553 = vadd.f32 0.0, %v1552
        %v1554 = vpop.f32.mrb[0].mxu0
        %1555 = vmatprep.mubr.bf16.mxu0 0
        %1556 = vmatmul.mubr.bf16.gmra.mrb[0].mxu0 %v1408
        %v1557 = vpop.f32.mrb[0].mxu0
        %v1558 = vadd.f32 0.0, %v1557
        %v1559 = vpop.f32.mrb[0].mxu0
        %v1560 = vpop.f32.mrb[0].mxu0
        %v1561 = vadd.f32 0.0, %v1560
        %v1562 = vpop.f32.mrb[0].mxu0
        %1563 = vmatprep.mubr.bf16.mxu0 0
        %1564 = vmatmul.mubr.bf16.gmra.mrb[0].mxu0 %v1411
        %v1565 = vpop.f32.mrb[0].mxu0
        %v1566 = vadd.f32 0.0, %v1565
        %v1567 = vpop.f32.mrb[0].mxu0
        %v1568 = vpop.f32.mrb[0].mxu0
        %v1569 = vadd.f32 0.0, %v1568
        %v1570 = vpop.f32.mrb[0].mxu0
        %1571 = vmatprep.mubr.bf16.mxu0 0
        %1572 = vmatmul.mubr.bf16.gmra.mrb[0].mxu0 %v1414
        %v1573 = vpop.f32.mrb[0].mxu0
        %v1574 = vadd.f32 0.0, %v1573
        %v1575 = vpop.f32.mrb[0].mxu0
        %v1576 = vpop.f32.mrb[0].mxu0
        %v1577 = vadd.f32 0.0, %v1576
        %v1578 = vpop.f32.mrb[0].mxu0
        %1579 = vdwg.mxu0
        %v1580 = vadd.f32 %v1061, %v1454
        %v1581 = vadd.f32 %v1064, %v1457
        %v1582 = vadd.f32 %v1069, %v1462
        %v1583 = vadd.f32 %v1072, %v1465
        %v1584 = vadd.f32 %v1077, %v1470
        %v1585 = vadd.f32 %v1080, %v1473
        %v1586 = vadd.f32 %v1085, %v1478
        %v1587 = vadd.f32 %v1088, %v1481
        %v1588 = vadd.f32 %v1093, %v1486
        %v1589 = vadd.f32 %v1096, %v1489
        %v1590 = vadd.f32 %v1101, %v1494
        %v1591 = vadd.f32 %v1104, %v1497
        %v1592 = vadd.f32 %v1109, %v1502
        %v1593 = vadd.f32 %v1112, %v1505
        %v1594 = vadd.f32 %v1117, %v1510
        %v1595 = vadd.f32 %v1120, %v1513
        %v1596 = vadd.f32 %v1125, %v1518
        %v1597 = vadd.f32 %v1128, %v1521
        %v1598 = vadd.f32 %v1133, %v1526
        %v1599 = vadd.f32 %v1136, %v1529
        %v1600 = vadd.f32 %v1141, %v1534
        %v1601 = vadd.f32 %v1144, %v1537
        %v1602 = vadd.f32 %v1149, %v1542
        %v1603 = vadd.f32 %v1152, %v1545
        %v1604 = vadd.f32 %v1157, %v1550
        %v1605 = vadd.f32 %v1160, %v1553
        %v1606 = vadd.f32 %v1165, %v1558
        %v1607 = vadd.f32 %v1168, %v1561
        %v1608 = vadd.f32 %v1173, %v1566
        %v1609 = vadd.f32 %v1176, %v1569
        %v1610 = vadd.f32 %v1181, %v1574
        %v1611 = vadd.f32 %v1184, %v1577
        %s1612 = scalar_lea.vmem %s1, 6
        %v1613 = vld [vmem:[%s1612] sm:$0x3]
        %v1616 = vunpack.c.l.b16 %v237
        %v1617 = vunpack.c.l.b16 %v238
        %v1618 = vpack.c.b16 %v1617, %v1616
        %v1620 = vsel %vm681, %v1618, 0
        %v1623 = vsel %vm730, %v1613, 0
        %1625 = vmatprep.subr.bf16.mxu0 0
        %1626 = vmatpush1.bf16.msra.mxu0 %v1623
        %1627 = vmatprep.subr.bf16.mxu0 0
        %1628 = vmatpush1.bf16.msra.mxu0 0
        %1629 = vmatprep.subr.bf16.mxu0 0
        %1630 = vmatpush1.bf16.msra.mxu0 0
        %1631 = vmatprep.subr.bf16.mxu0 0
        %1632 = vmatpush1.bf16.msra.mxu0 0
        %1633 = vmatprep.subr.bf16.mxu0 0
        %1634 = vmatpush1.bf16.msra.mxu0 0
        %1635 = vmatprep.subr.bf16.mxu0 0
        %1636 = vmatpush1.bf16.msra.mxu0 0
        %1637 = vmatprep.subr.bf16.mxu0 0
        %1638 = vmatpush1.bf16.msra.mxu0 0
        %1639 = vmatprep.subr.bf16.mxu0 0
        %1640 = vmatpush1.bf16.msra.mxu0 0
        %1641 = vmatprep.subr.bf16.mxu0 0
        %1642 = vmatpush1.bf16.msra.mxu0 0
        %1643 = vmatprep.subr.bf16.mxu0 0
        %1644 = vmatpush1.bf16.msra.mxu0 0
        %1645 = vmatprep.subr.bf16.mxu0 0
        %1646 = vmatpush1.bf16.msra.mxu0 0
        %1647 = vmatprep.subr.bf16.mxu0 0
        %1648 = vmatpush1.bf16.msra.mxu0 0
        %1649 = vmatprep.subr.bf16.mxu0 0
        %1650 = vmatpush1.bf16.msra.mxu0 0
        %1651 = vmatprep.subr.bf16.mxu0 0
        %1652 = vmatpush1.bf16.msra.mxu0 0
        %1653 = vmatprep.subr.bf16.mxu0 0
        %1654 = vmatpush1.bf16.msra.mxu0 0
        %1655 = vmatprep.subr.bf16.mxu0 0
        %1656 = vmatpush1.bf16.msra.mxu0 0
        %1657 = vmatprep.mubr.bf16.mxu0 0
        %1658 = vmatmul.mubr.bf16.gmra.mrb[0].mxu0 %v979
        %v1659 = vpop.f32.mrb[0].mxu0
        %v1660 = vadd.f32 0.0, %v1659
        %v1661 = vpop.f32.mrb[0].mxu0
        %v1662 = vpop.f32.mrb[0].mxu0
        %v1663 = vadd.f32 0.0, %v1662
        %v1664 = vpop.f32.mrb[0].mxu0
        %1665 = vmatprep.mubr.bf16.mxu0 0
        %1666 = vmatmul.mubr.bf16.gmra.mrb[0].mxu0 %v982
        %v1667 = vpop.f32.mrb[0].mxu0
        %v1668 = vadd.f32 0.0, %v1667
        %v1669 = vpop.f32.mrb[0].mxu0
        %v1670 = vpop.f32.mrb[0].mxu0
        %v1671 = vadd.f32 0.0, %v1670
        %v1672 = vpop.f32.mrb[0].mxu0
        %1673 = vmatprep.mubr.bf16.mxu0 0
        %1674 = vmatmul.mubr.bf16.gmra.mrb[0].mxu0 %v985
        %v1675 = vpop.f32.mrb[0].mxu0
        %v1676 = vadd.f32 0.0, %v1675
        %v1677 = vpop.f32.mrb[0].mxu0
        %v1678 = vpop.f32.mrb[0].mxu0
        %v1679 = vadd.f32 0.0, %v1678
        %v1680 = vpop.f32.mrb[0].mxu0
        %1681 = vmatprep.mubr.bf16.mxu0 0
        %1682 = vmatmul.mubr.bf16.gmra.mrb[0].mxu0 %v988
        %v1683 = vpop.f32.mrb[0].mxu0
        %v1684 = vadd.f32 0.0, %v1683
        %v1685 = vpop.f32.mrb[0].mxu0
        %v1686 = vpop.f32.mrb[0].mxu0
        %v1687 = vadd.f32 0.0, %v1686
        %v1688 = vpop.f32.mrb[0].mxu0
        %1689 = vmatprep.mubr.bf16.mxu0 0
        %1690 = vmatmul.mubr.bf16.gmra.mrb[0].mxu0 %v991
        %v1691 = vpop.f32.mrb[0].mxu0
        %v1692 = vadd.f32 0.0, %v1691
        %v1693 = vpop.f32.mrb[0].mxu0
        %v1694 = vpop.f32.mrb[0].mxu0
        %v1695 = vadd.f32 0.0, %v1694
        %v1696 = vpop.f32.mrb[0].mxu0
        %1697 = vmatprep.mubr.bf16.mxu0 0
        %1698 = vmatmul.mubr.bf16.gmra.mrb[0].mxu0 %v994
        %v1699 = vpop.f32.mrb[0].mxu0
        %v1700 = vadd.f32 0.0, %v1699
        %v1701 = vpop.f32.mrb[0].mxu0
        %v1702 = vpop.f32.mrb[0].mxu0
        %v1703 = vadd.f32 0.0, %v1702
        %v1704 = vpop.f32.mrb[0].mxu0
        %1705 = vmatprep.mubr.bf16.mxu0 0
        %1706 = vmatmul.mubr.bf16.gmra.mrb[0].mxu0 %v997
        %v1707 = vpop.f32.mrb[0].mxu0
        %v1708 = vadd.f32 0.0, %v1707
        %v1709 = vpop.f32.mrb[0].mxu0
        %v1710 = vpop.f32.mrb[0].mxu0
        %v1711 = vadd.f32 0.0, %v1710
        %v1712 = vpop.f32.mrb[0].mxu0
        %1713 = vmatprep.mubr.bf16.mxu0 0
        %1714 = vmatmul.mubr.bf16.gmra.mrb[0].mxu0 %v1000
        %v1715 = vpop.f32.mrb[0].mxu0
        %v1716 = vadd.f32 0.0, %v1715
        %v1717 = vpop.f32.mrb[0].mxu0
        %v1718 = vpop.f32.mrb[0].mxu0
        %v1719 = vadd.f32 0.0, %v1718
        %v1720 = vpop.f32.mrb[0].mxu0
        %1721 = vmatprep.mubr.bf16.mxu0 0
        %1722 = vmatmul.mubr.bf16.gmra.mrb[0].mxu0 %v1003
        %v1723 = vpop.f32.mrb[0].mxu0
        %v1724 = vadd.f32 0.0, %v1723
        %v1725 = vpop.f32.mrb[0].mxu0
        %v1726 = vpop.f32.mrb[0].mxu0
        %v1727 = vadd.f32 0.0, %v1726
        %v1728 = vpop.f32.mrb[0].mxu0
        %1729 = vmatprep.mubr.bf16.mxu0 0
        %1730 = vmatmul.mubr.bf16.gmra.mrb[0].mxu0 %v1006
        %v1731 = vpop.f32.mrb[0].mxu0
        %v1732 = vadd.f32 0.0, %v1731
        %v1733 = vpop.f32.mrb[0].mxu0
        %v1734 = vpop.f32.mrb[0].mxu0
        %v1735 = vadd.f32 0.0, %v1734
        %v1736 = vpop.f32.mrb[0].mxu0
        %1737 = vmatprep.mubr.bf16.mxu0 0
        %1738 = vmatmul.mubr.bf16.gmra.mrb[0].mxu0 %v1009
        %v1739 = vpop.f32.mrb[0].mxu0
        %v1740 = vadd.f32 0.0, %v1739
        %v1741 = vpop.f32.mrb[0].mxu0
        %v1742 = vpop.f32.mrb[0].mxu0
        %v1743 = vadd.f32 0.0, %v1742
        %v1744 = vpop.f32.mrb[0].mxu0
        %1745 = vmatprep.mubr.bf16.mxu0 0
        %1746 = vmatmul.mubr.bf16.gmra.mrb[0].mxu0 %v1012
        %v1747 = vpop.f32.mrb[0].mxu0
        %v1748 = vadd.f32 0.0, %v1747
        %v1749 = vpop.f32.mrb[0].mxu0
        %v1750 = vpop.f32.mrb[0].mxu0
        %v1751 = vadd.f32 0.0, %v1750
        %v1752 = vpop.f32.mrb[0].mxu0
        %1753 = vmatprep.mubr.bf16.mxu0 0
        %1754 = vmatmul.mubr.bf16.gmra.mrb[0].mxu0 %v1015
        %v1755 = vpop.f32.mrb[0].mxu0
        %v1756 = vadd.f32 0.0, %v1755
        %v1757 = vpop.f32.mrb[0].mxu0
        %v1758 = vpop.f32.mrb[0].mxu0
        %v1759 = vadd.f32 0.0, %v1758
        %v1760 = vpop.f32.mrb[0].mxu0
        %1761 = vmatprep.mubr.bf16.mxu0 0
        %1762 = vmatmul.mubr.bf16.gmra.mrb[0].mxu0 %v1018
        %v1763 = vpop.f32.mrb[0].mxu0
        %v1764 = vadd.f32 0.0, %v1763
        %v1765 = vpop.f32.mrb[0].mxu0
        %v1766 = vpop.f32.mrb[0].mxu0
        %v1767 = vadd.f32 0.0, %v1766
        %v1768 = vpop.f32.mrb[0].mxu0
        %1769 = vmatprep.mubr.bf16.mxu0 0
        %1770 = vmatmul.mubr.bf16.gmra.mrb[0].mxu0 %v1021
        %v1771 = vpop.f32.mrb[0].mxu0
        %v1772 = vadd.f32 0.0, %v1771
        %v1773 = vpop.f32.mrb[0].mxu0
        %v1774 = vpop.f32.mrb[0].mxu0
        %v1775 = vadd.f32 0.0, %v1774
        %v1776 = vpop.f32.mrb[0].mxu0
        %1777 = vmatprep.mubr.bf16.mxu0 0
        %1778 = vmatmul.mubr.bf16.gmra.mrb[0].mxu0 %v1620
        %v1779 = vpop.f32.mrb[0].mxu0
        %v1780 = vadd.f32 0.0, %v1779
        %v1781 = vpop.f32.mrb[0].mxu0
        %v1782 = vpop.f32.mrb[0].mxu0
        %v1783 = vadd.f32 0.0, %v1782
        %v1784 = vpop.f32.mrb[0].mxu0
        %1785 = vdwg.mxu0
        %v1786 = vadd.f32 %v1580, %v1660
        %v1787 = vadd.f32 %v1581, %v1663
        %v1788 = vadd.f32 %v1582, %v1668
        %v1789 = vadd.f32 %v1583, %v1671
        %v1790 = vadd.f32 %v1584, %v1676
        %v1791 = vadd.f32 %v1585, %v1679
        %v1792 = vadd.f32 %v1586, %v1684
        %v1793 = vadd.f32 %v1587, %v1687
        %v1794 = vadd.f32 %v1588, %v1692
        %v1795 = vadd.f32 %v1589, %v1695
        %v1796 = vadd.f32 %v1590, %v1700
        %v1797 = vadd.f32 %v1591, %v1703
        %v1798 = vadd.f32 %v1592, %v1708
        %v1799 = vadd.f32 %v1593, %v1711
        %v1800 = vadd.f32 %v1594, %v1716
        %v1801 = vadd.f32 %v1595, %v1719
        %v1802 = vadd.f32 %v1596, %v1724
        %v1803 = vadd.f32 %v1597, %v1727
        %v1804 = vadd.f32 %v1598, %v1732
        %v1805 = vadd.f32 %v1599, %v1735
        %v1806 = vadd.f32 %v1600, %v1740
        %v1807 = vadd.f32 %v1601, %v1743
        %v1808 = vadd.f32 %v1602, %v1748
        %v1809 = vadd.f32 %v1603, %v1751
        %v1810 = vadd.f32 %v1604, %v1756
        %v1811 = vadd.f32 %v1605, %v1759
        %v1812 = vadd.f32 %v1606, %v1764
        %v1813 = vadd.f32 %v1607, %v1767
        %v1814 = vadd.f32 %v1608, %v1772
        %v1815 = vadd.f32 %v1609, %v1775
        %v1816 = vadd.f32 %v1610, %v1780
        %v1817 = vadd.f32 %v1611, %v1783
        %v1819 = vshrl.u32 %v237, 16
        %v1821 = vrot.slane %v1819, 4
        %v1822 = vshll.u32 %v237, 16
        %v1824 = vrot.slane %v1822, 5
        %v1825 = vor.u32 %v1821, %v1824
        %v1826 = vrot.slane %v1825, 4
        %v1828 = vshll.u32 %v238, 16
        %v1830 = vrot.slane %v1828, 5
        %v1831 = vsel %vm246, %v1826, %v1830
        %v1832 = vshrl.u32 %v238, 16
        %v1834 = vrot.slane %v1832, 4
        %v1835 = vor.u32 %v1834, %v1830
        %v1836 = vrot.slane %v1835, 4
        %v1838 = vshll.u32 %v239, 16
        %v1840 = vrot.slane %v1838, 5
        %v1841 = vsel %vm246, %v1836, %v1840
        %s1842 = scalar_lea.vmem %s1, 8
        %v1843 = vld [vmem:[%s1842] sm:$0x3]
        %v1844 = vunpack.c.l.b16 %v1831
        %v1845 = vunpack.c.l.b16 %v1841
        %v1846 = vpack.c.b16 %v1845, %v1844
        %v1848 = vsel %vm681, %v1846, 0
        %v1851 = vsel %vm730, %v1843, 0
        %1853 = vmatprep.subr.bf16.mxu0 0
        %1854 = vmatpush1.bf16.msra.mxu0 %v1851
        %1855 = vmatprep.subr.bf16.mxu0 0
        %1856 = vmatpush1.bf16.msra.mxu0 0
        %1857 = vmatprep.subr.bf16.mxu0 0
        %1858 = vmatpush1.bf16.msra.mxu0 0
        %1859 = vmatprep.subr.bf16.mxu0 0
        %1860 = vmatpush1.bf16.msra.mxu0 0
        %1861 = vmatprep.subr.bf16.mxu0 0
        %1862 = vmatpush1.bf16.msra.mxu0 0
        %1863 = vmatprep.subr.bf16.mxu0 0
        %1864 = vmatpush1.bf16.msra.mxu0 0
        %1865 = vmatprep.subr.bf16.mxu0 0
        %1866 = vmatpush1.bf16.msra.mxu0 0
        %1867 = vmatprep.subr.bf16.mxu0 0
        %1868 = vmatpush1.bf16.msra.mxu0 0
        %1869 = vmatprep.subr.bf16.mxu0 0
        %1870 = vmatpush1.bf16.msra.mxu0 0
        %1871 = vmatprep.subr.bf16.mxu0 0
        %1872 = vmatpush1.bf16.msra.mxu0 0
        %1873 = vmatprep.subr.bf16.mxu0 0
        %1874 = vmatpush1.bf16.msra.mxu0 0
        %1875 = vmatprep.subr.bf16.mxu0 0
        %1876 = vmatpush1.bf16.msra.mxu0 0
        %1877 = vmatprep.subr.bf16.mxu0 0
        %1878 = vmatpush1.bf16.msra.mxu0 0
        %1879 = vmatprep.subr.bf16.mxu0 0
        %1880 = vmatpush1.bf16.msra.mxu0 0
        %1881 = vmatprep.subr.bf16.mxu0 0
        %1882 = vmatpush1.bf16.msra.mxu0 0
        %1883 = vmatprep.subr.bf16.mxu0 0
        %1884 = vmatpush1.bf16.msra.mxu0 0
        %1885 = vmatprep.mubr.bf16.mxu0 0
        %1886 = vmatmul.mubr.bf16.gmra.mrb[0].mxu0 %v686
        %v1887 = vpop.f32.mrb[0].mxu0
        %v1888 = vadd.f32 0.0, %v1887
        %v1889 = vpop.f32.mrb[0].mxu0
        %v1890 = vpop.f32.mrb[0].mxu0
        %v1891 = vadd.f32 0.0, %v1890
        %v1892 = vpop.f32.mrb[0].mxu0
        %1893 = vmatprep.mubr.bf16.mxu0 0
        %1894 = vmatmul.mubr.bf16.gmra.mrb[0].mxu0 %v689
        %v1895 = vpop.f32.mrb[0].mxu0
        %v1896 = vadd.f32 0.0, %v1895
        %v1897 = vpop.f32.mrb[0].mxu0
        %v1898 = vpop.f32.mrb[0].mxu0
        %v1899 = vadd.f32 0.0, %v1898
        %v1900 = vpop.f32.mrb[0].mxu0
        %1901 = vmatprep.mubr.bf16.mxu0 0
        %1902 = vmatmul.mubr.bf16.gmra.mrb[0].mxu0 %v692
        %v1903 = vpop.f32.mrb[0].mxu0
        %v1904 = vadd.f32 0.0, %v1903
        %v1905 = vpop.f32.mrb[0].mxu0
        %v1906 = vpop.f32.mrb[0].mxu0
        %v1907 = vadd.f32 0.0, %v1906
        %v1908 = vpop.f32.mrb[0].mxu0
        %1909 = vmatprep.mubr.bf16.mxu0 0
        %1910 = vmatmul.mubr.bf16.gmra.mrb[0].mxu0 %v695
        %v1911 = vpop.f32.mrb[0].mxu0
        %v1912 = vadd.f32 0.0, %v1911
        %v1913 = vpop.f32.mrb[0].mxu0
        %v1914 = vpop.f32.mrb[0].mxu0
        %v1915 = vadd.f32 0.0, %v1914
        %v1916 = vpop.f32.mrb[0].mxu0
        %1917 = vmatprep.mubr.bf16.mxu0 0
        %1918 = vmatmul.mubr.bf16.gmra.mrb[0].mxu0 %v698
        %v1919 = vpop.f32.mrb[0].mxu0
        %v1920 = vadd.f32 0.0, %v1919
        %v1921 = vpop.f32.mrb[0].mxu0
        %v1922 = vpop.f32.mrb[0].mxu0
        %v1923 = vadd.f32 0.0, %v1922
        %v1924 = vpop.f32.mrb[0].mxu0
        %1925 = vmatprep.mubr.bf16.mxu0 0
        %1926 = vmatmul.mubr.bf16.gmra.mrb[0].mxu0 %v701
        %v1927 = vpop.f32.mrb[0].mxu0
        %v1928 = vadd.f32 0.0, %v1927
        %v1929 = vpop.f32.mrb[0].mxu0
        %v1930 = vpop.f32.mrb[0].mxu0
        %v1931 = vadd.f32 0.0, %v1930
        %v1932 = vpop.f32.mrb[0].mxu0
        %1933 = vmatprep.mubr.bf16.mxu0 0
        %1934 = vmatmul.mubr.bf16.gmra.mrb[0].mxu0 %v704
        %v1935 = vpop.f32.mrb[0].mxu0
        %v1936 = vadd.f32 0.0, %v1935
        %v1937 = vpop.f32.mrb[0].mxu0
        %v1938 = vpop.f32.mrb[0].mxu0
        %v1939 = vadd.f32 0.0, %v1938
        %v1940 = vpop.f32.mrb[0].mxu0
        %1941 = vmatprep.mubr.bf16.mxu0 0
        %1942 = vmatmul.mubr.bf16.gmra.mrb[0].mxu0 %v707
        %v1943 = vpop.f32.mrb[0].mxu0
        %v1944 = vadd.f32 0.0, %v1943
        %v1945 = vpop.f32.mrb[0].mxu0
        %v1946 = vpop.f32.mrb[0].mxu0
        %v1947 = vadd.f32 0.0, %v1946
        %v1948 = vpop.f32.mrb[0].mxu0
        %1949 = vmatprep.mubr.bf16.mxu0 0
        %1950 = vmatmul.mubr.bf16.gmra.mrb[0].mxu0 %v710
        %v1951 = vpop.f32.mrb[0].mxu0
        %v1952 = vadd.f32 0.0, %v1951
        %v1953 = vpop.f32.mrb[0].mxu0
        %v1954 = vpop.f32.mrb[0].mxu0
        %v1955 = vadd.f32 0.0, %v1954
        %v1956 = vpop.f32.mrb[0].mxu0
        %1957 = vmatprep.mubr.bf16.mxu0 0
        %1958 = vmatmul.mubr.bf16.gmra.mrb[0].mxu0 %v713
        %v1959 = vpop.f32.mrb[0].mxu0
        %v1960 = vadd.f32 0.0, %v1959
        %v1961 = vpop.f32.mrb[0].mxu0
        %v1962 = vpop.f32.mrb[0].mxu0
        %v1963 = vadd.f32 0.0, %v1962
        %v1964 = vpop.f32.mrb[0].mxu0
        %1965 = vmatprep.mubr.bf16.mxu0 0
        %1966 = vmatmul.mubr.bf16.gmra.mrb[0].mxu0 %v716
        %v1967 = vpop.f32.mrb[0].mxu0
        %v1968 = vadd.f32 0.0, %v1967
        %v1969 = vpop.f32.mrb[0].mxu0
        %v1970 = vpop.f32.mrb[0].mxu0
        %v1971 = vadd.f32 0.0, %v1970
        %v1972 = vpop.f32.mrb[0].mxu0
        %1973 = vmatprep.mubr.bf16.mxu0 0
        %1974 = vmatmul.mubr.bf16.gmra.mrb[0].mxu0 %v719
        %v1975 = vpop.f32.mrb[0].mxu0
        %v1976 = vadd.f32 0.0, %v1975
        %v1977 = vpop.f32.mrb[0].mxu0
        %v1978 = vpop.f32.mrb[0].mxu0
        %v1979 = vadd.f32 0.0, %v1978
        %v1980 = vpop.f32.mrb[0].mxu0
        %1981 = vmatprep.mubr.bf16.mxu0 0
        %1982 = vmatmul.mubr.bf16.gmra.mrb[0].mxu0 %v722
        %v1983 = vpop.f32.mrb[0].mxu0
        %v1984 = vadd.f32 0.0, %v1983
        %v1985 = vpop.f32.mrb[0].mxu0
        %v1986 = vpop.f32.mrb[0].mxu0
        %v1987 = vadd.f32 0.0, %v1986
        %v1988 = vpop.f32.mrb[0].mxu0
        %1989 = vmatprep.mubr.bf16.mxu0 0
        %1990 = vmatmul.mubr.bf16.gmra.mrb[0].mxu0 %v725
        %v1991 = vpop.f32.mrb[0].mxu0
        %v1992 = vadd.f32 0.0, %v1991
        %v1993 = vpop.f32.mrb[0].mxu0
        %v1994 = vpop.f32.mrb[0].mxu0
        %v1995 = vadd.f32 0.0, %v1994
        %v1996 = vpop.f32.mrb[0].mxu0
        %1997 = vmatprep.mubr.bf16.mxu0 0
        %1998 = vmatmul.mubr.bf16.gmra.mrb[0].mxu0 %v728
        %v1999 = vpop.f32.mrb[0].mxu0
        %v2000 = vadd.f32 0.0, %v1999
        %v2001 = vpop.f32.mrb[0].mxu0
        %v2002 = vpop.f32.mrb[0].mxu0
        %v2003 = vadd.f32 0.0, %v2002
        %v2004 = vpop.f32.mrb[0].mxu0
        %2005 = vmatprep.mubr.bf16.mxu0 0
        %2006 = vmatmul.mubr.bf16.gmra.mrb[0].mxu0 %v1848
        %v2007 = vpop.f32.mrb[0].mxu0
        %v2008 = vadd.f32 0.0, %v2007
        %v2009 = vpop.f32.mrb[0].mxu0
        %v2010 = vpop.f32.mrb[0].mxu0
        %v2011 = vadd.f32 0.0, %v2010
        %v2012 = vpop.f32.mrb[0].mxu0
        %2013 = vdwg.mxu0
        %v2014 = vadd.f32 %v1786, %v1888
        %v2015 = vadd.f32 %v1787, %v1891
        %v2016 = vadd.f32 %v1788, %v1896
        %v2017 = vadd.f32 %v1789, %v1899
        %v2018 = vadd.f32 %v1790, %v1904
        %v2019 = vadd.f32 %v1791, %v1907
        %v2020 = vadd.f32 %v1792, %v1912
        %v2021 = vadd.f32 %v1793, %v1915
        %v2022 = vadd.f32 %v1794, %v1920
        %v2023 = vadd.f32 %v1795, %v1923
        %v2024 = vadd.f32 %v1796, %v1928
        %v2025 = vadd.f32 %v1797, %v1931
        %v2026 = vadd.f32 %v1798, %v1936
        %v2027 = vadd.f32 %v1799, %v1939
        %v2028 = vadd.f32 %v1800, %v1944
        %v2029 = vadd.f32 %v1801, %v1947
        %v2030 = vadd.f32 %v1802, %v1952
        %v2031 = vadd.f32 %v1803, %v1955
        %v2032 = vadd.f32 %v1804, %v1960
        %v2033 = vadd.f32 %v1805, %v1963
        %v2034 = vadd.f32 %v1806, %v1968
        %v2035 = vadd.f32 %v1807, %v1971
        %v2036 = vadd.f32 %v1808, %v1976
        %v2037 = vadd.f32 %v1809, %v1979
        %v2038 = vadd.f32 %v1810, %v1984
        %v2039 = vadd.f32 %v1811, %v1987
        %v2040 = vadd.f32 %v1812, %v1992
        %v2041 = vadd.f32 %v1813, %v1995
        %v2042 = vadd.f32 %v1814, %v2000
        %v2043 = vadd.f32 %v1815, %v2003
        %v2044 = vadd.f32 %v1816, %v2008
        %v2045 = vadd.f32 %v1817, %v2011
        %v2047 = vrot.slane %v237, 5
        %v2048 = vrot.slane %v2047, 4
        %v2049 = vrot.slane %v238, 5
        %v2050 = vsel %vm1205, %v2048, %v2049
        %v2051 = vrot.slane %v2049, 4
        %v2052 = vrot.slane %v239, 5
        %v2053 = vsel %vm1205, %v2051, %v2052
        %s2054 = scalar_lea.vmem %s1, 10
        %v2055 = vld [vmem:[%s2054] sm:$0x3]
        %v2056 = vunpack.c.l.b16 %v2050
        %v2057 = vunpack.c.l.b16 %v2053
        %v2058 = vpack.c.b16 %v2057, %v2056
        %v2060 = vsel %vm681, %v2058, 0
        %v2063 = vsel %vm730, %v2055, 0
        %2065 = vmatprep.subr.bf16.mxu0 0
        %2066 = vmatpush1.bf16.msra.mxu0 %v2063
        %2067 = vmatprep.subr.bf16.mxu0 0
        %2068 = vmatpush1.bf16.msra.mxu0 0
        %2069 = vmatprep.subr.bf16.mxu0 0
        %2070 = vmatpush1.bf16.msra.mxu0 0
        %2071 = vmatprep.subr.bf16.mxu0 0
        %2072 = vmatpush1.bf16.msra.mxu0 0
        %2073 = vmatprep.subr.bf16.mxu0 0
        %2074 = vmatpush1.bf16.msra.mxu0 0
        %2075 = vmatprep.subr.bf16.mxu0 0
        %2076 = vmatpush1.bf16.msra.mxu0 0
        %2077 = vmatprep.subr.bf16.mxu0 0
        %2078 = vmatpush1.bf16.msra.mxu0 0
        %2079 = vmatprep.subr.bf16.mxu0 0
        %2080 = vmatpush1.bf16.msra.mxu0 0
        %2081 = vmatprep.subr.bf16.mxu0 0
        %2082 = vmatpush1.bf16.msra.mxu0 0
        %2083 = vmatprep.subr.bf16.mxu0 0
        %2084 = vmatpush1.bf16.msra.mxu0 0
        %2085 = vmatprep.subr.bf16.mxu0 0
        %2086 = vmatpush1.bf16.msra.mxu0 0
        %2087 = vmatprep.subr.bf16.mxu0 0
        %2088 = vmatpush1.bf16.msra.mxu0 0
        %2089 = vmatprep.subr.bf16.mxu0 0
        %2090 = vmatpush1.bf16.msra.mxu0 0
        %2091 = vmatprep.subr.bf16.mxu0 0
        %2092 = vmatpush1.bf16.msra.mxu0 0
        %2093 = vmatprep.subr.bf16.mxu0 0
        %2094 = vmatpush1.bf16.msra.mxu0 0
        %2095 = vmatprep.subr.bf16.mxu0 0
        %2096 = vmatpush1.bf16.msra.mxu0 0
        %2097 = vmatprep.mubr.bf16.mxu0 0
        %2098 = vmatmul.mubr.bf16.gmra.mrb[0].mxu0 %v1372
        %v2099 = vpop.f32.mrb[0].mxu0
        %v2100 = vadd.f32 0.0, %v2099
        %v2101 = vpop.f32.mrb[0].mxu0
        %v2102 = vpop.f32.mrb[0].mxu0
        %v2103 = vadd.f32 0.0, %v2102
        %v2104 = vpop.f32.mrb[0].mxu0
        %2105 = vmatprep.mubr.bf16.mxu0 0
        %2106 = vmatmul.mubr.bf16.gmra.mrb[0].mxu0 %v1375
        %v2107 = vpop.f32.mrb[0].mxu0
        %v2108 = vadd.f32 0.0, %v2107
        %v2109 = vpop.f32.mrb[0].mxu0
        %v2110 = vpop.f32.mrb[0].mxu0
        %v2111 = vadd.f32 0.0, %v2110
        %v2112 = vpop.f32.mrb[0].mxu0
        %2113 = vmatprep.mubr.bf16.mxu0 0
        %2114 = vmatmul.mubr.bf16.gmra.mrb[0].mxu0 %v1378
        %v2115 = vpop.f32.mrb[0].mxu0
        %v2116 = vadd.f32 0.0, %v2115
        %v2117 = vpop.f32.mrb[0].mxu0
        %v2118 = vpop.f32.mrb[0].mxu0
        %v2119 = vadd.f32 0.0, %v2118
        %v2120 = vpop.f32.mrb[0].mxu0
        %2121 = vmatprep.mubr.bf16.mxu0 0
        %2122 = vmatmul.mubr.bf16.gmra.mrb[0].mxu0 %v1381
        %v2123 = vpop.f32.mrb[0].mxu0
        %v2124 = vadd.f32 0.0, %v2123
        %v2125 = vpop.f32.mrb[0].mxu0
        %v2126 = vpop.f32.mrb[0].mxu0
        %v2127 = vadd.f32 0.0, %v2126
        %v2128 = vpop.f32.mrb[0].mxu0
        %2129 = vmatprep.mubr.bf16.mxu0 0
        %2130 = vmatmul.mubr.bf16.gmra.mrb[0].mxu0 %v1384
        %v2131 = vpop.f32.mrb[0].mxu0
        %v2132 = vadd.f32 0.0, %v2131
        %v2133 = vpop.f32.mrb[0].mxu0
        %v2134 = vpop.f32.mrb[0].mxu0
        %v2135 = vadd.f32 0.0, %v2134
        %v2136 = vpop.f32.mrb[0].mxu0
        %2137 = vmatprep.mubr.bf16.mxu0 0
        %2138 = vmatmul.mubr.bf16.gmra.mrb[0].mxu0 %v1387
        %v2139 = vpop.f32.mrb[0].mxu0
        %v2140 = vadd.f32 0.0, %v2139
        %v2141 = vpop.f32.mrb[0].mxu0
        %v2142 = vpop.f32.mrb[0].mxu0
        %v2143 = vadd.f32 0.0, %v2142
        %v2144 = vpop.f32.mrb[0].mxu0
        %2145 = vmatprep.mubr.bf16.mxu0 0
        %2146 = vmatmul.mubr.bf16.gmra.mrb[0].mxu0 %v1390
        %v2147 = vpop.f32.mrb[0].mxu0
        %v2148 = vadd.f32 0.0, %v2147
        %v2149 = vpop.f32.mrb[0].mxu0
        %v2150 = vpop.f32.mrb[0].mxu0
        %v2151 = vadd.f32 0.0, %v2150
        %v2152 = vpop.f32.mrb[0].mxu0
        %2153 = vmatprep.mubr.bf16.mxu0 0
        %2154 = vmatmul.mubr.bf16.gmra.mrb[0].mxu0 %v1393
        %v2155 = vpop.f32.mrb[0].mxu0
        %v2156 = vadd.f32 0.0, %v2155
        %v2157 = vpop.f32.mrb[0].mxu0
        %v2158 = vpop.f32.mrb[0].mxu0
        %v2159 = vadd.f32 0.0, %v2158
        %v2160 = vpop.f32.mrb[0].mxu0
        %2161 = vmatprep.mubr.bf16.mxu0 0
        %2162 = vmatmul.mubr.bf16.gmra.mrb[0].mxu0 %v1396
        %v2163 = vpop.f32.mrb[0].mxu0
        %v2164 = vadd.f32 0.0, %v2163
        %v2165 = vpop.f32.mrb[0].mxu0
        %v2166 = vpop.f32.mrb[0].mxu0
        %v2167 = vadd.f32 0.0, %v2166
        %v2168 = vpop.f32.mrb[0].mxu0
        %2169 = vmatprep.mubr.bf16.mxu0 0
        %2170 = vmatmul.mubr.bf16.gmra.mrb[0].mxu0 %v1399
        %v2171 = vpop.f32.mrb[0].mxu0
        %v2172 = vadd.f32 0.0, %v2171
        %v2173 = vpop.f32.mrb[0].mxu0
        %v2174 = vpop.f32.mrb[0].mxu0
        %v2175 = vadd.f32 0.0, %v2174
        %v2176 = vpop.f32.mrb[0].mxu0
        %2177 = vmatprep.mubr.bf16.mxu0 0
        %2178 = vmatmul.mubr.bf16.gmra.mrb[0].mxu0 %v1402
        %v2179 = vpop.f32.mrb[0].mxu0
        %v2180 = vadd.f32 0.0, %v2179
        %v2181 = vpop.f32.mrb[0].mxu0
        %v2182 = vpop.f32.mrb[0].mxu0
        %v2183 = vadd.f32 0.0, %v2182
        %v2184 = vpop.f32.mrb[0].mxu0
        %2185 = vmatprep.mubr.bf16.mxu0 0
        %2186 = vmatmul.mubr.bf16.gmra.mrb[0].mxu0 %v1405
        %v2187 = vpop.f32.mrb[0].mxu0
        %v2188 = vadd.f32 0.0, %v2187
        %v2189 = vpop.f32.mrb[0].mxu0
        %v2190 = vpop.f32.mrb[0].mxu0
        %v2191 = vadd.f32 0.0, %v2190
        %v2192 = vpop.f32.mrb[0].mxu0
        %2193 = vmatprep.mubr.bf16.mxu0 0
        %2194 = vmatmul.mubr.bf16.gmra.mrb[0].mxu0 %v1408
        %v2195 = vpop.f32.mrb[0].mxu0
        %v2196 = vadd.f32 0.0, %v2195
        %v2197 = vpop.f32.mrb[0].mxu0
        %v2198 = vpop.f32.mrb[0].mxu0
        %v2199 = vadd.f32 0.0, %v2198
        %v2200 = vpop.f32.mrb[0].mxu0
        %2201 = vmatprep.mubr.bf16.mxu0 0
        %2202 = vmatmul.mubr.bf16.gmra.mrb[0].mxu0 %v1411
        %v2203 = vpop.f32.mrb[0].mxu0
        %v2204 = vadd.f32 0.0, %v2203
        %v2205 = vpop.f32.mrb[0].mxu0
        %v2206 = vpop.f32.mrb[0].mxu0
        %v2207 = vadd.f32 0.0, %v2206
        %v2208 = vpop.f32.mrb[0].mxu0
        %2209 = vmatprep.mubr.bf16.mxu0 0
        %2210 = vmatmul.mubr.bf16.gmra.mrb[0].mxu0 %v1414
        %v2211 = vpop.f32.mrb[0].mxu0
        %v2212 = vadd.f32 0.0, %v2211
        %v2213 = vpop.f32.mrb[0].mxu0
        %v2214 = vpop.f32.mrb[0].mxu0
        %v2215 = vadd.f32 0.0, %v2214
        %v2216 = vpop.f32.mrb[0].mxu0
        %2217 = vmatprep.mubr.bf16.mxu0 0
        %2218 = vmatmul.mubr.bf16.gmra.mrb[0].mxu0 %v2060
        %v2219 = vpop.f32.mrb[0].mxu0
        %v2220 = vadd.f32 0.0, %v2219
        %v2221 = vpop.f32.mrb[0].mxu0
        %v2222 = vpop.f32.mrb[0].mxu0
        %v2223 = vadd.f32 0.0, %v2222
        %v2224 = vpop.f32.mrb[0].mxu0
        %2225 = vdwg.mxu0
        %v2226 = vadd.f32 %v2014, %v2100
        %v2227 = vadd.f32 %v2015, %v2103
        %v2228 = vadd.f32 %v2016, %v2108
        %v2229 = vadd.f32 %v2017, %v2111
        %v2230 = vadd.f32 %v2018, %v2116
        %v2231 = vadd.f32 %v2019, %v2119
        %v2232 = vadd.f32 %v2020, %v2124
        %v2233 = vadd.f32 %v2021, %v2127
        %v2234 = vadd.f32 %v2022, %v2132
        %v2235 = vadd.f32 %v2023, %v2135
        %v2236 = vadd.f32 %v2024, %v2140
        %v2237 = vadd.f32 %v2025, %v2143
        %v2238 = vadd.f32 %v2026, %v2148
        %v2239 = vadd.f32 %v2027, %v2151
        %v2240 = vadd.f32 %v2028, %v2156
        %v2241 = vadd.f32 %v2029, %v2159
        %v2242 = vadd.f32 %v2030, %v2164
        %v2243 = vadd.f32 %v2031, %v2167
        %v2244 = vadd.f32 %v2032, %v2172
        %v2245 = vadd.f32 %v2033, %v2175
        %v2246 = vadd.f32 %v2034, %v2180
        %v2247 = vadd.f32 %v2035, %v2183
        %v2248 = vadd.f32 %v2036, %v2188
        %v2249 = vadd.f32 %v2037, %v2191
        %v2250 = vadd.f32 %v2038, %v2196
        %v2251 = vadd.f32 %v2039, %v2199
        %v2252 = vadd.f32 %v2040, %v2204
        %v2253 = vadd.f32 %v2041, %v2207
        %v2254 = vadd.f32 %v2042, %v2212
        %v2255 = vadd.f32 %v2043, %v2215
        %v2256 = vadd.f32 %v2044, %v2220
        %v2257 = vadd.f32 %v2045, %v2223
        %s2258 = scalar_lea.vmem %s1, 12
        %v2259 = vld [vmem:[%s2258] sm:$0x3]
        %v2262 = vunpack.c.l.b16 %v240
        %v2263 = vunpack.c.l.b16 %v241
        %v2264 = vpack.c.b16 %v2263, %v2262
        %v2266 = vsel %vm681, %v2264, 0
        %v2269 = vsel %vm730, %v2259, 0
        %2271 = vmatprep.subr.bf16.mxu0 0
        %2272 = vmatpush1.bf16.msra.mxu0 %v2269
        %2273 = vmatprep.subr.bf16.mxu0 0
        %2274 = vmatpush1.bf16.msra.mxu0 0
        %2275 = vmatprep.subr.bf16.mxu0 0
        %2276 = vmatpush1.bf16.msra.mxu0 0
        %2277 = vmatprep.subr.bf16.mxu0 0
        %2278 = vmatpush1.bf16.msra.mxu0 0
        %2279 = vmatprep.subr.bf16.mxu0 0
        %2280 = vmatpush1.bf16.msra.mxu0 0
        %2281 = vmatprep.subr.bf16.mxu0 0
        %2282 = vmatpush1.bf16.msra.mxu0 0
        %2283 = vmatprep.subr.bf16.mxu0 0
        %2284 = vmatpush1.bf16.msra.mxu0 0
        %2285 = vmatprep.subr.bf16.mxu0 0
        %2286 = vmatpush1.bf16.msra.mxu0 0
        %2287 = vmatprep.subr.bf16.mxu0 0
        %2288 = vmatpush1.bf16.msra.mxu0 0
        %2289 = vmatprep.subr.bf16.mxu0 0
        %2290 = vmatpush1.bf16.msra.mxu0 0
        %2291 = vmatprep.subr.bf16.mxu0 0
        %2292 = vmatpush1.bf16.msra.mxu0 0
        %2293 = vmatprep.subr.bf16.mxu0 0
        %2294 = vmatpush1.bf16.msra.mxu0 0
        %2295 = vmatprep.subr.bf16.mxu0 0
        %2296 = vmatpush1.bf16.msra.mxu0 0
        %2297 = vmatprep.subr.bf16.mxu0 0
        %2298 = vmatpush1.bf16.msra.mxu0 0
        %2299 = vmatprep.subr.bf16.mxu0 0
        %2300 = vmatpush1.bf16.msra.mxu0 0
        %2301 = vmatprep.subr.bf16.mxu0 0
        %2302 = vmatpush1.bf16.msra.mxu0 0
        %2303 = vmatprep.mubr.bf16.mxu0 0
        %2304 = vmatmul.mubr.bf16.gmra.mrb[0].mxu0 %v982
        %v2305 = vpop.f32.mrb[0].mxu0
        %v2306 = vadd.f32 0.0, %v2305
        %v2307 = vpop.f32.mrb[0].mxu0
        %v2308 = vpop.f32.mrb[0].mxu0
        %v2309 = vadd.f32 0.0, %v2308
        %v2310 = vpop.f32.mrb[0].mxu0
        %2311 = vmatprep.mubr.bf16.mxu0 0
        %2312 = vmatmul.mubr.bf16.gmra.mrb[0].mxu0 %v985
        %v2313 = vpop.f32.mrb[0].mxu0
        %v2314 = vadd.f32 0.0, %v2313
        %v2315 = vpop.f32.mrb[0].mxu0
        %v2316 = vpop.f32.mrb[0].mxu0
        %v2317 = vadd.f32 0.0, %v2316
        %v2318 = vpop.f32.mrb[0].mxu0
        %2319 = vmatprep.mubr.bf16.mxu0 0
        %2320 = vmatmul.mubr.bf16.gmra.mrb[0].mxu0 %v988
        %v2321 = vpop.f32.mrb[0].mxu0
        %v2322 = vadd.f32 0.0, %v2321
        %v2323 = vpop.f32.mrb[0].mxu0
        %v2324 = vpop.f32.mrb[0].mxu0
        %v2325 = vadd.f32 0.0, %v2324
        %v2326 = vpop.f32.mrb[0].mxu0
        %2327 = vmatprep.mubr.bf16.mxu0 0
        %2328 = vmatmul.mubr.bf16.gmra.mrb[0].mxu0 %v991
        %v2329 = vpop.f32.mrb[0].mxu0
        %v2330 = vadd.f32 0.0, %v2329
        %v2331 = vpop.f32.mrb[0].mxu0
        %v2332 = vpop.f32.mrb[0].mxu0
        %v2333 = vadd.f32 0.0, %v2332
        %v2334 = vpop.f32.mrb[0].mxu0
        %2335 = vmatprep.mubr.bf16.mxu0 0
        %2336 = vmatmul.mubr.bf16.gmra.mrb[0].mxu0 %v994
        %v2337 = vpop.f32.mrb[0].mxu0
        %v2338 = vadd.f32 0.0, %v2337
        %v2339 = vpop.f32.mrb[0].mxu0
        %v2340 = vpop.f32.mrb[0].mxu0
        %v2341 = vadd.f32 0.0, %v2340
        %v2342 = vpop.f32.mrb[0].mxu0
        %2343 = vmatprep.mubr.bf16.mxu0 0
        %2344 = vmatmul.mubr.bf16.gmra.mrb[0].mxu0 %v997
        %v2345 = vpop.f32.mrb[0].mxu0
        %v2346 = vadd.f32 0.0, %v2345
        %v2347 = vpop.f32.mrb[0].mxu0
        %v2348 = vpop.f32.mrb[0].mxu0
        %v2349 = vadd.f32 0.0, %v2348
        %v2350 = vpop.f32.mrb[0].mxu0
        %2351 = vmatprep.mubr.bf16.mxu0 0
        %2352 = vmatmul.mubr.bf16.gmra.mrb[0].mxu0 %v1000
        %v2353 = vpop.f32.mrb[0].mxu0
        %v2354 = vadd.f32 0.0, %v2353
        %v2355 = vpop.f32.mrb[0].mxu0
        %v2356 = vpop.f32.mrb[0].mxu0
        %v2357 = vadd.f32 0.0, %v2356
        %v2358 = vpop.f32.mrb[0].mxu0
        %2359 = vmatprep.mubr.bf16.mxu0 0
        %2360 = vmatmul.mubr.bf16.gmra.mrb[0].mxu0 %v1003
        %v2361 = vpop.f32.mrb[0].mxu0
        %v2362 = vadd.f32 0.0, %v2361
        %v2363 = vpop.f32.mrb[0].mxu0
        %v2364 = vpop.f32.mrb[0].mxu0
        %v2365 = vadd.f32 0.0, %v2364
        %v2366 = vpop.f32.mrb[0].mxu0
        %2367 = vmatprep.mubr.bf16.mxu0 0
        %2368 = vmatmul.mubr.bf16.gmra.mrb[0].mxu0 %v1006
        %v2369 = vpop.f32.mrb[0].mxu0
        %v2370 = vadd.f32 0.0, %v2369
        %v2371 = vpop.f32.mrb[0].mxu0
        %v2372 = vpop.f32.mrb[0].mxu0
        %v2373 = vadd.f32 0.0, %v2372
        %v2374 = vpop.f32.mrb[0].mxu0
        %2375 = vmatprep.mubr.bf16.mxu0 0
        %2376 = vmatmul.mubr.bf16.gmra.mrb[0].mxu0 %v1009
        %v2377 = vpop.f32.mrb[0].mxu0
        %v2378 = vadd.f32 0.0, %v2377
        %v2379 = vpop.f32.mrb[0].mxu0
        %v2380 = vpop.f32.mrb[0].mxu0
        %v2381 = vadd.f32 0.0, %v2380
        %v2382 = vpop.f32.mrb[0].mxu0
        %2383 = vmatprep.mubr.bf16.mxu0 0
        %2384 = vmatmul.mubr.bf16.gmra.mrb[0].mxu0 %v1012
        %v2385 = vpop.f32.mrb[0].mxu0
        %v2386 = vadd.f32 0.0, %v2385
        %v2387 = vpop.f32.mrb[0].mxu0
        %v2388 = vpop.f32.mrb[0].mxu0
        %v2389 = vadd.f32 0.0, %v2388
        %v2390 = vpop.f32.mrb[0].mxu0
        %2391 = vmatprep.mubr.bf16.mxu0 0
        %2392 = vmatmul.mubr.bf16.gmra.mrb[0].mxu0 %v1015
        %v2393 = vpop.f32.mrb[0].mxu0
        %v2394 = vadd.f32 0.0, %v2393
        %v2395 = vpop.f32.mrb[0].mxu0
        %v2396 = vpop.f32.mrb[0].mxu0
        %v2397 = vadd.f32 0.0, %v2396
        %v2398 = vpop.f32.mrb[0].mxu0
        %2399 = vmatprep.mubr.bf16.mxu0 0
        %2400 = vmatmul.mubr.bf16.gmra.mrb[0].mxu0 %v1018
        %v2401 = vpop.f32.mrb[0].mxu0
        %v2402 = vadd.f32 0.0, %v2401
        %v2403 = vpop.f32.mrb[0].mxu0
        %v2404 = vpop.f32.mrb[0].mxu0
        %v2405 = vadd.f32 0.0, %v2404
        %v2406 = vpop.f32.mrb[0].mxu0
        %2407 = vmatprep.mubr.bf16.mxu0 0
        %2408 = vmatmul.mubr.bf16.gmra.mrb[0].mxu0 %v1021
        %v2409 = vpop.f32.mrb[0].mxu0
        %v2410 = vadd.f32 0.0, %v2409
        %v2411 = vpop.f32.mrb[0].mxu0
        %v2412 = vpop.f32.mrb[0].mxu0
        %v2413 = vadd.f32 0.0, %v2412
        %v2414 = vpop.f32.mrb[0].mxu0
        %2415 = vmatprep.mubr.bf16.mxu0 0
        %2416 = vmatmul.mubr.bf16.gmra.mrb[0].mxu0 %v1620
        %v2417 = vpop.f32.mrb[0].mxu0
        %v2418 = vadd.f32 0.0, %v2417
        %v2419 = vpop.f32.mrb[0].mxu0
        %v2420 = vpop.f32.mrb[0].mxu0
        %v2421 = vadd.f32 0.0, %v2420
        %v2422 = vpop.f32.mrb[0].mxu0
        %2423 = vmatprep.mubr.bf16.mxu0 0
        %2424 = vmatmul.mubr.bf16.gmra.mrb[0].mxu0 %v2266
        %v2425 = vpop.f32.mrb[0].mxu0
        %v2426 = vadd.f32 0.0, %v2425
        %v2427 = vpop.f32.mrb[0].mxu0
        %v2428 = vpop.f32.mrb[0].mxu0
        %v2429 = vadd.f32 0.0, %v2428
        %v2430 = vpop.f32.mrb[0].mxu0
        %2431 = vdwg.mxu0
        %v2432 = vadd.f32 %v2226, %v2306
        %v2433 = vadd.f32 %v2227, %v2309
        %v2434 = vadd.f32 %v2228, %v2314
        %v2435 = vadd.f32 %v2229, %v2317
        %v2436 = vadd.f32 %v2230, %v2322
        %v2437 = vadd.f32 %v2231, %v2325
        %v2438 = vadd.f32 %v2232, %v2330
        %v2439 = vadd.f32 %v2233, %v2333
        %v2440 = vadd.f32 %v2234, %v2338
        %v2441 = vadd.f32 %v2235, %v2341
        %v2442 = vadd.f32 %v2236, %v2346
        %v2443 = vadd.f32 %v2237, %v2349
        %v2444 = vadd.f32 %v2238, %v2354
        %v2445 = vadd.f32 %v2239, %v2357
        %v2446 = vadd.f32 %v2240, %v2362
        %v2447 = vadd.f32 %v2241, %v2365
        %v2448 = vadd.f32 %v2242, %v2370
        %v2449 = vadd.f32 %v2243, %v2373
        %v2450 = vadd.f32 %v2244, %v2378
        %v2451 = vadd.f32 %v2245, %v2381
        %v2452 = vadd.f32 %v2246, %v2386
        %v2453 = vadd.f32 %v2247, %v2389
        %v2454 = vadd.f32 %v2248, %v2394
        %v2455 = vadd.f32 %v2249, %v2397
        %v2456 = vadd.f32 %v2250, %v2402
        %v2457 = vadd.f32 %v2251, %v2405
        %v2458 = vadd.f32 %v2252, %v2410
        %v2459 = vadd.f32 %v2253, %v2413
        %v2460 = vadd.f32 %v2254, %v2418
        %v2461 = vadd.f32 %v2255, %v2421
        %v2462 = vadd.f32 %v2256, %v2426
        %v2463 = vadd.f32 %v2257, %v2429
        %v2465 = vshrl.u32 %v240, 16
        %v2467 = vrot.slane %v2465, 4
        %v2468 = vshll.u32 %v240, 16
        %v2470 = vrot.slane %v2468, 5
        %v2471 = vor.u32 %v2467, %v2470
        %v2472 = vrot.slane %v2471, 4
        %v2474 = vshll.u32 %v241, 16
        %v2476 = vrot.slane %v2474, 5
        %v2477 = vsel %vm246, %v2472, %v2476
        %v2478 = vshrl.u32 %v241, 16
        %v2480 = vrot.slane %v2478, 4
        %v2481 = vor.u32 %v2480, %v2476
        %v2482 = vrot.slane %v2481, 4
        %v2484 = vshll.u32 %v242, 16
        %v2486 = vrot.slane %v2484, 5
        %v2487 = vsel %vm246, %v2482, %v2486
        %s2488 = scalar_lea.vmem %s1, 14
        %v2489 = vld [vmem:[%s2488] sm:$0x3]
        %v2490 = vunpack.c.l.b16 %v2477
        %v2491 = vunpack.c.l.b16 %v2487
        %v2492 = vpack.c.b16 %v2491, %v2490
        %v2494 = vsel %vm681, %v2492, 0
        %v2497 = vsel %vm730, %v2489, 0
        %2499 = vmatprep.subr.bf16.mxu0 0
        %2500 = vmatpush1.bf16.msra.mxu0 %v2497
        %2501 = vmatprep.subr.bf16.mxu0 0
        %2502 = vmatpush1.bf16.msra.mxu0 0
        %2503 = vmatprep.subr.bf16.mxu0 0
        %2504 = vmatpush1.bf16.msra.mxu0 0
        %2505 = vmatprep.subr.bf16.mxu0 0
        %2506 = vmatpush1.bf16.msra.mxu0 0
        %2507 = vmatprep.subr.bf16.mxu0 0
        %2508 = vmatpush1.bf16.msra.mxu0 0
        %2509 = vmatprep.subr.bf16.mxu0 0
        %2510 = vmatpush1.bf16.msra.mxu0 0
        %2511 = vmatprep.subr.bf16.mxu0 0
        %2512 = vmatpush1.bf16.msra.mxu0 0
        %2513 = vmatprep.subr.bf16.mxu0 0
        %2514 = vmatpush1.bf16.msra.mxu0 0
        %2515 = vmatprep.subr.bf16.mxu0 0
        %2516 = vmatpush1.bf16.msra.mxu0 0
        %2517 = vmatprep.subr.bf16.mxu0 0
        %2518 = vmatpush1.bf16.msra.mxu0 0
        %2519 = vmatprep.subr.bf16.mxu0 0
        %2520 = vmatpush1.bf16.msra.mxu0 0
        %2521 = vmatprep.subr.bf16.mxu0 0
        %2522 = vmatpush1.bf16.msra.mxu0 0
        %2523 = vmatprep.subr.bf16.mxu0 0
        %2524 = vmatpush1.bf16.msra.mxu0 0
        %2525 = vmatprep.subr.bf16.mxu0 0
        %2526 = vmatpush1.bf16.msra.mxu0 0
        %2527 = vmatprep.subr.bf16.mxu0 0
        %2528 = vmatpush1.bf16.msra.mxu0 0
        %2529 = vmatprep.subr.bf16.mxu0 0
        %2530 = vmatpush1.bf16.msra.mxu0 0
        %2531 = vmatprep.mubr.bf16.mxu0 0
        %2532 = vmatmul.mubr.bf16.gmra.mrb[0].mxu0 %v689
        %v2533 = vpop.f32.mrb[0].mxu0
        %v2534 = vadd.f32 0.0, %v2533
        %v2535 = vpop.f32.mrb[0].mxu0
        %v2536 = vpop.f32.mrb[0].mxu0
        %v2537 = vadd.f32 0.0, %v2536
        %v2538 = vpop.f32.mrb[0].mxu0
        %2539 = vmatprep.mubr.bf16.mxu0 0
        %2540 = vmatmul.mubr.bf16.gmra.mrb[0].mxu0 %v692
        %v2541 = vpop.f32.mrb[0].mxu0
        %v2542 = vadd.f32 0.0, %v2541
        %v2543 = vpop.f32.mrb[0].mxu0
        %v2544 = vpop.f32.mrb[0].mxu0
        %v2545 = vadd.f32 0.0, %v2544
        %v2546 = vpop.f32.mrb[0].mxu0
        %2547 = vmatprep.mubr.bf16.mxu0 0
        %2548 = vmatmul.mubr.bf16.gmra.mrb[0].mxu0 %v695
        %v2549 = vpop.f32.mrb[0].mxu0
        %v2550 = vadd.f32 0.0, %v2549
        %v2551 = vpop.f32.mrb[0].mxu0
        %v2552 = vpop.f32.mrb[0].mxu0
        %v2553 = vadd.f32 0.0, %v2552
        %v2554 = vpop.f32.mrb[0].mxu0
        %2555 = vmatprep.mubr.bf16.mxu0 0
        %2556 = vmatmul.mubr.bf16.gmra.mrb[0].mxu0 %v698
        %v2557 = vpop.f32.mrb[0].mxu0
        %v2558 = vadd.f32 0.0, %v2557
        %v2559 = vpop.f32.mrb[0].mxu0
        %v2560 = vpop.f32.mrb[0].mxu0
        %v2561 = vadd.f32 0.0, %v2560
        %v2562 = vpop.f32.mrb[0].mxu0
        %2563 = vmatprep.mubr.bf16.mxu0 0
        %2564 = vmatmul.mubr.bf16.gmra.mrb[0].mxu0 %v701
        %v2565 = vpop.f32.mrb[0].mxu0
        %v2566 = vadd.f32 0.0, %v2565
        %v2567 = vpop.f32.mrb[0].mxu0
        %v2568 = vpop.f32.mrb[0].mxu0
        %v2569 = vadd.f32 0.0, %v2568
        %v2570 = vpop.f32.mrb[0].mxu0
        %2571 = vmatprep.mubr.bf16.mxu0 0
        %2572 = vmatmul.mubr.bf16.gmra.mrb[0].mxu0 %v704
        %v2573 = vpop.f32.mrb[0].mxu0
        %v2574 = vadd.f32 0.0, %v2573
        %v2575 = vpop.f32.mrb[0].mxu0
        %v2576 = vpop.f32.mrb[0].mxu0
        %v2577 = vadd.f32 0.0, %v2576
        %v2578 = vpop.f32.mrb[0].mxu0
        %2579 = vmatprep.mubr.bf16.mxu0 0
        %2580 = vmatmul.mubr.bf16.gmra.mrb[0].mxu0 %v707
        %v2581 = vpop.f32.mrb[0].mxu0
        %v2582 = vadd.f32 0.0, %v2581
        %v2583 = vpop.f32.mrb[0].mxu0
        %v2584 = vpop.f32.mrb[0].mxu0
        %v2585 = vadd.f32 0.0, %v2584
        %v2586 = vpop.f32.mrb[0].mxu0
        %2587 = vmatprep.mubr.bf16.mxu0 0
        %2588 = vmatmul.mubr.bf16.gmra.mrb[0].mxu0 %v710
        %v2589 = vpop.f32.mrb[0].mxu0
        %v2590 = vadd.f32 0.0, %v2589
        %v2591 = vpop.f32.mrb[0].mxu0
        %v2592 = vpop.f32.mrb[0].mxu0
        %v2593 = vadd.f32 0.0, %v2592
        %v2594 = vpop.f32.mrb[0].mxu0
        %2595 = vmatprep.mubr.bf16.mxu0 0
        %2596 = vmatmul.mubr.bf16.gmra.mrb[0].mxu0 %v713
        %v2597 = vpop.f32.mrb[0].mxu0
        %v2598 = vadd.f32 0.0, %v2597
        %v2599 = vpop.f32.mrb[0].mxu0
        %v2600 = vpop.f32.mrb[0].mxu0
        %v2601 = vadd.f32 0.0, %v2600
        %v2602 = vpop.f32.mrb[0].mxu0
        %2603 = vmatprep.mubr.bf16.mxu0 0
        %2604 = vmatmul.mubr.bf16.gmra.mrb[0].mxu0 %v716
        %v2605 = vpop.f32.mrb[0].mxu0
        %v2606 = vadd.f32 0.0, %v2605
        %v2607 = vpop.f32.mrb[0].mxu0
        %v2608 = vpop.f32.mrb[0].mxu0
        %v2609 = vadd.f32 0.0, %v2608
        %v2610 = vpop.f32.mrb[0].mxu0
        %2611 = vmatprep.mubr.bf16.mxu0 0
        %2612 = vmatmul.mubr.bf16.gmra.mrb[0].mxu0 %v719
        %v2613 = vpop.f32.mrb[0].mxu0
        %v2614 = vadd.f32 0.0, %v2613
        %v2615 = vpop.f32.mrb[0].mxu0
        %v2616 = vpop.f32.mrb[0].mxu0
        %v2617 = vadd.f32 0.0, %v2616
        %v2618 = vpop.f32.mrb[0].mxu0
        %2619 = vmatprep.mubr.bf16.mxu0 0
        %2620 = vmatmul.mubr.bf16.gmra.mrb[0].mxu0 %v722
        %v2621 = vpop.f32.mrb[0].mxu0
        %v2622 = vadd.f32 0.0, %v2621
        %v2623 = vpop.f32.mrb[0].mxu0
        %v2624 = vpop.f32.mrb[0].mxu0
        %v2625 = vadd.f32 0.0, %v2624
        %v2626 = vpop.f32.mrb[0].mxu0
        %2627 = vmatprep.mubr.bf16.mxu0 0
        %2628 = vmatmul.mubr.bf16.gmra.mrb[0].mxu0 %v725
        %v2629 = vpop.f32.mrb[0].mxu0
        %v2630 = vadd.f32 0.0, %v2629
        %v2631 = vpop.f32.mrb[0].mxu0
        %v2632 = vpop.f32.mrb[0].mxu0
        %v2633 = vadd.f32 0.0, %v2632
        %v2634 = vpop.f32.mrb[0].mxu0
        %2635 = vmatprep.mubr.bf16.mxu0 0
        %2636 = vmatmul.mubr.bf16.gmra.mrb[0].mxu0 %v728
        %v2637 = vpop.f32.mrb[0].mxu0
        %v2638 = vadd.f32 0.0, %v2637
        %v2639 = vpop.f32.mrb[0].mxu0
        %v2640 = vpop.f32.mrb[0].mxu0
        %v2641 = vadd.f32 0.0, %v2640
        %v2642 = vpop.f32.mrb[0].mxu0
        %2643 = vmatprep.mubr.bf16.mxu0 0
        %2644 = vmatmul.mubr.bf16.gmra.mrb[0].mxu0 %v1848
        %v2645 = vpop.f32.mrb[0].mxu0
        %v2646 = vadd.f32 0.0, %v2645
        %v2647 = vpop.f32.mrb[0].mxu0
        %v2648 = vpop.f32.mrb[0].mxu0
        %v2649 = vadd.f32 0.0, %v2648
        %v2650 = vpop.f32.mrb[0].mxu0
        %2651 = vmatprep.mubr.bf16.mxu0 0
        %2652 = vmatmul.mubr.bf16.gmra.mrb[0].mxu0 %v2494
        %v2653 = vpop.f32.mrb[0].mxu0
        %v2654 = vadd.f32 0.0, %v2653
        %v2655 = vpop.f32.mrb[0].mxu0
        %v2656 = vpop.f32.mrb[0].mxu0
        %v2657 = vadd.f32 0.0, %v2656
        %v2658 = vpop.f32.mrb[0].mxu0
        %2659 = vdwg.mxu0
        %v2660 = vadd.f32 %v2432, %v2534
        %v2661 = vadd.f32 %v2433, %v2537
        %v2662 = vadd.f32 %v2434, %v2542
        %v2663 = vadd.f32 %v2435, %v2545
        %v2664 = vadd.f32 %v2436, %v2550
        %v2665 = vadd.f32 %v2437, %v2553
        %v2666 = vadd.f32 %v2438, %v2558
        %v2667 = vadd.f32 %v2439, %v2561
        %v2668 = vadd.f32 %v2440, %v2566
        %v2669 = vadd.f32 %v2441, %v2569
        %v2670 = vadd.f32 %v2442, %v2574
        %v2671 = vadd.f32 %v2443, %v2577
        %v2672 = vadd.f32 %v2444, %v2582
        %v2673 = vadd.f32 %v2445, %v2585
        %v2674 = vadd.f32 %v2446, %v2590
        %v2675 = vadd.f32 %v2447, %v2593
        %v2676 = vadd.f32 %v2448, %v2598
        %v2677 = vadd.f32 %v2449, %v2601
        %v2678 = vadd.f32 %v2450, %v2606
        %v2679 = vadd.f32 %v2451, %v2609
        %v2680 = vadd.f32 %v2452, %v2614
        %v2681 = vadd.f32 %v2453, %v2617
        %v2682 = vadd.f32 %v2454, %v2622
        %v2683 = vadd.f32 %v2455, %v2625
        %v2684 = vadd.f32 %v2456, %v2630
        %v2685 = vadd.f32 %v2457, %v2633
        %v2686 = vadd.f32 %v2458, %v2638
        %v2687 = vadd.f32 %v2459, %v2641
        %v2688 = vadd.f32 %v2460, %v2646
        %v2689 = vadd.f32 %v2461, %v2649
        %v2690 = vadd.f32 %v2462, %v2654
        %v2691 = vadd.f32 %v2463, %v2657
        %v2693 = vrot.slane %v240, 5
        %v2694 = vrot.slane %v2693, 4
        %v2695 = vrot.slane %v241, 5
        %v2696 = vsel %vm1205, %v2694, %v2695
        %v2697 = vrot.slane %v2695, 4
        %v2698 = vrot.slane %v242, 5
        %v2699 = vsel %vm1205, %v2697, %v2698
        %s2700 = scalar_lea.vmem %s1, 16
        %v2701 = vld [vmem:[%s2700] sm:$0x3]
        %v2702 = vunpack.c.l.b16 %v2696
        %v2703 = vunpack.c.l.b16 %v2699
        %v2704 = vpack.c.b16 %v2703, %v2702
        %v2706 = vsel %vm681, %v2704, 0
        %v2709 = vsel %vm730, %v2701, 0
        %2711 = vmatprep.subr.bf16.mxu0 0
        %2712 = vmatpush1.bf16.msra.mxu0 %v2709
        %2713 = vmatprep.subr.bf16.mxu0 0
        %2714 = vmatpush1.bf16.msra.mxu0 0
        %2715 = vmatprep.subr.bf16.mxu0 0
        %2716 = vmatpush1.bf16.msra.mxu0 0
        %2717 = vmatprep.subr.bf16.mxu0 0
        %2718 = vmatpush1.bf16.msra.mxu0 0
        %2719 = vmatprep.subr.bf16.mxu0 0
        %2720 = vmatpush1.bf16.msra.mxu0 0
        %2721 = vmatprep.subr.bf16.mxu0 0
        %2722 = vmatpush1.bf16.msra.mxu0 0
        %2723 = vmatprep.subr.bf16.mxu0 0
        %2724 = vmatpush1.bf16.msra.mxu0 0
        %2725 = vmatprep.subr.bf16.mxu0 0
        %2726 = vmatpush1.bf16.msra.mxu0 0
        %2727 = vmatprep.subr.bf16.mxu0 0
        %2728 = vmatpush1.bf16.msra.mxu0 0
        %2729 = vmatprep.subr.bf16.mxu0 0
        %2730 = vmatpush1.bf16.msra.mxu0 0
        %2731 = vmatprep.subr.bf16.mxu0 0
        %2732 = vmatpush1.bf16.msra.mxu0 0
        %2733 = vmatprep.subr.bf16.mxu0 0
        %2734 = vmatpush1.bf16.msra.mxu0 0
        %2735 = vmatprep.subr.bf16.mxu0 0
        %2736 = vmatpush1.bf16.msra.mxu0 0
        %2737 = vmatprep.subr.bf16.mxu0 0
        %2738 = vmatpush1.bf16.msra.mxu0 0
        %2739 = vmatprep.subr.bf16.mxu0 0
        %2740 = vmatpush1.bf16.msra.mxu0 0
        %2741 = vmatprep.subr.bf16.mxu0 0
        %2742 = vmatpush1.bf16.msra.mxu0 0
        %2743 = vmatprep.mubr.bf16.mxu0 0
        %2744 = vmatmul.mubr.bf16.gmra.mrb[0].mxu0 %v1375
        %v2745 = vpop.f32.mrb[0].mxu0
        %v2746 = vadd.f32 0.0, %v2745
        %v2747 = vpop.f32.mrb[0].mxu0
        %v2748 = vpop.f32.mrb[0].mxu0
        %v2749 = vadd.f32 0.0, %v2748
        %v2750 = vpop.f32.mrb[0].mxu0
        %2751 = vmatprep.mubr.bf16.mxu0 0
        %2752 = vmatmul.mubr.bf16.gmra.mrb[0].mxu0 %v1378
        %v2753 = vpop.f32.mrb[0].mxu0
        %v2754 = vadd.f32 0.0, %v2753
        %v2755 = vpop.f32.mrb[0].mxu0
        %v2756 = vpop.f32.mrb[0].mxu0
        %v2757 = vadd.f32 0.0, %v2756
        %v2758 = vpop.f32.mrb[0].mxu0
        %2759 = vmatprep.mubr.bf16.mxu0 0
        %2760 = vmatmul.mubr.bf16.gmra.mrb[0].mxu0 %v1381
        %v2761 = vpop.f32.mrb[0].mxu0
        %v2762 = vadd.f32 0.0, %v2761
        %v2763 = vpop.f32.mrb[0].mxu0
        %v2764 = vpop.f32.mrb[0].mxu0
        %v2765 = vadd.f32 0.0, %v2764
        %v2766 = vpop.f32.mrb[0].mxu0
        %2767 = vmatprep.mubr.bf16.mxu0 0
        %2768 = vmatmul.mubr.bf16.gmra.mrb[0].mxu0 %v1384
        %v2769 = vpop.f32.mrb[0].mxu0
        %v2770 = vadd.f32 0.0, %v2769
        %v2771 = vpop.f32.mrb[0].mxu0
        %v2772 = vpop.f32.mrb[0].mxu0
        %v2773 = vadd.f32 0.0, %v2772
        %v2774 = vpop.f32.mrb[0].mxu0
        %2775 = vmatprep.mubr.bf16.mxu0 0
        %2776 = vmatmul.mubr.bf16.gmra.mrb[0].mxu0 %v1387
        %v2777 = vpop.f32.mrb[0].mxu0
        %v2778 = vadd.f32 0.0, %v2777
        %v2779 = vpop.f32.mrb[0].mxu0
        %v2780 = vpop.f32.mrb[0].mxu0
        %v2781 = vadd.f32 0.0, %v2780
        %v2782 = vpop.f32.mrb[0].mxu0
        %2783 = vmatprep.mubr.bf16.mxu0 0
        %2784 = vmatmul.mubr.bf16.gmra.mrb[0].mxu0 %v1390
        %v2785 = vpop.f32.mrb[0].mxu0
        %v2786 = vadd.f32 0.0, %v2785
        %v2787 = vpop.f32.mrb[0].mxu0
        %v2788 = vpop.f32.mrb[0].mxu0
        %v2789 = vadd.f32 0.0, %v2788
        %v2790 = vpop.f32.mrb[0].mxu0
        %2791 = vmatprep.mubr.bf16.mxu0 0
        %2792 = vmatmul.mubr.bf16.gmra.mrb[0].mxu0 %v1393
        %v2793 = vpop.f32.mrb[0].mxu0
        %v2794 = vadd.f32 0.0, %v2793
        %v2795 = vpop.f32.mrb[0].mxu0
        %v2796 = vpop.f32.mrb[0].mxu0
        %v2797 = vadd.f32 0.0, %v2796
        %v2798 = vpop.f32.mrb[0].mxu0
        %2799 = vmatprep.mubr.bf16.mxu0 0
        %2800 = vmatmul.mubr.bf16.gmra.mrb[0].mxu0 %v1396
        %v2801 = vpop.f32.mrb[0].mxu0
        %v2802 = vadd.f32 0.0, %v2801
        %v2803 = vpop.f32.mrb[0].mxu0
        %v2804 = vpop.f32.mrb[0].mxu0
        %v2805 = vadd.f32 0.0, %v2804
        %v2806 = vpop.f32.mrb[0].mxu0
        %2807 = vmatprep.mubr.bf16.mxu0 0
        %2808 = vmatmul.mubr.bf16.gmra.mrb[0].mxu0 %v1399
        %v2809 = vpop.f32.mrb[0].mxu0
        %v2810 = vadd.f32 0.0, %v2809
        %v2811 = vpop.f32.mrb[0].mxu0
        %v2812 = vpop.f32.mrb[0].mxu0
        %v2813 = vadd.f32 0.0, %v2812
        %v2814 = vpop.f32.mrb[0].mxu0
        %2815 = vmatprep.mubr.bf16.mxu0 0
        %2816 = vmatmul.mubr.bf16.gmra.mrb[0].mxu0 %v1402
        %v2817 = vpop.f32.mrb[0].mxu0
        %v2818 = vadd.f32 0.0, %v2817
        %v2819 = vpop.f32.mrb[0].mxu0
        %v2820 = vpop.f32.mrb[0].mxu0
        %v2821 = vadd.f32 0.0, %v2820
        %v2822 = vpop.f32.mrb[0].mxu0
        %2823 = vmatprep.mubr.bf16.mxu0 0
        %2824 = vmatmul.mubr.bf16.gmra.mrb[0].mxu0 %v1405
        %v2825 = vpop.f32.mrb[0].mxu0
        %v2826 = vadd.f32 0.0, %v2825
        %v2827 = vpop.f32.mrb[0].mxu0
        %v2828 = vpop.f32.mrb[0].mxu0
        %v2829 = vadd.f32 0.0, %v2828
        %v2830 = vpop.f32.mrb[0].mxu0
        %2831 = vmatprep.mubr.bf16.mxu0 0
        %2832 = vmatmul.mubr.bf16.gmra.mrb[0].mxu0 %v1408
        %v2833 = vpop.f32.mrb[0].mxu0
        %v2834 = vadd.f32 0.0, %v2833
        %v2835 = vpop.f32.mrb[0].mxu0
        %v2836 = vpop.f32.mrb[0].mxu0
        %v2837 = vadd.f32 0.0, %v2836
        %v2838 = vpop.f32.mrb[0].mxu0
        %2839 = vmatprep.mubr.bf16.mxu0 0
        %2840 = vmatmul.mubr.bf16.gmra.mrb[0].mxu0 %v1411
        %v2841 = vpop.f32.mrb[0].mxu0
        %v2842 = vadd.f32 0.0, %v2841
        %v2843 = vpop.f32.mrb[0].mxu0
        %v2844 = vpop.f32.mrb[0].mxu0
        %v2845 = vadd.f32 0.0, %v2844
        %v2846 = vpop.f32.mrb[0].mxu0
        %2847 = vmatprep.mubr.bf16.mxu0 0
        %2848 = vmatmul.mubr.bf16.gmra.mrb[0].mxu0 %v1414
        %v2849 = vpop.f32.mrb[0].mxu0
        %v2850 = vadd.f32 0.0, %v2849
        %v2851 = vpop.f32.mrb[0].mxu0
        %v2852 = vpop.f32.mrb[0].mxu0
        %v2853 = vadd.f32 0.0, %v2852
        %v2854 = vpop.f32.mrb[0].mxu0
        %2855 = vmatprep.mubr.bf16.mxu0 0
        %2856 = vmatmul.mubr.bf16.gmra.mrb[0].mxu0 %v2060
        %v2857 = vpop.f32.mrb[0].mxu0
        %v2858 = vadd.f32 0.0, %v2857
        %v2859 = vpop.f32.mrb[0].mxu0
        %v2860 = vpop.f32.mrb[0].mxu0
        %v2861 = vadd.f32 0.0, %v2860
        %v2862 = vpop.f32.mrb[0].mxu0
        %2863 = vmatprep.mubr.bf16.mxu0 0
        %2864 = vmatmul.mubr.bf16.gmra.mrb[0].mxu0 %v2706
        %v2865 = vpop.f32.mrb[0].mxu0
        %v2866 = vadd.f32 0.0, %v2865
        %v2867 = vpop.f32.mrb[0].mxu0
        %v2868 = vpop.f32.mrb[0].mxu0
        %v2869 = vadd.f32 0.0, %v2868
        %v2870 = vpop.f32.mrb[0].mxu0
        %2871 = vdwg.mxu0
        %v2872 = vadd.f32 %v2660, %v2746
        %v2873 = vadd.f32 %v2661, %v2749
        %v2874 = vadd.f32 %v2662, %v2754
        %v2875 = vadd.f32 %v2663, %v2757
        %v2876 = vadd.f32 %v2664, %v2762
        %v2877 = vadd.f32 %v2665, %v2765
        %v2878 = vadd.f32 %v2666, %v2770
        %v2879 = vadd.f32 %v2667, %v2773
        %v2880 = vadd.f32 %v2668, %v2778
        %v2881 = vadd.f32 %v2669, %v2781
        %v2882 = vadd.f32 %v2670, %v2786
        %v2883 = vadd.f32 %v2671, %v2789
        %v2884 = vadd.f32 %v2672, %v2794
        %v2885 = vadd.f32 %v2673, %v2797
        %v2886 = vadd.f32 %v2674, %v2802
        %v2887 = vadd.f32 %v2675, %v2805
        %v2888 = vadd.f32 %v2676, %v2810
        %v2889 = vadd.f32 %v2677, %v2813
        %v2890 = vadd.f32 %v2678, %v2818
        %v2891 = vadd.f32 %v2679, %v2821
        %v2892 = vadd.f32 %v2680, %v2826
        %v2893 = vadd.f32 %v2681, %v2829
        %v2894 = vadd.f32 %v2682, %v2834
        %v2895 = vadd.f32 %v2683, %v2837
        %v2896 = vadd.f32 %v2684, %v2842
        %v2897 = vadd.f32 %v2685, %v2845
        %v2898 = vadd.f32 %v2686, %v2850
        %v2899 = vadd.f32 %v2687, %v2853
        %v2900 = vadd.f32 %v2688, %v2858
        %v2901 = vadd.f32 %v2689, %v2861
        %v2902 = vadd.f32 %v2690, %v2866
        %v2903 = vadd.f32 %v2691, %v2869
        %v2904 = vld [vmem:[%s2] sm:$0x1]
        %v2906 = vlaneseq
        %v2907 = vshrl.u32 %v2906, 7
        %v2908 = vsub.s32 0, %v2907
        %v2909 = vrot.slane %v2904, %v2908
        %v2911 = vadd.f32 %v2872, %v2909
        %v2912 = vadd.f32 %v2873, %v2909
        %v2913 = vadd.f32 %v2874, %v2909
        %v2914 = vadd.f32 %v2875, %v2909
        %v2915 = vadd.f32 %v2876, %v2909
        %v2916 = vadd.f32 %v2877, %v2909
        %v2917 = vadd.f32 %v2878, %v2909
        %v2918 = vadd.f32 %v2879, %v2909
        %v2919 = vadd.f32 %v2880, %v2909
        %v2920 = vadd.f32 %v2881, %v2909
        %v2921 = vadd.f32 %v2882, %v2909
        %v2922 = vadd.f32 %v2883, %v2909
        %v2923 = vadd.f32 %v2884, %v2909
        %v2924 = vadd.f32 %v2885, %v2909
        %v2925 = vadd.f32 %v2886, %v2909
        %v2926 = vadd.f32 %v2887, %v2909
        %v2927 = vadd.f32 %v2888, %v2909
        %v2928 = vadd.f32 %v2889, %v2909
        %v2929 = vadd.f32 %v2890, %v2909
        %v2930 = vadd.f32 %v2891, %v2909
        %v2931 = vadd.f32 %v2892, %v2909
        %v2932 = vadd.f32 %v2893, %v2909
        %v2933 = vadd.f32 %v2894, %v2909
        %v2934 = vadd.f32 %v2895, %v2909
        %v2935 = vadd.f32 %v2896, %v2909
        %v2936 = vadd.f32 %v2897, %v2909
        %v2937 = vadd.f32 %v2898, %v2909
        %v2938 = vadd.f32 %v2899, %v2909
        %v2939 = vadd.f32 %v2900, %v2909
        %v2940 = vadd.f32 %v2901, %v2909
        %v2941 = vadd.f32 %v2902, %v2909
        %v2942 = vadd.f32 %v2903, %v2909
        %v2943 = vmax.f32 %v2911, 0.0
        %v2944 = vmax.f32 %v2912, 0.0
        %v2945 = vmax.f32 %v2913, 0.0
        %v2946 = vmax.f32 %v2914, 0.0
        %v2947 = vmax.f32 %v2915, 0.0
        %v2948 = vmax.f32 %v2916, 0.0
        %v2949 = vmax.f32 %v2917, 0.0
        %v2950 = vmax.f32 %v2918, 0.0
        %v2951 = vmax.f32 %v2919, 0.0
        %v2952 = vmax.f32 %v2920, 0.0
        %v2953 = vmax.f32 %v2921, 0.0
        %v2954 = vmax.f32 %v2922, 0.0
        %v2955 = vmax.f32 %v2923, 0.0
        %v2956 = vmax.f32 %v2924, 0.0
        %v2957 = vmax.f32 %v2925, 0.0
        %v2958 = vmax.f32 %v2926, 0.0
        %v2959 = vmax.f32 %v2927, 0.0
        %v2960 = vmax.f32 %v2928, 0.0
        %v2961 = vmax.f32 %v2929, 0.0
        %v2962 = vmax.f32 %v2930, 0.0
        %v2963 = vmax.f32 %v2931, 0.0
        %v2964 = vmax.f32 %v2932, 0.0
        %v2965 = vmax.f32 %v2933, 0.0
        %v2966 = vmax.f32 %v2934, 0.0
        %v2967 = vmax.f32 %v2935, 0.0
        %v2968 = vmax.f32 %v2936, 0.0
        %v2969 = vmax.f32 %v2937, 0.0
        %v2970 = vmax.f32 %v2938, 0.0
        %v2971 = vmax.f32 %v2939, 0.0
        %v2972 = vmax.f32 %v2940, 0.0
        %v2973 = vmax.f32 %v2941, 0.0
        %v2974 = vmax.f32 %v2942, 0.0
        %v2975 = vpack.c.bf16 %v2944, %v2943
        %v2976 = vpack.c.bf16 %v2946, %v2945
        %v2977 = vpack.c.bf16 %v2948, %v2947
        %v2978 = vpack.c.bf16 %v2950, %v2949
        %v2979 = vpack.c.bf16 %v2952, %v2951
        %v2980 = vpack.c.bf16 %v2954, %v2953
        %v2981 = vpack.c.bf16 %v2956, %v2955
        %v2982 = vpack.c.bf16 %v2958, %v2957
        %v2983 = vpack.c.bf16 %v2960, %v2959
        %v2984 = vpack.c.bf16 %v2962, %v2961
        %v2985 = vpack.c.bf16 %v2964, %v2963
        %v2986 = vpack.c.bf16 %v2966, %v2965
        %v2987 = vpack.c.bf16 %v2968, %v2967
        %v2988 = vpack.c.bf16 %v2970, %v2969
        %v2989 = vpack.c.bf16 %v2972, %v2971
        %v2990 = vpack.c.bf16 %v2974, %v2973
        %v3007 = vunpack.c.l.b16 %v2975
        %v3008 = vunpack.c.h.b16 %v2975
        %v3009 = vunpack.c.l.b16 %v2976
        %v3010 = vunpack.c.h.b16 %v2976
        %v3011 = vunpack.c.l.b16 %v2977
        %v3012 = vunpack.c.h.b16 %v2977
        %v3013 = vunpack.c.l.b16 %v2978
        %v3014 = vunpack.c.h.b16 %v2978
        %v3015 = vunpack.c.l.b16 %v2979
        %v3016 = vunpack.c.h.b16 %v2979
        %v3017 = vunpack.c.l.b16 %v2980
        %v3018 = vunpack.c.h.b16 %v2980
        %v3019 = vunpack.c.l.b16 %v2981
        %v3020 = vunpack.c.h.b16 %v2981
        %v3021 = vunpack.c.l.b16 %v2982
        %v3022 = vunpack.c.h.b16 %v2982
        %v3023 = vunpack.c.l.b16 %v2983
        %v3024 = vunpack.c.h.b16 %v2983
        %v3025 = vunpack.c.l.b16 %v2984
        %v3026 = vunpack.c.h.b16 %v2984
        %v3027 = vunpack.c.l.b16 %v2985
        %v3028 = vunpack.c.h.b16 %v2985
        %v3029 = vunpack.c.l.b16 %v2986
        %v3030 = vunpack.c.h.b16 %v2986
        %v3031 = vunpack.c.l.b16 %v2987
        %v3032 = vunpack.c.h.b16 %v2987
        %v3033 = vunpack.c.l.b16 %v2988
        %v3034 = vunpack.c.h.b16 %v2988
        %v3035 = vunpack.c.l.b16 %v2989
        %v3036 = vunpack.c.h.b16 %v2989
        %v3037 = vunpack.c.l.b16 %v2990
        %v3038 = vunpack.c.h.b16 %v2990
        %v3039 = vpack.c.b16 %v3007, %v3007
        %v3040 = vpack.c.b16 %v3008, %v3008
        %v3041 = vpack.c.b16 %v3009, %v3009
        %v3042 = vpack.c.b16 %v3010, %v3010
        %v3043 = vpack.c.b16 %v3011, %v3011
        %v3044 = vpack.c.b16 %v3012, %v3012
        %v3045 = vpack.c.b16 %v3013, %v3013
        %v3046 = vpack.c.b16 %v3014, %v3014
        %v3047 = vpack.c.b16 %v3015, %v3015
        %v3048 = vpack.c.b16 %v3016, %v3016
        %v3049 = vpack.c.b16 %v3017, %v3017
        %v3050 = vpack.c.b16 %v3018, %v3018
        %v3051 = vpack.c.b16 %v3019, %v3019
        %v3052 = vpack.c.b16 %v3020, %v3020
        %v3053 = vpack.c.b16 %v3021, %v3021
        %v3054 = vpack.c.b16 %v3022, %v3022
        %v3055 = vpack.c.b16 %v3023, %v3023
        %v3056 = vpack.c.b16 %v3024, %v3024
        %v3057 = vpack.c.b16 %v3025, %v3025
        %v3058 = vpack.c.b16 %v3026, %v3026
        %v3059 = vpack.c.b16 %v3027, %v3027
        %v3060 = vpack.c.b16 %v3028, %v3028
        %v3061 = vpack.c.b16 %v3029, %v3029
        %v3062 = vpack.c.b16 %v3030, %v3030
        %v3063 = vpack.c.b16 %v3031, %v3031
        %v3064 = vpack.c.b16 %v3032, %v3032
        %v3065 = vpack.c.b16 %v3033, %v3033
        %v3066 = vpack.c.b16 %v3034, %v3034
        %v3067 = vpack.c.b16 %v3035, %v3035
        %v3068 = vpack.c.b16 %v3036, %v3036
        %v3069 = vpack.c.b16 %v3037, %v3037
        %v3070 = vpack.c.b16 %v3038, %v3038
        %3103 = vst [vmem:[%s177] sm:$0xf] %v3039
        %3104 = vst [vmem:[%s177 + $0x4] sm:$0xf] %v3040
        %3105 = vst [vmem:[%s177 + $0x8] sm:$0xf] %v3041
        %3106 = vst [vmem:[%s177 + $0xc] sm:$0xf] %v3042
        %3107 = vst [vmem:[%s177 + $0x10] sm:$0xf] %v3043
        %3108 = vst [vmem:[%s177 + $0x14] sm:$0xf] %v3044
        %3109 = vst [vmem:[%s177 + $0x18] sm:$0xf] %v3045
        %3110 = vst [vmem:[%s177 + $0x1c] sm:$0xf] %v3046
        %3111 = vst [vmem:[%s177 + $0x20] sm:$0xf] %v3047
        %3112 = vst [vmem:[%s177 + $0x24] sm:$0xf] %v3048
        %3113 = vst [vmem:[%s177 + $0x28] sm:$0xf] %v3049
        %3114 = vst [vmem:[%s177 + $0x2c] sm:$0xf] %v3050
        %3115 = vst [vmem:[%s177 + $0x30] sm:$0xf] %v3051
        %3116 = vst [vmem:[%s177 + $0x34] sm:$0xf] %v3052
        %3117 = vst [vmem:[%s177 + $0x38] sm:$0xf] %v3053
        %3118 = vst [vmem:[%s177 + $0x3c] sm:$0xf] %v3054
        %3119 = vst [vmem:[%s177 + $0x40] sm:$0xf] %v3055
        %3120 = vst [vmem:[%s177 + $0x44] sm:$0xf] %v3056
        %3121 = vst [vmem:[%s177 + $0x48] sm:$0xf] %v3057
        %3122 = vst [vmem:[%s177 + $0x4c] sm:$0xf] %v3058
        %3123 = vst [vmem:[%s177 + $0x50] sm:$0xf] %v3059
        %3124 = vst [vmem:[%s177 + $0x54] sm:$0xf] %v3060
        %3125 = vst [vmem:[%s177 + $0x58] sm:$0xf] %v3061
        %3126 = vst [vmem:[%s177 + $0x5c] sm:$0xf] %v3062
        %3127 = vst [vmem:[%s177 + $0x60] sm:$0xf] %v3063
        %3128 = vst [vmem:[%s177 + $0x64] sm:$0xf] %v3064
        %3129 = vst [vmem:[%s177 + $0x68] sm:$0xf] %v3065
        %3130 = vst [vmem:[%s177 + $0x6c] sm:$0xf] %v3066
        %3131 = vst [vmem:[%s177 + $0x70] sm:$0xf] %v3067
        %3132 = vst [vmem:[%s177 + $0x74] sm:$0xf] %v3068
        %3133 = vst [vmem:[%s177 + $0x78] sm:$0xf] %v3069
        %3134 = vst [vmem:[%s177 + $0x7c] sm:$0xf] %v3070
        %s3135 = sand.u32 %s107, 1
        %s3136 = scalar_lea.sflag [#allocation3], %s3135
        %s3137 = sand.u32 %s107, 1
        %s3138 = smul.addr %s3137, 128
        %s3139 = scalar_lea.vmem [#allocation2], %s3138
        // Predicated region
        $region33: #{tpu_custom_call.1} parent=31 // pred_check
          %p3140 = pneg %p117
        $region34: #{tpu_custom_call.1} parent=31 // pred_check_branch
          %3142 = sbr.rel (%p3140) target = $region36
        $region35: #{tpu_custom_call.1} parent=31 // pred_region
          %s3143 = smul.u32 16, %s22
          %s3145 = ssub.s32 2048, 2048
          %3146 = vsyncadd %s3136, %s3145
          %s3147 = smul.addr %s3143, 2
          %s3148 = smul.addr %s21, 32
          %s3149 = sadd.s32 %s3147, %s3148
          %s3150 = smul.addr %s3149, 64
          %s3151 = scalar_lea.hbm %s3, %s3150
          %s3152 = sshll.u32 %s3139, 4
          %s3153 = int_to_ptr.vmem [resolvable:$true] %s3152
          %3158 = dma.vmem_to_hbm [thread:$0]  %s3153, 2048, %s3151, %s3136, 64, 64, 4
        $region36: #{tpu_custom_call.1} parent=31 // pred_fallthru
          _
      $region32: #{tpu_custom_call.1} parent=5 // pred_fallthru
        _
      %p3159 = scmp.le.s32.totalorder 2, %s12
      // Predicated region
      $region37: #{tpu_custom_call.1} parent=5 // pred_check
        %p3160 = pneg %p3159
      $region38: #{tpu_custom_call.1} parent=5 // pred_check_branch
        %3162 = sbr.rel (%p3160) target = $region40
      $region39: #{tpu_custom_call.1} parent=5 // pred_region
        %s3163 = ssub.s32 %s12, 2
        // Predicated region
        $region41: #{tpu_custom_call.1} parent=39 // pred_check
          %p3164 = pneg %p123
        $region42: #{tpu_custom_call.1} parent=39 // pred_check_branch
          %3166 = sbr.rel (%p3164) target = $region44
        $region43: #{tpu_custom_call.1} parent=39 // pred_region
          %s3167 = sand.u32 %s108, 1
          %s3168 = scalar_lea.sflag [#allocation3], %s3167
          %s3169 = sand.u32 %s108, 1
          %s3170 = smul.addr %s3169, 128
          %s3171 = scalar_lea.vmem [#allocation2], %s3170
          %3172 = dma.done %s3168, 2048
        $region44: #{tpu_custom_call.1} parent=39 // pred_fallthru
          _
      $region40: #{tpu_custom_call.1} parent=5 // pred_fallthru
        _
    $region6: #{tpu_custom_call.1} parent=1 // loop_footer
      %s16 = sadd.s32 1, %s12
    $region7: #{tpu_custom_call.1} parent=1 // loop_footer_branch
      %11 = sbr.rel target = $region3
    $region8: #{tpu_custom_call.1} parent=1 // loop_exit
      _
    %3173 = vsyncpa [#allocation3], 1
    %s3174 = scalar_lea.sflag [#allocation3], 1
    %3175 = vsyncpa %s3174, 1

// kernel: tpu_custom_call.1
$region0: #{tpu_custom_call.1}
  #allocation0 [shape = 'u32[]', space=smem, size = 0x4, offset = 0x4, fixed_abs, tag = 'smem constant byte address 0x4 - core index']
  #allocation1 [shape = 'u32[144,128]{1,0:T(1,128)}', space=vmem, size = 0x12000, scoped, tag = 'internal scratch']
  %s0 = inlined_call_operand.vmem [shape: bf16[2,18,18,4], index: 0, kind: input, shape index: {}]
  %s1 = inlined_call_operand.vmem [shape: bf16[3,3,4,128], index: 1, kind: input, shape index: {}]
  %s2 = inlined_call_operand.vmem [shape: f32[1,128], index: 2, kind: input, shape index: {}]
  %s3 = inlined_call_operand.hbm [shape: bf16[2,16,16,128], index: 3, kind: output, shape index: {}]
  %s4 = sld [smem:[#allocation0]]
  $region45: #{tpu_custom_call.1} parent=0
    _
  %s6 = ssub.s32 1, %s4
  %s7 = scalar_select 0, %s6, %s4
  $region1: #{tpu_custom_call.1} parent=0
    #allocation2 [shape = 'u8[131072]{0}', space=vmem, size = 0x20000, scoped, tag = 'output window, operand 0']
    #allocation3 [shape = 's32[2]{0}', space=sflag, size = 0x8, scoped, tag = 'scoped memory for tpu_custom_call.1']
    %8 = vsyncpa [#allocation3], 0
    %s9 = scalar_lea.sflag [#allocation3], 1
    %10 = vsyncpa %s9, 0
    loop: start=0, step=1, limit=4
    $region2: #{tpu_custom_call.1} parent=1 // loop_pre_header
      _
    $region3: #{tpu_custom_call.1} parent=1 // loop_header
      %s12 = sphi 0, %s16
      %p13 = scmp.ge.s32.totalorder %s12, 4
      %s19 = sphi 0, %s31
      %s20 = sphi 0, %s27
      %s21 = sphi 0, %s19
      %s22 = sphi 0, %s20
      %s23 = sphi 0, %s21
      %s24 = sphi 0, %s22
      %s34 = sphi 0, %s36
      %s37 = sphi 0, %s34
      %s38 = sphi 0, %s37
      %s54 = sphi 0, %s38
      %s58 = sphi 0, %s58
      %s60 = sphi 0, %s58
      %s61 = sphi 0, %s60
      %s75 = sphi 0, %s61
      %s79 = sphi 0, %s79
      %s81 = sphi 0, %s79
      %s82 = sphi 0, %s81
      %s96 = sphi 0, %s82
      %s104 = sphi 0, %s106
      %s107 = sphi 0, %s104
      %s108 = sphi 0, %s107
      %s124 = sphi 0, %s108
    $region4: #{tpu_custom_call.1} parent=1 // loop_header_branch
      %15 = sbr.rel (%p13) target = $region8
    $region5: #{tpu_custom_call.1} parent=1 // loop_body
      %s17 = ssub.s32 %s12, 1
      %s18 = ssub.s32 %s12, 2
      %s25 = sadd.s32 1, %s20
      %p26 = scmp.ge.s32.totalorder %s25, 1
      %s27 = scalar_select %p26, 0, %s25
      %s28 = sadd.s32 1, %s19
      %s29 = scalar_select %p26, %s28, %s19
      %p30 = scmp.ge.s32.totalorder %s29, 2
      %s31 = scalar_select %p30, 0, %s29
      %s32 = ssub.s32 %s19, %s31
      %p33 = scmp.eq.s32.totalorder %s32, 0
      %s35 = sadd.s32 %s34, 1
      %s36 = scalar_select %p33, %s34, %s35
      %p39 = pneg %p33
      %p40 = scmp.eq.s32.totalorder %s12, 1
      %p41 = por %p39, %p40
      %p42 = scmp.ne.s32.totalorder %s34, %s37
      %p43 = scmp.eq.s32.totalorder %s12, 0
      %p44 = por %p42, %p43
      %p45 = scmp.ne.s32.totalorder %s34, %s37
      %p46 = scmp.eq.s32.totalorder %s17, 1
      %p47 = por %p45, %p46
      %p48 = scmp.ne.s32.totalorder %s37, %s38
      %p49 = scmp.eq.s32.totalorder %s17, 0
      %p50 = por %p48, %p49
      %p51 = scmp.ne.s32.totalorder %s37, %s38
      %p52 = scmp.eq.s32.totalorder %s18, 1
      %p53 = por %p51, %p52
      %p55 = scmp.ne.s32.totalorder %s38, %s54
      %p56 = scmp.eq.s32.totalorder %s18, 0
      %p57 = por %p55, %p56
      %s59 = sadd.s32 %s58, 1
      %p62 = scmp.eq.s32.totalorder %s12, 1
      %p63 = scmp.ne.s32.totalorder %s58, %s60
      %p64 = scmp.eq.s32.totalorder %s12, 0
      %p65 = por %p63, %p64
      %p66 = scmp.ne.s32.totalorder %s58, %s60
      %p67 = scmp.eq.s32.totalorder %s17, 1
      %p68 = por %p66, %p67
      %p69 = scmp.ne.s32.totalorder %s60, %s61
      %p70 = scmp.eq.s32.totalorder %s17, 0
      %p71 = por %p69, %p70
      %p72 = scmp.ne.s32.totalorder %s60, %s61
      %p73 = scmp.eq.s32.totalorder %s18, 1
      %p74 = por %p72, %p73
      %p76 = scmp.ne.s32.totalorder %s61, %s75
      %p77 = scmp.eq.s32.totalorder %s18, 0
      %p78 = por %p76, %p77
      %s80 = sadd.s32 %s79, 1
      %p83 = scmp.eq.s32.totalorder %s12, 1
      %p84 = scmp.ne.s32.totalorder %s79, %s81
      %p85 = scmp.eq.s32.totalorder %s12, 0
      %p86 = por %p84, %p85
      %p87 = scmp.ne.s32.totalorder %s79, %s81
      %p88 = scmp.eq.s32.totalorder %s17, 1
      %p89 = por %p87, %p88
      %p90 = scmp.ne.s32.totalorder %s81, %s82
      %p91 = scmp.eq.s32.totalorder %s17, 0
      %p92 = por %p90, %p91
      %p93 = scmp.ne.s32.totalorder %s81, %s82
      %p94 = scmp.eq.s32.totalorder %s18, 1
      %p95 = por %p93, %p94
      %p97 = scmp.ne.s32.totalorder %s82, %s96
      %p98 = scmp.eq.s32.totalorder %s18, 0
      %p99 = por %p97, %p98
      %s100 = ssub.s32 %s19, %s31
      %s101 = ssub.s32 %s20, %s27
      %s102 = sor.u32 %s100, %s101
      %p103 = scmp.eq.s32.totalorder %s102, 0
      %s105 = sadd.s32 %s104, 1
      %s106 = scalar_select %p103, %s104, %s105
      %p109 = pneg %p103
      %p110 = scmp.eq.s32.totalorder %s12, 1
      %p111 = por %p109, %p110
      %p112 = scmp.ne.s32.totalorder %s104, %s107
      %p113 = scmp.eq.s32.totalorder %s12, 0
      %p114 = por %p112, %p113
      %p115 = scmp.ne.s32.totalorder %s104, %s107
      %p116 = scmp.eq.s32.totalorder %s17, 1
      %p117 = por %p115, %p116
      %p118 = scmp.ne.s32.totalorder %s107, %s108
      %p119 = scmp.eq.s32.totalorder %s17, 0
      %p120 = por %p118, %p119
      %p121 = scmp.ne.s32.totalorder %s107, %s108
      %p122 = scmp.eq.s32.totalorder %s18, 1
      %p123 = por %p121, %p122
      %p125 = scmp.ne.s32.totalorder %s108, %s124
      %p126 = scmp.eq.s32.totalorder %s18, 0
      %p127 = por %p125, %p126
      %p128 = scmp.le.s32.totalorder 1, %s12
      %p129 = scmp.lt.s32.totalorder %s12, 3
      %p130 = pnand %p128, %p129
      %p131 = pneg %p130
      // Predicated region
      $region9: #{tpu_custom_call.1} parent=5 // pred_check
        _
      $region10: #{tpu_custom_call.1} parent=5 // pred_check_branch
        %133 = sbr.rel (%p130) target = $region12
      $region11: #{tpu_custom_call.1} parent=5 // pred_region
        %s134 = ssub.s32 %s12, 1
        // Predicated region
        $region13: #{tpu_custom_call.1} parent=11 // pred_check
          %p135 = pneg %p71
        $region14: #{tpu_custom_call.1} parent=11 // pred_check_branch
          %137 = sbr.rel (%p135) target = $region16
        $region15: #{tpu_custom_call.1} parent=11 // pred_region
          _
        $region16: #{tpu_custom_call.1} parent=11 // pred_fallthru
          _
        // Predicated region
        $region17: #{tpu_custom_call.1} parent=11 // pred_check
          %p138 = pneg %p92
        $region18: #{tpu_custom_call.1} parent=11 // pred_check_branch
          %140 = sbr.rel (%p138) target = $region20
        $region19: #{tpu_custom_call.1} parent=11 // pred_region
          _
        $region20: #{tpu_custom_call.1} parent=11 // pred_fallthru
          _
      $region12: #{tpu_custom_call.1} parent=5 // pred_fallthru
        _
      %p141 = scmp.lt.s32.totalorder %s12, 2
      // Predicated region
      $region21: #{tpu_custom_call.1} parent=5 // pred_check
        %p142 = pneg %p141
      $region22: #{tpu_custom_call.1} parent=5 // pred_check_branch
        %144 = sbr.rel (%p142) target = $region24
      $region23: #{tpu_custom_call.1} parent=5 // pred_region
        // Predicated region
        $region25: #{tpu_custom_call.1} parent=23 // pred_check
          %p145 = pneg %p44
        $region26: #{tpu_custom_call.1} parent=23 // pred_check_branch
          %147 = sbr.rel (%p145) target = $region28
        $region27: #{tpu_custom_call.1} parent=23 // pred_region
          %p148 = scmp.lt.s32.totalorder %s19, 1
          %s149 = scalar_select %p148, %s19, 1
          %s150 = smul.addr %s149, 54
          %s151 = smul.addr %s150, 4
          %s152 = scalar_lea.vmem %s0, %s151
        $region28: #{tpu_custom_call.1} parent=23 // pred_fallthru
          _
      $region24: #{tpu_custom_call.1} parent=5 // pred_fallthru
        _
      %p153 = scmp.le.s32.totalorder 1, %s12
      %p154 = scmp.lt.s32.totalorder %s12, 3
      %p155 = pnand %p153, %p154
      %p156 = pneg %p155
      // Predicated region
      $region29: #{tpu_custom_call.1} parent=5 // pred_check
        _
      $region30: #{tpu_custom_call.1} parent=5 // pred_check_branch
        %158 = sbr.rel (%p155) target = $region32
      $region31: #{tpu_custom_call.1} parent=5 // pred_region
        %s159 = ssub.s32 %s12, 1
        %p160 = scmp.lt.s32.totalorder %s21, 1
        %s161 = scalar_select %p160, %s21, 1
        %s162 = smul.addr %s161, 54
        %s163 = smul.addr %s162, 4
        %s164 = scalar_lea.vmem %s0, %s163
        %p165 = pneg %p50
        %p166 = pneg %p47
        %p167 = pneg %p71
        %p168 = pneg %p68
        %p169 = pneg %p92
        %p170 = pneg %p89
        %p171 = pneg %p120
        %p172 = pneg %p117
        %s173 = sand.u32 %s107, 1
        %s174 = scalar_lea.sflag [#allocation3], %s173
        %s175 = sand.u32 %s107, 1
        %s176 = smul.addr %s175, 128
        %s177 = scalar_lea.vmem [#allocation2], %s176
        %p178 = scmp.lt.s32.totalorder %s21, 1
        %s179 = scalar_select %p178, %s21, 1
        %s180 = smul.addr %s179, 54
        %s181 = smul.addr %s180, 4
        %s182 = scalar_lea.vmem %s0, %s181
        %s183 = smul.u32 16, %s22
        %s185 = smul.u32 %s22, 16
        %s186 = smul.u32 %s185, 3
        %s187 = smul.addr %s186, 4
        %s188 = scalar_lea.vmem %s182, %s187
        %v189 = vld [vmem:[%s188] sm:$0xf]
        %v190 = vld [vmem:[%s188 + $0x4] sm:$0xf]
        %v191 = vld [vmem:[%s188 + $0x8] sm:$0x1]
        %v192 = vld [vmem:[%s188 + $0xc] sm:$0xf]
        %v193 = vld [vmem:[%s188 + $0x10] sm:$0xf]
        %v194 = vld [vmem:[%s188 + $0x14] sm:$0x1]
        %v195 = vld [vmem:[%s188 + $0x18] sm:$0xf]
        %v196 = vld [vmem:[%s188 + $0x1c] sm:$0xf]
        %v197 = vld [vmem:[%s188 + $0x20] sm:$0x1]
        %v198 = vld [vmem:[%s188 + $0x24] sm:$0xf]
        %v199 = vld [vmem:[%s188 + $0x28] sm:$0xf]
        %v200 = vld [vmem:[%s188 + $0x2c] sm:$0x1]
        %v201 = vld [vmem:[%s188 + $0x30] sm:$0xf]
        %v202 = vld [vmem:[%s188 + $0x34] sm:$0xf]
        %v203 = vld [vmem:[%s188 + $0x38] sm:$0x1]
        %v204 = vld [vmem:[%s188 + $0x3c] sm:$0xf]
        %v205 = vld [vmem:[%s188 + $0x40] sm:$0xf]
        %v206 = vld [vmem:[%s188 + $0x44] sm:$0x1]
        %v207 = vld [vmem:[%s188 + $0x48] sm:$0xf]
        %v208 = vld [vmem:[%s188 + $0x4c] sm:$0xf]
        %v209 = vld [vmem:[%s188 + $0x50] sm:$0x1]
        %v210 = vld [vmem:[%s188 + $0x54] sm:$0xf]
        %v211 = vld [vmem:[%s188 + $0x58] sm:$0xf]
        %v212 = vld [vmem:[%s188 + $0x5c] sm:$0x1]
        %v213 = vld [vmem:[%s188 + $0x60] sm:$0xf]
        %v214 = vld [vmem:[%s188 + $0x64] sm:$0xf]
        %v215 = vld [vmem:[%s188 + $0x68] sm:$0x1]
        %v216 = vld [vmem:[%s188 + $0x6c] sm:$0xf]
        %v217 = vld [vmem:[%s188 + $0x70] sm:$0xf]
        %v218 = vld [vmem:[%s188 + $0x74] sm:$0x1]
        %v219 = vld [vmem:[%s188 + $0x78] sm:$0xf]
        %v220 = vld [vmem:[%s188 + $0x7c] sm:$0xf]
        %v221 = vld [vmem:[%s188 + $0x80] sm:$0x1]
        %v222 = vld [vmem:[%s188 + $0x84] sm:$0xf]
        %v223 = vld [vmem:[%s188 + $0x88] sm:$0xf]
        %v224 = vld [vmem:[%s188 + $0x8c] sm:$0x1]
        %v225 = vld [vmem:[%s188 + $0x90] sm:$0xf]
        %v226 = vld [vmem:[%s188 + $0x94] sm:$0xf]
        %v227 = vld [vmem:[%s188 + $0x98] sm:$0x1]
        %v228 = vld [vmem:[%s188 + $0x9c] sm:$0xf]
        %v229 = vld [vmem:[%s188 + $0xa0] sm:$0xf]
        %v230 = vld [vmem:[%s188 + $0xa4] sm:$0x1]
        %v231 = vld [vmem:[%s188 + $0xa8] sm:$0xf]
        %v232 = vld [vmem:[%s188 + $0xac] sm:$0xf]
        %v233 = vld [vmem:[%s188 + $0xb0] sm:$0x1]
        %v234 = vld [vmem:[%s188 + $0xb4] sm:$0xf]
        %v235 = vld [vmem:[%s188 + $0xb8] sm:$0xf]
        %v236 = vld [vmem:[%s188 + $0xbc] sm:$0x1]
        %v237 = vld [vmem:[%s188 + $0xc0] sm:$0xf]
        %v238 = vld [vmem:[%s188 + $0xc4] sm:$0xf]
        %v239 = vld [vmem:[%s188 + $0xc8] sm:$0x1]
        %v240 = vld [vmem:[%s188 + $0xcc] sm:$0xf]
        %v241 = vld [vmem:[%s188 + $0xd0] sm:$0xf]
        %v242 = vld [vmem:[%s188 + $0xd4] sm:$0x1]
        %v243 = vld [vmem:[%s1] sm:$0x3]
        %vm244 = vsmask.f32 3328
        %vm245 = vsmask.f32 7440
        %vm246 = vmor %vm244, %vm245
        %v248 = vshrl.u32 %v189, 16
        %v250 = vrot.slane %v248, 4
        %v251 = vshll.u32 %v189, 16
        %v253 = vrot.slane %v251, 5
        %v254 = vor.u32 %v250, %v253
        %v255 = vrot.slane %v254, 4
        %v257 = vshll.u32 %v190, 16
        %v259 = vrot.slane %v257, 5
        %v260 = vsel %vm246, %v255, %v259
        %v261 = vshrl.u32 %v190, 16
        %v263 = vrot.slane %v261, 4
        %v264 = vor.u32 %v263, %v259
        %v265 = vrot.slane %v264, 4
        %v267 = vshll.u32 %v191, 16
        %v269 = vrot.slane %v267, 5
        %v270 = vsel %vm246, %v265, %v269
        %v272 = vshrl.u32 %v192, 16
        %v274 = vrot.slane %v272, 4
        %v275 = vshll.u32 %v192, 16
        %v277 = vrot.slane %v275, 5
        %v278 = vor.u32 %v274, %v277
        %v279 = vrot.slane %v278, 4
        %v281 = vshll.u32 %v193, 16
        %v283 = vrot.slane %v281, 5
        %v284 = vsel %vm246, %v279, %v283
        %v285 = vshrl.u32 %v193, 16
        %v287 = vrot.slane %v285, 4
        %v288 = vor.u32 %v287, %v283
        %v289 = vrot.slane %v288, 4
        %v291 = vshll.u32 %v194, 16
        %v293 = vrot.slane %v291, 5
        %v294 = vsel %vm246, %v289, %v293
        %v296 = vshrl.u32 %v195, 16
        %v298 = vrot.slane %v296, 4
        %v299 = vshll.u32 %v195, 16
        %v301 = vrot.slane %v299, 5
        %v302 = vor.u32 %v298, %v301
        %v303 = vrot.slane %v302, 4
        %v305 = vshll.u32 %v196, 16
        %v307 = vrot.slane %v305, 5
        %v308 = vsel %vm246, %v303, %v307
        %v309 = vshrl.u32 %v196, 16
        %v311 = vrot.slane %v309, 4
        %v312 = vor.u32 %v311, %v307
        %v313 = vrot.slane %v312, 4
        %v315 = vshll.u32 %v197, 16
        %v317 = vrot.slane %v315, 5
        %v318 = vsel %vm246, %v313, %v317
        %v320 = vshrl.u32 %v198, 16
        %v322 = vrot.slane %v320, 4
        %v323 = vshll.u32 %v198, 16
        %v325 = vrot.slane %v323, 5
        %v326 = vor.u32 %v322, %v325
        %v327 = vrot.slane %v326, 4
        %v329 = vshll.u32 %v199, 16
        %v331 = vrot.slane %v329, 5
        %v332 = vsel %vm246, %v327, %v331
        %v333 = vshrl.u32 %v199, 16
        %v335 = vrot.slane %v333, 4
        %v336 = vor.u32 %v335, %v331
        %v337 = vrot.slane %v336, 4
        %v339 = vshll.u32 %v200, 16
        %v341 = vrot.slane %v339, 5
        %v342 = vsel %vm246, %v337, %v341
        %v344 = vshrl.u32 %v201, 16
        %v346 = vrot.slane %v344, 4
        %v347 = vshll.u32 %v201, 16
        %v349 = vrot.slane %v347, 5
        %v350 = vor.u32 %v346, %v349
        %v351 = vrot.slane %v350, 4
        %v353 = vshll.u32 %v202, 16
        %v355 = vrot.slane %v353, 5
        %v356 = vsel %vm246, %v351, %v355
        %v357 = vshrl.u32 %v202, 16
        %v359 = vrot.slane %v357, 4
        %v360 = vor.u32 %v359, %v355
        %v361 = vrot.slane %v360, 4
        %v363 = vshll.u32 %v203, 16
        %v365 = vrot.slane %v363, 5
        %v366 = vsel %vm246, %v361, %v365
        %v368 = vshrl.u32 %v204, 16
        %v370 = vrot.slane %v368, 4
        %v371 = vshll.u32 %v204, 16
        %v373 = vrot.slane %v371, 5
        %v374 = vor.u32 %v370, %v373
        %v375 = vrot.slane %v374, 4
        %v377 = vshll.u32 %v205, 16
        %v379 = vrot.slane %v377, 5
        %v380 = vsel %vm246, %v375, %v379
        %v381 = vshrl.u32 %v205, 16
        %v383 = vrot.slane %v381, 4
        %v384 = vor.u32 %v383, %v379
        %v385 = vrot.slane %v384, 4
        %v387 = vshll.u32 %v206, 16
        %v389 = vrot.slane %v387, 5
        %v390 = vsel %vm246, %v385, %v389
        %v392 = vshrl.u32 %v207, 16
        %v394 = vrot.slane %v392, 4
        %v395 = vshll.u32 %v207, 16
        %v397 = vrot.slane %v395, 5
        %v398 = vor.u32 %v394, %v397
        %v399 = vrot.slane %v398, 4
        %v401 = vshll.u32 %v208, 16
        %v403 = vrot.slane %v401, 5
        %v404 = vsel %vm246, %v399, %v403
        %v405 = vshrl.u32 %v208, 16
        %v407 = vrot.slane %v405, 4
        %v408 = vor.u32 %v407, %v403
        %v409 = vrot.slane %v408, 4
        %v411 = vshll.u32 %v209, 16
        %v413 = vrot.slane %v411, 5
        %v414 = vsel %vm246, %v409, %v413
        %v416 = vshrl.u32 %v210, 16
        %v418 = vrot.slane %v416, 4
        %v419 = vshll.u32 %v210, 16
        %v421 = vrot.slane %v419, 5
        %v422 = vor.u32 %v418, %v421
        %v423 = vrot.slane %v422, 4
        %v425 = vshll.u32 %v211, 16
        %v427 = vrot.slane %v425, 5
        %v428 = vsel %vm246, %v423, %v427
        %v429 = vshrl.u32 %v211, 16
        %v431 = vrot.slane %v429, 4
        %v432 = vor.u32 %v431, %v427
        %v433 = vrot.slane %v432, 4
        %v435 = vshll.u32 %v212, 16
        %v437 = vrot.slane %v435, 5
        %v438 = vsel %vm246, %v433, %v437
        %v440 = vshrl.u32 %v213, 16
        %v442 = vrot.slane %v440, 4
        %v443 = vshll.u32 %v213, 16
        %v445 = vrot.slane %v443, 5
        %v446 = vor.u32 %v442, %v445
        %v447 = vrot.slane %v446, 4
        %v449 = vshll.u32 %v214, 16
        %v451 = vrot.slane %v449, 5
        %v452 = vsel %vm246, %v447, %v451
        %v453 = vshrl.u32 %v214, 16
        %v455 = vrot.slane %v453, 4
        %v456 = vor.u32 %v455, %v451
        %v457 = vrot.slane %v456, 4
        %v459 = vshll.u32 %v215, 16
        %v461 = vrot.slane %v459, 5
        %v462 = vsel %vm246, %v457, %v461
        %v464 = vshrl.u32 %v216, 16
        %v466 = vrot.slane %v464, 4
        %v467 = vshll.u32 %v216, 16
        %v469 = vrot.slane %v467, 5
        %v470 = vor.u32 %v466, %v469
        %v471 = vrot.slane %v470, 4
        %v473 = vshll.u32 %v217, 16
        %v475 = vrot.slane %v473, 5
        %v476 = vsel %vm246, %v471, %v475
        %v477 = vshrl.u32 %v217, 16
        %v479 = vrot.slane %v477, 4
        %v480 = vor.u32 %v479, %v475
        %v481 = vrot.slane %v480, 4
        %v483 = vshll.u32 %v218, 16
        %v485 = vrot.slane %v483, 5
        %v486 = vsel %vm246, %v481, %v485
        %v488 = vshrl.u32 %v219, 16
        %v490 = vrot.slane %v488, 4
        %v491 = vshll.u32 %v219, 16
        %v493 = vrot.slane %v491, 5
        %v494 = vor.u32 %v490, %v493
        %v495 = vrot.slane %v494, 4
        %v497 = vshll.u32 %v220, 16
        %v499 = vrot.slane %v497, 5
        %v500 = vsel %vm246, %v495, %v499
        %v501 = vshrl.u32 %v220, 16
        %v503 = vrot.slane %v501, 4
        %v504 = vor.u32 %v503, %v499
        %v505 = vrot.slane %v504, 4
        %v507 = vshll.u32 %v221, 16
        %v509 = vrot.slane %v507, 5
        %v510 = vsel %vm246, %v505, %v509
        %v512 = vshrl.u32 %v222, 16
        %v514 = vrot.slane %v512, 4
        %v515 = vshll.u32 %v222, 16
        %v517 = vrot.slane %v515, 5
        %v518 = vor.u32 %v514, %v517
        %v519 = vrot.slane %v518, 4
        %v521 = vshll.u32 %v223, 16
        %v523 = vrot.slane %v521, 5
        %v524 = vsel %vm246, %v519, %v523
        %v525 = vshrl.u32 %v223, 16
        %v527 = vrot.slane %v525, 4
        %v528 = vor.u32 %v527, %v523
        %v529 = vrot.slane %v528, 4
        %v531 = vshll.u32 %v224, 16
        %v533 = vrot.slane %v531, 5
        %v534 = vsel %vm246, %v529, %v533
        %v536 = vshrl.u32 %v225, 16
        %v538 = vrot.slane %v536, 4
        %v539 = vshll.u32 %v225, 16
        %v541 = vrot.slane %v539, 5
        %v542 = vor.u32 %v538, %v541
        %v543 = vrot.slane %v542, 4
        %v545 = vshll.u32 %v226, 16
        %v547 = vrot.slane %v545, 5
        %v548 = vsel %vm246, %v543, %v547
        %v549 = vshrl.u32 %v226, 16
        %v551 = vrot.slane %v549, 4
        %v552 = vor.u32 %v551, %v547
        %v553 = vrot.slane %v552, 4
        %v555 = vshll.u32 %v227, 16
        %v557 = vrot.slane %v555, 5
        %v558 = vsel %vm246, %v553, %v557
        %v560 = vshrl.u32 %v228, 16
        %v562 = vrot.slane %v560, 4
        %v563 = vshll.u32 %v228, 16
        %v565 = vrot.slane %v563, 5
        %v566 = vor.u32 %v562, %v565
        %v567 = vrot.slane %v566, 4
        %v569 = vshll.u32 %v229, 16
        %v571 = vrot.slane %v569, 5
        %v572 = vsel %vm246, %v567, %v571
        %v573 = vshrl.u32 %v229, 16
        %v575 = vrot.slane %v573, 4
        %v576 = vor.u32 %v575, %v571
        %v577 = vrot.slane %v576, 4
        %v579 = vshll.u32 %v230, 16
        %v581 = vrot.slane %v579, 5
        %v582 = vsel %vm246, %v577, %v581
        %v584 = vshrl.u32 %v231, 16
        %v586 = vrot.slane %v584, 4
        %v587 = vshll.u32 %v231, 16
        %v589 = vrot.slane %v587, 5
        %v590 = vor.u32 %v586, %v589
        %v591 = vrot.slane %v590, 4
        %v593 = vshll.u32 %v232, 16
        %v595 = vrot.slane %v593, 5
        %v596 = vsel %vm246, %v591, %v595
        %v597 = vshrl.u32 %v232, 16
        %v599 = vrot.slane %v597, 4
        %v600 = vor.u32 %v599, %v595
        %v601 = vrot.slane %v600, 4
        %v603 = vshll.u32 %v233, 16
        %v605 = vrot.slane %v603, 5
        %v606 = vsel %vm246, %v601, %v605
        %v608 = vshrl.u32 %v234, 16
        %v610 = vrot.slane %v608, 4
        %v611 = vshll.u32 %v234, 16
        %v613 = vrot.slane %v611, 5
        %v614 = vor.u32 %v610, %v613
        %v615 = vrot.slane %v614, 4
        %v617 = vshll.u32 %v235, 16
        %v619 = vrot.slane %v617, 5
        %v620 = vsel %vm246, %v615, %v619
        %v621 = vshrl.u32 %v235, 16
        %v623 = vrot.slane %v621, 4
        %v624 = vor.u32 %v623, %v619
        %v625 = vrot.slane %v624, 4
        %v627 = vshll.u32 %v236, 16
        %v629 = vrot.slane %v627, 5
        %v630 = vsel %vm246, %v625, %v629
        %s631 = scalar_lea.vmem %s1, 2
        %v632 = vld [vmem:[%s631] sm:$0x3]
        %v633 = vunpack.c.l.b16 %v260
        %v634 = vunpack.c.l.b16 %v270
        %v635 = vunpack.c.l.b16 %v284
        %v636 = vunpack.c.l.b16 %v294
        %v637 = vunpack.c.l.b16 %v308
        %v638 = vunpack.c.l.b16 %v318
        %v639 = vunpack.c.l.b16 %v332
        %v640 = vunpack.c.l.b16 %v342
        %v641 = vunpack.c.l.b16 %v356
        %v642 = vunpack.c.l.b16 %v366
        %v643 = vunpack.c.l.b16 %v380
        %v644 = vunpack.c.l.b16 %v390
        %v645 = vunpack.c.l.b16 %v404
        %v646 = vunpack.c.l.b16 %v414
        %v647 = vunpack.c.l.b16 %v428
        %v648 = vunpack.c.l.b16 %v438
        %v649 = vunpack.c.l.b16 %v452
        %v650 = vunpack.c.l.b16 %v462
        %v651 = vunpack.c.l.b16 %v476
        %v652 = vunpack.c.l.b16 %v486
        %v653 = vunpack.c.l.b16 %v500
        %v654 = vunpack.c.l.b16 %v510
        %v655 = vunpack.c.l.b16 %v524
        %v656 = vunpack.c.l.b16 %v534
        %v657 = vunpack.c.l.b16 %v548
        %v658 = vunpack.c.l.b16 %v558
        %v659 = vunpack.c.l.b16 %v572
        %v660 = vunpack.c.l.b16 %v582
        %v661 = vunpack.c.l.b16 %v596
        %v662 = vunpack.c.l.b16 %v606
        %v663 = vunpack.c.l.b16 %v620
        %v664 = vunpack.c.l.b16 %v630
        %v665 = vpack.c.b16 %v634, %v633
        %v666 = vpack.c.b16 %v636, %v635
        %v667 = vpack.c.b16 %v638, %v637
        %v668 = vpack.c.b16 %v640, %v639
        %v669 = vpack.c.b16 %v642, %v641
        %v670 = vpack.c.b16 %v644, %v643
        %v671 = vpack.c.b16 %v646, %v645
        %v672 = vpack.c.b16 %v648, %v647
        %v673 = vpack.c.b16 %v650, %v649
        %v674 = vpack.c.b16 %v652, %v651
        %v675 = vpack.c.b16 %v654, %v653
        %v676 = vpack.c.b16 %v656, %v655
        %v677 = vpack.c.b16 %v658, %v657
        %v678 = vpack.c.b16 %v660, %v659
        %v679 = vpack.c.b16 %v662, %v661
        %v680 = vpack.c.b16 %v664, %v663
        %vm681 = vcmask 31744
        %v683 = vsel %vm681, %v665, 0
        %v686 = vsel %vm681, %v666, 0
        %v689 = vsel %vm681, %v667, 0
        %v692 = vsel %vm681, %v668, 0
        %v695 = vsel %vm681, %v669, 0
        %v698 = vsel %vm681, %v670, 0
        %v701 = vsel %vm681, %v671, 0
        %v704 = vsel %vm681, %v672, 0
        %v707 = vsel %vm681, %v673, 0
        %v710 = vsel %vm681, %v674, 0
        %v713 = vsel %vm681, %v675, 0
        %v716 = vsel %vm681, %v676, 0
        %v719 = vsel %vm681, %v677, 0
        %v722 = vsel %vm681, %v678, 0
        %v725 = vsel %vm681, %v679, 0
        %v728 = vsel %vm681, %v680, 0
        %vm730 = vcmask 1041408
        %v732 = vsel %vm730, %v632, 0
        %734 = vmatprep.subr.bf16.mxu0 0
        %735 = vmatpush1.bf16.msra.mxu0 %v732
        %736 = vmatprep.subr.bf16.mxu0 0
        %737 = vmatpush1.bf16.msra.mxu0 0
        %738 = vmatprep.subr.bf16.mxu0 0
        %739 = vmatpush1.bf16.msra.mxu0 0
        %740 = vmatprep.subr.bf16.mxu0 0
        %741 = vmatpush1.bf16.msra.mxu0 0
        %742 = vmatprep.subr.bf16.mxu0 0
        %743 = vmatpush1.bf16.msra.mxu0 0
        %744 = vmatprep.subr.bf16.mxu0 0
        %745 = vmatpush1.bf16.msra.mxu0 0
        %746 = vmatprep.subr.bf16.mxu0 0
        %747 = vmatpush1.bf16.msra.mxu0 0
        %748 = vmatprep.subr.bf16.mxu0 0
        %749 = vmatpush1.bf16.msra.mxu0 0
        %750 = vmatprep.subr.bf16.mxu0 0
        %751 = vmatpush1.bf16.msra.mxu0 0
        %752 = vmatprep.subr.bf16.mxu0 0
        %753 = vmatpush1.bf16.msra.mxu0 0
        %754 = vmatprep.subr.bf16.mxu0 0
        %755 = vmatpush1.bf16.msra.mxu0 0
        %756 = vmatprep.subr.bf16.mxu0 0
        %757 = vmatpush1.bf16.msra.mxu0 0
        %758 = vmatprep.subr.bf16.mxu0 0
        %759 = vmatpush1.bf16.msra.mxu0 0
        %760 = vmatprep.subr.bf16.mxu0 0
        %761 = vmatpush1.bf16.msra.mxu0 0
        %762 = vmatprep.subr.bf16.mxu0 0
        %763 = vmatpush1.bf16.msra.mxu0 0
        %764 = vmatprep.subr.bf16.mxu0 0
        %765 = vmatpush1.bf16.msra.mxu0 0
        %766 = vmatprep.mubr.bf16.mxu0 0
        %767 = vmatmul.mubr.bf16.gmra.mrb[0].mxu0 %v683
        %v768 = vpop.f32.mrb[0].mxu0
        %v769 = vadd.f32 0.0, %v768
        %v770 = vpop.f32.mrb[0].mxu0
        %v771 = vpop.f32.mrb[0].mxu0
        %v772 = vadd.f32 0.0, %v771
        %v773 = vpop.f32.mrb[0].mxu0
        %774 = vmatprep.mubr.bf16.mxu0 0
        %775 = vmatmul.mubr.bf16.gmra.mrb[0].mxu0 %v686
        %v776 = vpop.f32.mrb[0].mxu0
        %v777 = vadd.f32 0.0, %v776
        %v778 = vpop.f32.mrb[0].mxu0
        %v779 = vpop.f32.mrb[0].mxu0
        %v780 = vadd.f32 0.0, %v779
        %v781 = vpop.f32.mrb[0].mxu0
        %782 = vmatprep.mubr.bf16.mxu0 0
        %783 = vmatmul.mubr.bf16.gmra.mrb[0].mxu0 %v689
        %v784 = vpop.f32.mrb[0].mxu0
        %v785 = vadd.f32 0.0, %v784
        %v786 = vpop.f32.mrb[0].mxu0
        %v787 = vpop.f32.mrb[0].mxu0
        %v788 = vadd.f32 0.0, %v787
        %v789 = vpop.f32.mrb[0].mxu0
        %790 = vmatprep.mubr.bf16.mxu0 0
        %791 = vmatmul.mubr.bf16.gmra.mrb[0].mxu0 %v692
        %v792 = vpop.f32.mrb[0].mxu0
        %v793 = vadd.f32 0.0, %v792
        %v794 = vpop.f32.mrb[0].mxu0
        %v795 = vpop.f32.mrb[0].mxu0
        %v796 = vadd.f32 0.0, %v795
        %v797 = vpop.f32.mrb[0].mxu0
        %798 = vmatprep.mubr.bf16.mxu0 0
        %799 = vmatmul.mubr.bf16.gmra.mrb[0].mxu0 %v695
        %v800 = vpop.f32.mrb[0].mxu0
        %v801 = vadd.f32 0.0, %v800
        %v802 = vpop.f32.mrb[0].mxu0
        %v803 = vpop.f32.mrb[0].mxu0
        %v804 = vadd.f32 0.0, %v803
        %v805 = vpop.f32.mrb[0].mxu0
        %806 = vmatprep.mubr.bf16.mxu0 0
        %807 = vmatmul.mubr.bf16.gmra.mrb[0].mxu0 %v698
        %v808 = vpop.f32.mrb[0].mxu0
        %v809 = vadd.f32 0.0, %v808
        %v810 = vpop.f32.mrb[0].mxu0
        %v811 = vpop.f32.mrb[0].mxu0
        %v812 = vadd.f32 0.0, %v811
        %v813 = vpop.f32.mrb[0].mxu0
        %814 = vmatprep.mubr.bf16.mxu0 0
        %815 = vmatmul.mubr.bf16.gmra.mrb[0].mxu0 %v701
        %v816 = vpop.f32.mrb[0].mxu0
        %v817 = vadd.f32 0.0, %v816
        %v818 = vpop.f32.mrb[0].mxu0
        %v819 = vpop.f32.mrb[0].mxu0
        %v820 = vadd.f32 0.0, %v819
        %v821 = vpop.f32.mrb[0].mxu0
        %822 = vmatprep.mubr.bf16.mxu0 0
        %823 = vmatmul.mubr.bf16.gmra.mrb[0].mxu0 %v704
        %v824 = vpop.f32.mrb[0].mxu0
        %v825 = vadd.f32 0.0, %v824
        %v826 = vpop.f32.mrb[0].mxu0
        %v827 = vpop.f32.mrb[0].mxu0
        %v828 = vadd.f32 0.0, %v827
        %v829 = vpop.f32.mrb[0].mxu0
        %830 = vmatprep.mubr.bf16.mxu0 0
        %831 = vmatmul.mubr.bf16.gmra.mrb[0].mxu0 %v707
        %v832 = vpop.f32.mrb[0].mxu0
        %v833 = vadd.f32 0.0, %v832
        %v834 = vpop.f32.mrb[0].mxu0
        %v835 = vpop.f32.mrb[0].mxu0
        %v836 = vadd.f32 0.0, %v835
        %v837 = vpop.f32.mrb[0].mxu0
        %838 = vmatprep.mubr.bf16.mxu0 0
        %839 = vmatmul.mubr.bf16.gmra.mrb[0].mxu0 %v710
        %v840 = vpop.f32.mrb[0].mxu0
        %v841 = vadd.f32 0.0, %v840
        %v842 = vpop.f32.mrb[0].mxu0
        %v843 = vpop.f32.mrb[0].mxu0
        %v844 = vadd.f32 0.0, %v843
        %v845 = vpop.f32.mrb[0].mxu0
        %846 = vmatprep.mubr.bf16.mxu0 0
        %847 = vmatmul.mubr.bf16.gmra.mrb[0].mxu0 %v713
        %v848 = vpop.f32.mrb[0].mxu0
        %v849 = vadd.f32 0.0, %v848
        %v850 = vpop.f32.mrb[0].mxu0
        %v851 = vpop.f32.mrb[0].mxu0
        %v852 = vadd.f32 0.0, %v851
        %v853 = vpop.f32.mrb[0].mxu0
        %854 = vmatprep.mubr.bf16.mxu0 0
        %855 = vmatmul.mubr.bf16.gmra.mrb[0].mxu0 %v716
        %v856 = vpop.f32.mrb[0].mxu0
        %v857 = vadd.f32 0.0, %v856
        %v858 = vpop.f32.mrb[0].mxu0
        %v859 = vpop.f32.mrb[0].mxu0
        %v860 = vadd.f32 0.0, %v859
        %v861 = vpop.f32.mrb[0].mxu0
        %862 = vmatprep.mubr.bf16.mxu0 0
        %863 = vmatmul.mubr.bf16.gmra.mrb[0].mxu0 %v719
        %v864 = vpop.f32.mrb[0].mxu0
        %v865 = vadd.f32 0.0, %v864
        %v866 = vpop.f32.mrb[0].mxu0
        %v867 = vpop.f32.mrb[0].mxu0
        %v868 = vadd.f32 0.0, %v867
        %v869 = vpop.f32.mrb[0].mxu0
        %870 = vmatprep.mubr.bf16.mxu0 0
        %871 = vmatmul.mubr.bf16.gmra.mrb[0].mxu0 %v722
        %v872 = vpop.f32.mrb[0].mxu0
        %v873 = vadd.f32 0.0, %v872
        %v874 = vpop.f32.mrb[0].mxu0
        %v875 = vpop.f32.mrb[0].mxu0
        %v876 = vadd.f32 0.0, %v875
        %v877 = vpop.f32.mrb[0].mxu0
        %878 = vmatprep.mubr.bf16.mxu0 0
        %879 = vmatmul.mubr.bf16.gmra.mrb[0].mxu0 %v725
        %v880 = vpop.f32.mrb[0].mxu0
        %v881 = vadd.f32 0.0, %v880
        %v882 = vpop.f32.mrb[0].mxu0
        %v883 = vpop.f32.mrb[0].mxu0
        %v884 = vadd.f32 0.0, %v883
        %v885 = vpop.f32.mrb[0].mxu0
        %886 = vmatprep.mubr.bf16.mxu0 0
        %887 = vmatmul.mubr.bf16.gmra.mrb[0].mxu0 %v728
        %v888 = vpop.f32.mrb[0].mxu0
        %v889 = vadd.f32 0.0, %v888
        %v890 = vpop.f32.mrb[0].mxu0
        %v891 = vpop.f32.mrb[0].mxu0
        %v892 = vadd.f32 0.0, %v891
        %v893 = vpop.f32.mrb[0].mxu0
        %894 = vdwg.mxu0
        %v927 = vunpack.c.l.b16 %v189
        %v928 = vunpack.c.l.b16 %v190
        %v929 = vunpack.c.l.b16 %v192
        %v930 = vunpack.c.l.b16 %v193
        %v931 = vunpack.c.l.b16 %v195
        %v932 = vunpack.c.l.b16 %v196
        %v933 = vunpack.c.l.b16 %v198
        %v934 = vunpack.c.l.b16 %v199
        %v935 = vunpack.c.l.b16 %v201
        %v936 = vunpack.c.l.b16 %v202
        %v937 = vunpack.c.l.b16 %v204
        %v938 = vunpack.c.l.b16 %v205
        %v939 = vunpack.c.l.b16 %v207
        %v940 = vunpack.c.l.b16 %v208
        %v941 = vunpack.c.l.b16 %v210
        %v942 = vunpack.c.l.b16 %v211
        %v943 = vunpack.c.l.b16 %v213
        %v944 = vunpack.c.l.b16 %v214
        %v945 = vunpack.c.l.b16 %v216
        %v946 = vunpack.c.l.b16 %v217
        %v947 = vunpack.c.l.b16 %v219
        %v948 = vunpack.c.l.b16 %v220
        %v949 = vunpack.c.l.b16 %v222
        %v950 = vunpack.c.l.b16 %v223
        %v951 = vunpack.c.l.b16 %v225
        %v952 = vunpack.c.l.b16 %v226
        %v953 = vunpack.c.l.b16 %v228
        %v954 = vunpack.c.l.b16 %v229
        %v955 = vunpack.c.l.b16 %v231
        %v956 = vunpack.c.l.b16 %v232
        %v957 = vunpack.c.l.b16 %v234
        %v958 = vunpack.c.l.b16 %v235
        %v959 = vpack.c.b16 %v928, %v927
        %v960 = vpack.c.b16 %v930, %v929
        %v961 = vpack.c.b16 %v932, %v931
        %v962 = vpack.c.b16 %v934, %v933
        %v963 = vpack.c.b16 %v936, %v935
        %v964 = vpack.c.b16 %v938, %v937
        %v965 = vpack.c.b16 %v940, %v939
        %v966 = vpack.c.b16 %v942, %v941
        %v967 = vpack.c.b16 %v944, %v943
        %v968 = vpack.c.b16 %v946, %v945
        %v969 = vpack.c.b16 %v948, %v947
        %v970 = vpack.c.b16 %v950, %v949
        %v971 = vpack.c.b16 %v952, %v951
        %v972 = vpack.c.b16 %v954, %v953
        %v973 = vpack.c.b16 %v956, %v955
        %v974 = vpack.c.b16 %v958, %v957
        %v976 = vsel %vm681, %v959, 0
        %v979 = vsel %vm681, %v960, 0
        %v982 = vsel %vm681, %v961, 0
        %v985 = vsel %vm681, %v962, 0
        %v988 = vsel %vm681, %v963, 0
        %v991 = vsel %vm681, %v964, 0
        %v994 = vsel %vm681, %v965, 0
        %v997 = vsel %vm681, %v966, 0
        %v1000 = vsel %vm681, %v967, 0
        %v1003 = vsel %vm681, %v968, 0
        %v1006 = vsel %vm681, %v969, 0
        %v1009 = vsel %vm681, %v970, 0
        %v1012 = vsel %vm681, %v971, 0
        %v1015 = vsel %vm681, %v972, 0
        %v1018 = vsel %vm681, %v973, 0
        %v1021 = vsel %vm681, %v974, 0
        %v1024 = vsel %vm730, %v243, 0
        %1026 = vmatprep.subr.bf16.mxu0 0
        %1027 = vmatpush1.bf16.msra.mxu0 %v1024
        %1028 = vmatprep.subr.bf16.mxu0 0
        %1029 = vmatpush1.bf16.msra.mxu0 0
        %1030 = vmatprep.subr.bf16.mxu0 0
        %1031 = vmatpush1.bf16.msra.mxu0 0
        %1032 = vmatprep.subr.bf16.mxu0 0
        %1033 = vmatpush1.bf16.msra.mxu0 0
        %1034 = vmatprep.subr.bf16.mxu0 0
        %1035 = vmatpush1.bf16.msra.mxu0 0
        %1036 = vmatprep.subr.bf16.mxu0 0
        %1037 = vmatpush1.bf16.msra.mxu0 0
        %1038 = vmatprep.subr.bf16.mxu0 0
        %1039 = vmatpush1.bf16.msra.mxu0 0
        %1040 = vmatprep.subr.bf16.mxu0 0
        %1041 = vmatpush1.bf16.msra.mxu0 0
        %1042 = vmatprep.subr.bf16.mxu0 0
        %1043 = vmatpush1.bf16.msra.mxu0 0
        %1044 = vmatprep.subr.bf16.mxu0 0
        %1045 = vmatpush1.bf16.msra.mxu0 0
        %1046 = vmatprep.subr.bf16.mxu0 0
        %1047 = vmatpush1.bf16.msra.mxu0 0
        %1048 = vmatprep.subr.bf16.mxu0 0
        %1049 = vmatpush1.bf16.msra.mxu0 0
        %1050 = vmatprep.subr.bf16.mxu0 0
        %1051 = vmatpush1.bf16.msra.mxu0 0
        %1052 = vmatprep.subr.bf16.mxu0 0
        %1053 = vmatpush1.bf16.msra.mxu0 0
        %1054 = vmatprep.subr.bf16.mxu0 0
        %1055 = vmatpush1.bf16.msra.mxu0 0
        %1056 = vmatprep.subr.bf16.mxu0 0
        %1057 = vmatpush1.bf16.msra.mxu0 0
        %1058 = vmatprep.mubr.bf16.mxu0 0
        %1059 = vmatmul.mubr.bf16.gmra.mrb[0].mxu0 %v976
        %v1060 = vpop.f32.mrb[0].mxu0
        %v1061 = vadd.f32 %v769, %v1060
        %v1062 = vpop.f32.mrb[0].mxu0
        %v1063 = vpop.f32.mrb[0].mxu0
        %v1064 = vadd.f32 %v772, %v1063
        %v1065 = vpop.f32.mrb[0].mxu0
        %1066 = vmatprep.mubr.bf16.mxu0 0
        %1067 = vmatmul.mubr.bf16.gmra.mrb[0].mxu0 %v979
        %v1068 = vpop.f32.mrb[0].mxu0
        %v1069 = vadd.f32 %v777, %v1068
        %v1070 = vpop.f32.mrb[0].mxu0
        %v1071 = vpop.f32.mrb[0].mxu0
        %v1072 = vadd.f32 %v780, %v1071
        %v1073 = vpop.f32.mrb[0].mxu0
        %1074 = vmatprep.mubr.bf16.mxu0 0
        %1075 = vmatmul.mubr.bf16.gmra.mrb[0].mxu0 %v982
        %v1076 = vpop.f32.mrb[0].mxu0
        %v1077 = vadd.f32 %v785, %v1076
        %v1078 = vpop.f32.mrb[0].mxu0
        %v1079 = vpop.f32.mrb[0].mxu0
        %v1080 = vadd.f32 %v788, %v1079
        %v1081 = vpop.f32.mrb[0].mxu0
        %1082 = vmatprep.mubr.bf16.mxu0 0
        %1083 = vmatmul.mubr.bf16.gmra.mrb[0].mxu0 %v985
        %v1084 = vpop.f32.mrb[0].mxu0
        %v1085 = vadd.f32 %v793, %v1084
        %v1086 = vpop.f32.mrb[0].mxu0
        %v1087 = vpop.f32.mrb[0].mxu0
        %v1088 = vadd.f32 %v796, %v1087
        %v1089 = vpop.f32.mrb[0].mxu0
        %1090 = vmatprep.mubr.bf16.mxu0 0
        %1091 = vmatmul.mubr.bf16.gmra.mrb[0].mxu0 %v988
        %v1092 = vpop.f32.mrb[0].mxu0
        %v1093 = vadd.f32 %v801, %v1092
        %v1094 = vpop.f32.mrb[0].mxu0
        %v1095 = vpop.f32.mrb[0].mxu0
        %v1096 = vadd.f32 %v804, %v1095
        %v1097 = vpop.f32.mrb[0].mxu0
        %1098 = vmatprep.mubr.bf16.mxu0 0
        %1099 = vmatmul.mubr.bf16.gmra.mrb[0].mxu0 %v991
        %v1100 = vpop.f32.mrb[0].mxu0
        %v1101 = vadd.f32 %v809, %v1100
        %v1102 = vpop.f32.mrb[0].mxu0
        %v1103 = vpop.f32.mrb[0].mxu0
        %v1104 = vadd.f32 %v812, %v1103
        %v1105 = vpop.f32.mrb[0].mxu0
        %1106 = vmatprep.mubr.bf16.mxu0 0
        %1107 = vmatmul.mubr.bf16.gmra.mrb[0].mxu0 %v994
        %v1108 = vpop.f32.mrb[0].mxu0
        %v1109 = vadd.f32 %v817, %v1108
        %v1110 = vpop.f32.mrb[0].mxu0
        %v1111 = vpop.f32.mrb[0].mxu0
        %v1112 = vadd.f32 %v820, %v1111
        %v1113 = vpop.f32.mrb[0].mxu0
        %1114 = vmatprep.mubr.bf16.mxu0 0
        %1115 = vmatmul.mubr.bf16.gmra.mrb[0].mxu0 %v997
        %v1116 = vpop.f32.mrb[0].mxu0
        %v1117 = vadd.f32 %v825, %v1116
        %v1118 = vpop.f32.mrb[0].mxu0
        %v1119 = vpop.f32.mrb[0].mxu0
        %v1120 = vadd.f32 %v828, %v1119
        %v1121 = vpop.f32.mrb[0].mxu0
        %1122 = vmatprep.mubr.bf16.mxu0 0
        %1123 = vmatmul.mubr.bf16.gmra.mrb[0].mxu0 %v1000
        %v1124 = vpop.f32.mrb[0].mxu0
        %v1125 = vadd.f32 %v833, %v1124
        %v1126 = vpop.f32.mrb[0].mxu0
        %v1127 = vpop.f32.mrb[0].mxu0
        %v1128 = vadd.f32 %v836, %v1127
        %v1129 = vpop.f32.mrb[0].mxu0
        %1130 = vmatprep.mubr.bf16.mxu0 0
        %1131 = vmatmul.mubr.bf16.gmra.mrb[0].mxu0 %v1003
        %v1132 = vpop.f32.mrb[0].mxu0
        %v1133 = vadd.f32 %v841, %v1132
        %v1134 = vpop.f32.mrb[0].mxu0
        %v1135 = vpop.f32.mrb[0].mxu0
        %v1136 = vadd.f32 %v844, %v1135
        %v1137 = vpop.f32.mrb[0].mxu0
        %1138 = vmatprep.mubr.bf16.mxu0 0
        %1139 = vmatmul.mubr.bf16.gmra.mrb[0].mxu0 %v1006
        %v1140 = vpop.f32.mrb[0].mxu0
        %v1141 = vadd.f32 %v849, %v1140
        %v1142 = vpop.f32.mrb[0].mxu0
        %v1143 = vpop.f32.mrb[0].mxu0
        %v1144 = vadd.f32 %v852, %v1143
        %v1145 = vpop.f32.mrb[0].mxu0
        %1146 = vmatprep.mubr.bf16.mxu0 0
        %1147 = vmatmul.mubr.bf16.gmra.mrb[0].mxu0 %v1009
        %v1148 = vpop.f32.mrb[0].mxu0
        %v1149 = vadd.f32 %v857, %v1148
        %v1150 = vpop.f32.mrb[0].mxu0
        %v1151 = vpop.f32.mrb[0].mxu0
        %v1152 = vadd.f32 %v860, %v1151
        %v1153 = vpop.f32.mrb[0].mxu0
        %1154 = vmatprep.mubr.bf16.mxu0 0
        %1155 = vmatmul.mubr.bf16.gmra.mrb[0].mxu0 %v1012
        %v1156 = vpop.f32.mrb[0].mxu0
        %v1157 = vadd.f32 %v865, %v1156
        %v1158 = vpop.f32.mrb[0].mxu0
        %v1159 = vpop.f32.mrb[0].mxu0
        %v1160 = vadd.f32 %v868, %v1159
        %v1161 = vpop.f32.mrb[0].mxu0
        %1162 = vmatprep.mubr.bf16.mxu0 0
        %1163 = vmatmul.mubr.bf16.gmra.mrb[0].mxu0 %v1015
        %v1164 = vpop.f32.mrb[0].mxu0
        %v1165 = vadd.f32 %v873, %v1164
        %v1166 = vpop.f32.mrb[0].mxu0
        %v1167 = vpop.f32.mrb[0].mxu0
        %v1168 = vadd.f32 %v876, %v1167
        %v1169 = vpop.f32.mrb[0].mxu0
        %1170 = vmatprep.mubr.bf16.mxu0 0
        %1171 = vmatmul.mubr.bf16.gmra.mrb[0].mxu0 %v1018
        %v1172 = vpop.f32.mrb[0].mxu0
        %v1173 = vadd.f32 %v881, %v1172
        %v1174 = vpop.f32.mrb[0].mxu0
        %v1175 = vpop.f32.mrb[0].mxu0
        %v1176 = vadd.f32 %v884, %v1175
        %v1177 = vpop.f32.mrb[0].mxu0
        %1178 = vmatprep.mubr.bf16.mxu0 0
        %1179 = vmatmul.mubr.bf16.gmra.mrb[0].mxu0 %v1021
        %v1180 = vpop.f32.mrb[0].mxu0
        %v1181 = vadd.f32 %v889, %v1180
        %v1182 = vpop.f32.mrb[0].mxu0
        %v1183 = vpop.f32.mrb[0].mxu0
        %v1184 = vadd.f32 %v892, %v1183
        %v1185 = vpop.f32.mrb[0].mxu0
        %1186 = vdwg.mxu0
        %vm1203 = vcmask 1042432
        %vm1204 = vcmask 1046532
        %vm1205 = vmor %vm1203, %vm1204
        %v1206 = vrot.slane %v189, 5
        %v1207 = vrot.slane %v1206, 4
        %v1208 = vrot.slane %v190, 5
        %v1209 = vsel %vm1205, %v1207, %v1208
        %v1210 = vrot.slane %v1208, 4
        %v1211 = vrot.slane %v191, 5
        %v1212 = vsel %vm1205, %v1210, %v1211
        %v1213 = vrot.slane %v192, 5
        %v1214 = vrot.slane %v1213, 4
        %v1215 = vrot.slane %v193, 5
        %v1216 = vsel %vm1205, %v1214, %v1215
        %v1217 = vrot.slane %v1215, 4
        %v1218 = vrot.slane %v194, 5
        %v1219 = vsel %vm1205, %v1217, %v1218
        %v1220 = vrot.slane %v195, 5
        %v1221 = vrot.slane %v1220, 4
        %v1222 = vrot.slane %v196, 5
        %v1223 = vsel %vm1205, %v1221, %v1222
        %v1224 = vrot.slane %v1222, 4
        %v1225 = vrot.slane %v197, 5
        %v1226 = vsel %vm1205, %v1224, %v1225
        %v1227 = vrot.slane %v198, 5
        %v1228 = vrot.slane %v1227, 4
        %v1229 = vrot.slane %v199, 5
        %v1230 = vsel %vm1205, %v1228, %v1229
        %v1231 = vrot.slane %v1229, 4
        %v1232 = vrot.slane %v200, 5
        %v1233 = vsel %vm1205, %v1231, %v1232
        %v1234 = vrot.slane %v201, 5
        %v1235 = vrot.slane %v1234, 4
        %v1236 = vrot.slane %v202, 5
        %v1237 = vsel %vm1205, %v1235, %v1236
        %v1238 = vrot.slane %v1236, 4
        %v1239 = vrot.slane %v203, 5
        %v1240 = vsel %vm1205, %v1238, %v1239
        %v1241 = vrot.slane %v204, 5
        %v1242 = vrot.slane %v1241, 4
        %v1243 = vrot.slane %v205, 5
        %v1244 = vsel %vm1205, %v1242, %v1243
        %v1245 = vrot.slane %v1243, 4
        %v1246 = vrot.slane %v206, 5
        %v1247 = vsel %vm1205, %v1245, %v1246
        %v1248 = vrot.slane %v207, 5
        %v1249 = vrot.slane %v1248, 4
        %v1250 = vrot.slane %v208, 5
        %v1251 = vsel %vm1205, %v1249, %v1250
        %v1252 = vrot.slane %v1250, 4
        %v1253 = vrot.slane %v209, 5
        %v1254 = vsel %vm1205, %v1252, %v1253
        %v1255 = vrot.slane %v210, 5
        %v1256 = vrot.slane %v1255, 4
        %v1257 = vrot.slane %v211, 5
        %v1258 = vsel %vm1205, %v1256, %v1257
        %v1259 = vrot.slane %v1257, 4
        %v1260 = vrot.slane %v212, 5
        %v1261 = vsel %vm1205, %v1259, %v1260
        %v1262 = vrot.slane %v213, 5
        %v1263 = vrot.slane %v1262, 4
        %v1264 = vrot.slane %v214, 5
        %v1265 = vsel %vm1205, %v1263, %v1264
        %v1266 = vrot.slane %v1264, 4
        %v1267 = vrot.slane %v215, 5
        %v1268 = vsel %vm1205, %v1266, %v1267
        %v1269 = vrot.slane %v216, 5
        %v1270 = vrot.slane %v1269, 4
        %v1271 = vrot.slane %v217, 5
        %v1272 = vsel %vm1205, %v1270, %v1271
        %v1273 = vrot.slane %v1271, 4
        %v1274 = vrot.slane %v218, 5
        %v1275 = vsel %vm1205, %v1273, %v1274
        %v1276 = vrot.slane %v219, 5
        %v1277 = vrot.slane %v1276, 4
        %v1278 = vrot.slane %v220, 5
        %v1279 = vsel %vm1205, %v1277, %v1278
        %v1280 = vrot.slane %v1278, 4
        %v1281 = vrot.slane %v221, 5
        %v1282 = vsel %vm1205, %v1280, %v1281
        %v1283 = vrot.slane %v222, 5
        %v1284 = vrot.slane %v1283, 4
        %v1285 = vrot.slane %v223, 5
        %v1286 = vsel %vm1205, %v1284, %v1285
        %v1287 = vrot.slane %v1285, 4
        %v1288 = vrot.slane %v224, 5
        %v1289 = vsel %vm1205, %v1287, %v1288
        %v1290 = vrot.slane %v225, 5
        %v1291 = vrot.slane %v1290, 4
        %v1292 = vrot.slane %v226, 5
        %v1293 = vsel %vm1205, %v1291, %v1292
        %v1294 = vrot.slane %v1292, 4
        %v1295 = vrot.slane %v227, 5
        %v1296 = vsel %vm1205, %v1294, %v1295
        %v1297 = vrot.slane %v228, 5
        %v1298 = vrot.slane %v1297, 4
        %v1299 = vrot.slane %v229, 5
        %v1300 = vsel %vm1205, %v1298, %v1299
        %v1301 = vrot.slane %v1299, 4
        %v1302 = vrot.slane %v230, 5
        %v1303 = vsel %vm1205, %v1301, %v1302
        %v1304 = vrot.slane %v231, 5
        %v1305 = vrot.slane %v1304, 4
        %v1306 = vrot.slane %v232, 5
        %v1307 = vsel %vm1205, %v1305, %v1306
        %v1308 = vrot.slane %v1306, 4
        %v1309 = vrot.slane %v233, 5
        %v1310 = vsel %vm1205, %v1308, %v1309
        %v1311 = vrot.slane %v234, 5
        %v1312 = vrot.slane %v1311, 4
        %v1313 = vrot.slane %v235, 5
        %v1314 = vsel %vm1205, %v1312, %v1313
        %v1315 = vrot.slane %v1313, 4
        %v1316 = vrot.slane %v236, 5
        %v1317 = vsel %vm1205, %v1315, %v1316
        %s1318 = scalar_lea.vmem %s1, 4
        %v1319 = vld [vmem:[%s1318] sm:$0x3]
        %v1320 = vunpack.c.l.b16 %v1209
        %v1321 = vunpack.c.l.b16 %v1212
        %v1322 = vunpack.c.l.b16 %v1216
        %v1323 = vunpack.c.l.b16 %v1219
        %v1324 = vunpack.c.l.b16 %v1223
        %v1325 = vunpack.c.l.b16 %v1226
        %v1326 = vunpack.c.l.b16 %v1230
        %v1327 = vunpack.c.l.b16 %v1233
        %v1328 = vunpack.c.l.b16 %v1237
        %v1329 = vunpack.c.l.b16 %v1240
        %v1330 = vunpack.c.l.b16 %v1244
        %v1331 = vunpack.c.l.b16 %v1247
        %v1332 = vunpack.c.l.b16 %v1251
        %v1333 = vunpack.c.l.b16 %v1254
        %v1334 = vunpack.c.l.b16 %v1258
        %v1335 = vunpack.c.l.b16 %v1261
        %v1336 = vunpack.c.l.b16 %v1265
        %v1337 = vunpack.c.l.b16 %v1268
        %v1338 = vunpack.c.l.b16 %v1272
        %v1339 = vunpack.c.l.b16 %v1275
        %v1340 = vunpack.c.l.b16 %v1279
        %v1341 = vunpack.c.l.b16 %v1282
        %v1342 = vunpack.c.l.b16 %v1286
        %v1343 = vunpack.c.l.b16 %v1289
        %v1344 = vunpack.c.l.b16 %v1293
        %v1345 = vunpack.c.l.b16 %v1296
        %v1346 = vunpack.c.l.b16 %v1300
        %v1347 = vunpack.c.l.b16 %v1303
        %v1348 = vunpack.c.l.b16 %v1307
        %v1349 = vunpack.c.l.b16 %v1310
        %v1350 = vunpack.c.l.b16 %v1314
        %v1351 = vunpack.c.l.b16 %v1317
        %v1352 = vpack.c.b16 %v1321, %v1320
        %v1353 = vpack.c.b16 %v1323, %v1322
        %v1354 = vpack.c.b16 %v1325, %v1324
        %v1355 = vpack.c.b16 %v1327, %v1326
        %v1356 = vpack.c.b16 %v1329, %v1328
        %v1357 = vpack.c.b16 %v1331, %v1330
        %v1358 = vpack.c.b16 %v1333, %v1332
        %v1359 = vpack.c.b16 %v1335, %v1334
        %v1360 = vpack.c.b16 %v1337, %v1336
        %v1361 = vpack.c.b16 %v1339, %v1338
        %v1362 = vpack.c.b16 %v1341, %v1340
        %v1363 = vpack.c.b16 %v1343, %v1342
        %v1364 = vpack.c.b16 %v1345, %v1344
        %v1365 = vpack.c.b16 %v1347, %v1346
        %v1366 = vpack.c.b16 %v1349, %v1348
        %v1367 = vpack.c.b16 %v1351, %v1350
        %v1369 = vsel %vm681, %v1352, 0
        %v1372 = vsel %vm681, %v1353, 0
        %v1375 = vsel %vm681, %v1354, 0
        %v1378 = vsel %vm681, %v1355, 0
        %v1381 = vsel %vm681, %v1356, 0
        %v1384 = vsel %vm681, %v1357, 0
        %v1387 = vsel %vm681, %v1358, 0
        %v1390 = vsel %vm681, %v1359, 0
        %v1393 = vsel %vm681, %v1360, 0
        %v1396 = vsel %vm681, %v1361, 0
        %v1399 = vsel %vm681, %v1362, 0
        %v1402 = vsel %vm681, %v1363, 0
        %v1405 = vsel %vm681, %v1364, 0
        %v1408 = vsel %vm681, %v1365, 0
        %v1411 = vsel %vm681, %v1366, 0
        %v1414 = vsel %vm681, %v1367, 0
        %v1417 = vsel %vm730, %v1319, 0
        %1419 = vmatprep.subr.bf16.mxu0 0
        %1420 = vmatpush1.bf16.msra.mxu0 %v1417
        %1421 = vmatprep.subr.bf16.mxu0 0
        %1422 = vmatpush1.bf16.msra.mxu0 0
        %1423 = vmatprep.subr.bf16.mxu0 0
        %1424 = vmatpush1.bf16.msra.mxu0 0
        %1425 = vmatprep.subr.bf16.mxu0 0
        %1426 = vmatpush1.bf16.msra.mxu0 0
        %1427 = vmatprep.subr.bf16.mxu0 0
        %1428 = vmatpush1.bf16.msra.mxu0 0
        %1429 = vmatprep.subr.bf16.mxu0 0
        %1430 = vmatpush1.bf16.msra.mxu0 0
        %1431 = vmatprep.subr.bf16.mxu0 0
        %1432 = vmatpush1.bf16.msra.mxu0 0
        %1433 = vmatprep.subr.bf16.mxu0 0
        %1434 = vmatpush1.bf16.msra.mxu0 0
        %1435 = vmatprep.subr.bf16.mxu0 0
        %1436 = vmatpush1.bf16.msra.mxu0 0
        %1437 = vmatprep.subr.bf16.mxu0 0
        %1438 = vmatpush1.bf16.msra.mxu0 0
        %1439 = vmatprep.subr.bf16.mxu0 0
        %1440 = vmatpush1.bf16.msra.mxu0 0
        %1441 = vmatprep.subr.bf16.mxu0 0
        %1442 = vmatpush1.bf16.msra.mxu0 0
        %1443 = vmatprep.subr.bf16.mxu0 0
        %1444 = vmatpush1.bf16.msra.mxu0 0
        %1445 = vmatprep.subr.bf16.mxu0 0
        %1446 = vmatpush1.bf16.msra.mxu0 0
        %1447 = vmatprep.subr.bf16.mxu0 0
        %1448 = vmatpush1.bf16.msra.mxu0 0
        %1449 = vmatprep.subr.bf16.mxu0 0
        %1450 = vmatpush1.bf16.msra.mxu0 0
        %1451 = vmatprep.mubr.bf16.mxu0 0
        %1452 = vmatmul.mubr.bf16.gmra.mrb[0].mxu0 %v1369
        %v1453 = vpop.f32.mrb[0].mxu0
        %v1454 = vadd.f32 0.0, %v1453
        %v1455 = vpop.f32.mrb[0].mxu0
        %v1456 = vpop.f32.mrb[0].mxu0
        %v1457 = vadd.f32 0.0, %v1456
        %v1458 = vpop.f32.mrb[0].mxu0
        %1459 = vmatprep.mubr.bf16.mxu0 0
        %1460 = vmatmul.mubr.bf16.gmra.mrb[0].mxu0 %v1372
        %v1461 = vpop.f32.mrb[0].mxu0
        %v1462 = vadd.f32 0.0, %v1461
        %v1463 = vpop.f32.mrb[0].mxu0
        %v1464 = vpop.f32.mrb[0].mxu0
        %v1465 = vadd.f32 0.0, %v1464
        %v1466 = vpop.f32.mrb[0].mxu0
        %1467 = vmatprep.mubr.bf16.mxu0 0
        %1468 = vmatmul.mubr.bf16.gmra.mrb[0].mxu0 %v1375
        %v1469 = vpop.f32.mrb[0].mxu0
        %v1470 = vadd.f32 0.0, %v1469
        %v1471 = vpop.f32.mrb[0].mxu0
        %v1472 = vpop.f32.mrb[0].mxu0
        %v1473 = vadd.f32 0.0, %v1472
        %v1474 = vpop.f32.mrb[0].mxu0
        %1475 = vmatprep.mubr.bf16.mxu0 0
        %1476 = vmatmul.mubr.bf16.gmra.mrb[0].mxu0 %v1378
        %v1477 = vpop.f32.mrb[0].mxu0
        %v1478 = vadd.f32 0.0, %v1477
        %v1479 = vpop.f32.mrb[0].mxu0
        %v1480 = vpop.f32.mrb[0].mxu0
        %v1481 = vadd.f32 0.0, %v1480
        %v1482 = vpop.f32.mrb[0].mxu0
        %1483 = vmatprep.mubr.bf16.mxu0 0
        %1484 = vmatmul.mubr.bf16.gmra.mrb[0].mxu0 %v1381
        %v1485 = vpop.f32.mrb[0].mxu0
        %v1486 = vadd.f32 0.0, %v1485
        %v1487 = vpop.f32.mrb[0].mxu0
        %v1488 = vpop.f32.mrb[0].mxu0
        %v1489 = vadd.f32 0.0, %v1488
        %v1490 = vpop.f32.mrb[0].mxu0
        %1491 = vmatprep.mubr.bf16.mxu0 0
        %1492 = vmatmul.mubr.bf16.gmra.mrb[0].mxu0 %v1384
        %v1493 = vpop.f32.mrb[0].mxu0
        %v1494 = vadd.f32 0.0, %v1493
        %v1495 = vpop.f32.mrb[0].mxu0
        %v1496 = vpop.f32.mrb[0].mxu0
        %v1497 = vadd.f32 0.0, %v1496
        %v1498 = vpop.f32.mrb[0].mxu0
        %1499 = vmatprep.mubr.bf16.mxu0 0
        %1500 = vmatmul.mubr.bf16.gmra.mrb[0].mxu0 %v1387
        %v1501 = vpop.f32.mrb[0].mxu0
        %v1502 = vadd.f32 0.0, %v1501
        %v1503 = vpop.f32.mrb[0].mxu0
        %v1504 = vpop.f32.mrb[0].mxu0
        %v1505 = vadd.f32 0.0, %v1504
        %v1506 = vpop.f32.mrb[0].mxu0
        %1507 = vmatprep.mubr.bf16.mxu0 0
        %1508 = vmatmul.mubr.bf16.gmra.mrb[0].mxu0 %v1390
        %v1509 = vpop.f32.mrb[0].mxu0
        %v1510 = vadd.f32 0.0, %v1509
        %v1511 = vpop.f32.mrb[0].mxu0
        %v1512 = vpop.f32.mrb[0].mxu0
        %v1513 = vadd.f32 0.0, %v1512
        %v1514 = vpop.f32.mrb[0].mxu0
        %1515 = vmatprep.mubr.bf16.mxu0 0
        %1516 = vmatmul.mubr.bf16.gmra.mrb[0].mxu0 %v1393
        %v1517 = vpop.f32.mrb[0].mxu0
        %v1518 = vadd.f32 0.0, %v1517
        %v1519 = vpop.f32.mrb[0].mxu0
        %v1520 = vpop.f32.mrb[0].mxu0
        %v1521 = vadd.f32 0.0, %v1520
        %v1522 = vpop.f32.mrb[0].mxu0
        %1523 = vmatprep.mubr.bf16.mxu0 0
        %1524 = vmatmul.mubr.bf16.gmra.mrb[0].mxu0 %v1396
        %v1525 = vpop.f32.mrb[0].mxu0
        %v1526 = vadd.f32 0.0, %v1525
        %v1527 = vpop.f32.mrb[0].mxu0
        %v1528 = vpop.f32.mrb[0].mxu0
        %v1529 = vadd.f32 0.0, %v1528
        %v1530 = vpop.f32.mrb[0].mxu0
        %1531 = vmatprep.mubr.bf16.mxu0 0
        %1532 = vmatmul.mubr.bf16.gmra.mrb[0].mxu0 %v1399
        %v1533 = vpop.f32.mrb[0].mxu0
        %v1534 = vadd.f32 0.0, %v1533
        %v1535 = vpop.f32.mrb[0].mxu0
        %v1536 = vpop.f32.mrb[0].mxu0
        %v1537 = vadd.f32 0.0, %v1536
        %v1538 = vpop.f32.mrb[0].mxu0
        %1539 = vmatprep.mubr.bf16.mxu0 0
        %1540 = vmatmul.mubr.bf16.gmra.mrb[0].mxu0 %v1402
        %v1541 = vpop.f32.mrb[0].mxu0
        %v1542 = vadd.f32 0.0, %v1541
        %v1543 = vpop.f32.mrb[0].mxu0
        %v1544 = vpop.f32.mrb[0].mxu0
        %v1545 = vadd.f32 0.0, %v1544
        %v1546 = vpop.f32.mrb[0].mxu0
        %1547 = vmatprep.mubr.bf16.mxu0 0
        %1548 = vmatmul.mubr.bf16.gmra.mrb[0].mxu0 %v1405
        %v1549 = vpop.f32.mrb[0].mxu0
        %v1550 = vadd.f32 0.0, %v1549
        %v1551 = vpop.f32.mrb[0].mxu0
        %v1552 = vpop.f32.mrb[0].mxu0
        %v1553 = vadd.f32 0.0, %v1552
        %v1554 = vpop.f32.mrb[0].mxu0
        %1555 = vmatprep.mubr.bf16.mxu0 0
        %1556 = vmatmul.mubr.bf16.gmra.mrb[0].mxu0 %v1408
        %v1557 = vpop.f32.mrb[0].mxu0
        %v1558 = vadd.f32 0.0, %v1557
        %v1559 = vpop.f32.mrb[0].mxu0
        %v1560 = vpop.f32.mrb[0].mxu0
        %v1561 = vadd.f32 0.0, %v1560
        %v1562 = vpop.f32.mrb[0].mxu0
        %1563 = vmatprep.mubr.bf16.mxu0 0
        %1564 = vmatmul.mubr.bf16.gmra.mrb[0].mxu0 %v1411
        %v1565 = vpop.f32.mrb[0].mxu0
        %v1566 = vadd.f32 0.0, %v1565
        %v1567 = vpop.f32.mrb[0].mxu0
        %v1568 = vpop.f32.mrb[0].mxu0
        %v1569 = vadd.f32 0.0, %v1568
        %v1570 = vpop.f32.mrb[0].mxu0
        %1571 = vmatprep.mubr.bf16.mxu0 0
        %1572 = vmatmul.mubr.bf16.gmra.mrb[0].mxu0 %v1414
        %v1573 = vpop.f32.mrb[0].mxu0
        %v1574 = vadd.f32 0.0, %v1573
        %v1575 = vpop.f32.mrb[0].mxu0
        %v1576 = vpop.f32.mrb[0].mxu0
        %v1577 = vadd.f32 0.0, %v1576
        %v1578 = vpop.f32.mrb[0].mxu0
        %1579 = vdwg.mxu0
        %v1580 = vadd.f32 %v1061, %v1454
        %v1581 = vadd.f32 %v1064, %v1457
        %v1582 = vadd.f32 %v1069, %v1462
        %v1583 = vadd.f32 %v1072, %v1465
        %v1584 = vadd.f32 %v1077, %v1470
        %v1585 = vadd.f32 %v1080, %v1473
        %v1586 = vadd.f32 %v1085, %v1478
        %v1587 = vadd.f32 %v1088, %v1481
        %v1588 = vadd.f32 %v1093, %v1486
        %v1589 = vadd.f32 %v1096, %v1489
        %v1590 = vadd.f32 %v1101, %v1494
        %v1591 = vadd.f32 %v1104, %v1497
        %v1592 = vadd.f32 %v1109, %v1502
        %v1593 = vadd.f32 %v1112, %v1505
        %v1594 = vadd.f32 %v1117, %v1510
        %v1595 = vadd.f32 %v1120, %v1513
        %v1596 = vadd.f32 %v1125, %v1518
        %v1597 = vadd.f32 %v1128, %v1521
        %v1598 = vadd.f32 %v1133, %v1526
        %v1599 = vadd.f32 %v1136, %v1529
        %v1600 = vadd.f32 %v1141, %v1534
        %v1601 = vadd.f32 %v1144, %v1537
        %v1602 = vadd.f32 %v1149, %v1542
        %v1603 = vadd.f32 %v1152, %v1545
        %v1604 = vadd.f32 %v1157, %v1550
        %v1605 = vadd.f32 %v1160, %v1553
        %v1606 = vadd.f32 %v1165, %v1558
        %v1607 = vadd.f32 %v1168, %v1561
        %v1608 = vadd.f32 %v1173, %v1566
        %v1609 = vadd.f32 %v1176, %v1569
        %v1610 = vadd.f32 %v1181, %v1574
        %v1611 = vadd.f32 %v1184, %v1577
        %s1612 = scalar_lea.vmem %s1, 6
        %v1613 = vld [vmem:[%s1612] sm:$0x3]
        %v1616 = vunpack.c.l.b16 %v237
        %v1617 = vunpack.c.l.b16 %v238
        %v1618 = vpack.c.b16 %v1617, %v1616
        %v1620 = vsel %vm681, %v1618, 0
        %v1623 = vsel %vm730, %v1613, 0
        %1625 = vmatprep.subr.bf16.mxu0 0
        %1626 = vmatpush1.bf16.msra.mxu0 %v1623
        %1627 = vmatprep.subr.bf16.mxu0 0
        %1628 = vmatpush1.bf16.msra.mxu0 0
        %1629 = vmatprep.subr.bf16.mxu0 0
        %1630 = vmatpush1.bf16.msra.mxu0 0
        %1631 = vmatprep.subr.bf16.mxu0 0
        %1632 = vmatpush1.bf16.msra.mxu0 0
        %1633 = vmatprep.subr.bf16.mxu0 0
        %1634 = vmatpush1.bf16.msra.mxu0 0
        %1635 = vmatprep.subr.bf16.mxu0 0
        %1636 = vmatpush1.bf16.msra.mxu0 0
        %1637 = vmatprep.subr.bf16.mxu0 0
        %1638 = vmatpush1.bf16.msra.mxu0 0
        %1639 = vmatprep.subr.bf16.mxu0 0
        %1640 = vmatpush1.bf16.msra.mxu0 0
        %1641 = vmatprep.subr.bf16.mxu0 0
        %1642 = vmatpush1.bf16.msra.mxu0 0
        %1643 = vmatprep.subr.bf16.mxu0 0
        %1644 = vmatpush1.bf16.msra.mxu0 0
        %1645 = vmatprep.subr.bf16.mxu0 0
        %1646 = vmatpush1.bf16.msra.mxu0 0
        %1647 = vmatprep.subr.bf16.mxu0 0
        %1648 = vmatpush1.bf16.msra.mxu0 0
        %1649 = vmatprep.subr.bf16.mxu0 0
        %1650 = vmatpush1.bf16.msra.mxu0 0
        %1651 = vmatprep.subr.bf16.mxu0 0
        %1652 = vmatpush1.bf16.msra.mxu0 0
        %1653 = vmatprep.subr.bf16.mxu0 0
        %1654 = vmatpush1.bf16.msra.mxu0 0
        %1655 = vmatprep.subr.bf16.mxu0 0
        %1656 = vmatpush1.bf16.msra.mxu0 0
        %1657 = vmatprep.mubr.bf16.mxu0 0
        %1658 = vmatmul.mubr.bf16.gmra.mrb[0].mxu0 %v979
        %v1659 = vpop.f32.mrb[0].mxu0
        %v1660 = vadd.f32 0.0, %v1659
        %v1661 = vpop.f32.mrb[0].mxu0
        %v1662 = vpop.f32.mrb[0].mxu0
        %v1663 = vadd.f32 0.0, %v1662
        %v1664 = vpop.f32.mrb[0].mxu0
        %1665 = vmatprep.mubr.bf16.mxu0 0
        %1666 = vmatmul.mubr.bf16.gmra.mrb[0].mxu0 %v982
        %v1667 = vpop.f32.mrb[0].mxu0
        %v1668 = vadd.f32 0.0, %v1667
        %v1669 = vpop.f32.mrb[0].mxu0
        %v1670 = vpop.f32.mrb[0].mxu0
        %v1671 = vadd.f32 0.0, %v1670
        %v1672 = vpop.f32.mrb[0].mxu0
        %1673 = vmatprep.mubr.bf16.mxu0 0
        %1674 = vmatmul.mubr.bf16.gmra.mrb[0].mxu0 %v985
        %v1675 = vpop.f32.mrb[0].mxu0
        %v1676 = vadd.f32 0.0, %v1675
        %v1677 = vpop.f32.mrb[0].mxu0
        %v1678 = vpop.f32.mrb[0].mxu0
        %v1679 = vadd.f32 0.0, %v1678
        %v1680 = vpop.f32.mrb[0].mxu0
        %1681 = vmatprep.mubr.bf16.mxu0 0
        %1682 = vmatmul.mubr.bf16.gmra.mrb[0].mxu0 %v988
        %v1683 = vpop.f32.mrb[0].mxu0
        %v1684 = vadd.f32 0.0, %v1683
        %v1685 = vpop.f32.mrb[0].mxu0
        %v1686 = vpop.f32.mrb[0].mxu0
        %v1687 = vadd.f32 0.0, %v1686
        %v1688 = vpop.f32.mrb[0].mxu0
        %1689 = vmatprep.mubr.bf16.mxu0 0
        %1690 = vmatmul.mubr.bf16.gmra.mrb[0].mxu0 %v991
        %v1691 = vpop.f32.mrb[0].mxu0
        %v1692 = vadd.f32 0.0, %v1691
        %v1693 = vpop.f32.mrb[0].mxu0
        %v1694 = vpop.f32.mrb[0].mxu0
        %v1695 = vadd.f32 0.0, %v1694
        %v1696 = vpop.f32.mrb[0].mxu0
        %1697 = vmatprep.mubr.bf16.mxu0 0
        %1698 = vmatmul.mubr.bf16.gmra.mrb[0].mxu0 %v994
        %v1699 = vpop.f32.mrb[0].mxu0
        %v1700 = vadd.f32 0.0, %v1699
        %v1701 = vpop.f32.mrb[0].mxu0
        %v1702 = vpop.f32.mrb[0].mxu0
        %v1703 = vadd.f32 0.0, %v1702
        %v1704 = vpop.f32.mrb[0].mxu0
        %1705 = vmatprep.mubr.bf16.mxu0 0
        %1706 = vmatmul.mubr.bf16.gmra.mrb[0].mxu0 %v997
        %v1707 = vpop.f32.mrb[0].mxu0
        %v1708 = vadd.f32 0.0, %v1707
        %v1709 = vpop.f32.mrb[0].mxu0
        %v1710 = vpop.f32.mrb[0].mxu0
        %v1711 = vadd.f32 0.0, %v1710
        %v1712 = vpop.f32.mrb[0].mxu0
        %1713 = vmatprep.mubr.bf16.mxu0 0
        %1714 = vmatmul.mubr.bf16.gmra.mrb[0].mxu0 %v1000
        %v1715 = vpop.f32.mrb[0].mxu0
        %v1716 = vadd.f32 0.0, %v1715
        %v1717 = vpop.f32.mrb[0].mxu0
        %v1718 = vpop.f32.mrb[0].mxu0
        %v1719 = vadd.f32 0.0, %v1718
        %v1720 = vpop.f32.mrb[0].mxu0
        %1721 = vmatprep.mubr.bf16.mxu0 0
        %1722 = vmatmul.mubr.bf16.gmra.mrb[0].mxu0 %v1003
        %v1723 = vpop.f32.mrb[0].mxu0
        %v1724 = vadd.f32 0.0, %v1723
        %v1725 = vpop.f32.mrb[0].mxu0
        %v1726 = vpop.f32.mrb[0].mxu0
        %v1727 = vadd.f32 0.0, %v1726
        %v1728 = vpop.f32.mrb[0].mxu0
        %1729 = vmatprep.mubr.bf16.mxu0 0
        %1730 = vmatmul.mubr.bf16.gmra.mrb[0].mxu0 %v1006
        %v1731 = vpop.f32.mrb[0].mxu0
        %v1732 = vadd.f32 0.0, %v1731
        %v1733 = vpop.f32.mrb[0].mxu0
        %v1734 = vpop.f32.mrb[0].mxu0
        %v1735 = vadd.f32 0.0, %v1734
        %v1736 = vpop.f32.mrb[0].mxu0
        %1737 = vmatprep.mubr.bf16.mxu0 0
        %1738 = vmatmul.mubr.bf16.gmra.mrb[0].mxu0 %v1009
        %v1739 = vpop.f32.mrb[0].mxu0
        %v1740 = vadd.f32 0.0, %v1739
        %v1741 = vpop.f32.mrb[0].mxu0
        %v1742 = vpop.f32.mrb[0].mxu0
        %v1743 = vadd.f32 0.0, %v1742
        %v1744 = vpop.f32.mrb[0].mxu0
        %1745 = vmatprep.mubr.bf16.mxu0 0
        %1746 = vmatmul.mubr.bf16.gmra.mrb[0].mxu0 %v1012
        %v1747 = vpop.f32.mrb[0].mxu0
        %v1748 = vadd.f32 0.0, %v1747
        %v1749 = vpop.f32.mrb[0].mxu0
        %v1750 = vpop.f32.mrb[0].mxu0
        %v1751 = vadd.f32 0.0, %v1750
        %v1752 = vpop.f32.mrb[0].mxu0
        %1753 = vmatprep.mubr.bf16.mxu0 0
        %1754 = vmatmul.mubr.bf16.gmra.mrb[0].mxu0 %v1015
        %v1755 = vpop.f32.mrb[0].mxu0
        %v1756 = vadd.f32 0.0, %v1755
        %v1757 = vpop.f32.mrb[0].mxu0
        %v1758 = vpop.f32.mrb[0].mxu0
        %v1759 = vadd.f32 0.0, %v1758
        %v1760 = vpop.f32.mrb[0].mxu0
        %1761 = vmatprep.mubr.bf16.mxu0 0
        %1762 = vmatmul.mubr.bf16.gmra.mrb[0].mxu0 %v1018
        %v1763 = vpop.f32.mrb[0].mxu0
        %v1764 = vadd.f32 0.0, %v1763
        %v1765 = vpop.f32.mrb[0].mxu0
        %v1766 = vpop.f32.mrb[0].mxu0
        %v1767 = vadd.f32 0.0, %v1766
        %v1768 = vpop.f32.mrb[0].mxu0
        %1769 = vmatprep.mubr.bf16.mxu0 0
        %1770 = vmatmul.mubr.bf16.gmra.mrb[0].mxu0 %v1021
        %v1771 = vpop.f32.mrb[0].mxu0
        %v1772 = vadd.f32 0.0, %v1771
        %v1773 = vpop.f32.mrb[0].mxu0
        %v1774 = vpop.f32.mrb[0].mxu0
        %v1775 = vadd.f32 0.0, %v1774
        %v1776 = vpop.f32.mrb[0].mxu0
        %1777 = vmatprep.mubr.bf16.mxu0 0
        %1778 = vmatmul.mubr.bf16.gmra.mrb[0].mxu0 %v1620
        %v1779 = vpop.f32.mrb[0].mxu0
        %v1780 = vadd.f32 0.0, %v1779
        %v1781 = vpop.f32.mrb[0].mxu0
        %v1782 = vpop.f32.mrb[0].mxu0
        %v1783 = vadd.f32 0.0, %v1782
        %v1784 = vpop.f32.mrb[0].mxu0
        %1785 = vdwg.mxu0
        %v1786 = vadd.f32 %v1580, %v1660
        %v1787 = vadd.f32 %v1581, %v1663
        %v1788 = vadd.f32 %v1582, %v1668
        %v1789 = vadd.f32 %v1583, %v1671
        %v1790 = vadd.f32 %v1584, %v1676
        %v1791 = vadd.f32 %v1585, %v1679
        %v1792 = vadd.f32 %v1586, %v1684
        %v1793 = vadd.f32 %v1587, %v1687
        %v1794 = vadd.f32 %v1588, %v1692
        %v1795 = vadd.f32 %v1589, %v1695
        %v1796 = vadd.f32 %v1590, %v1700
        %v1797 = vadd.f32 %v1591, %v1703
        %v1798 = vadd.f32 %v1592, %v1708
        %v1799 = vadd.f32 %v1593, %v1711
        %v1800 = vadd.f32 %v1594, %v1716
        %v1801 = vadd.f32 %v1595, %v1719
        %v1802 = vadd.f32 %v1596, %v1724
        %v1803 = vadd.f32 %v1597, %v1727
        %v1804 = vadd.f32 %v1598, %v1732
        %v1805 = vadd.f32 %v1599, %v1735
        %v1806 = vadd.f32 %v1600, %v1740
        %v1807 = vadd.f32 %v1601, %v1743
        %v1808 = vadd.f32 %v1602, %v1748
        %v1809 = vadd.f32 %v1603, %v1751
        %v1810 = vadd.f32 %v1604, %v1756
        %v1811 = vadd.f32 %v1605, %v1759
        %v1812 = vadd.f32 %v1606, %v1764
        %v1813 = vadd.f32 %v1607, %v1767
        %v1814 = vadd.f32 %v1608, %v1772
        %v1815 = vadd.f32 %v1609, %v1775
        %v1816 = vadd.f32 %v1610, %v1780
        %v1817 = vadd.f32 %v1611, %v1783
        %v1819 = vshrl.u32 %v237, 16
        %v1821 = vrot.slane %v1819, 4
        %v1822 = vshll.u32 %v237, 16
        %v1824 = vrot.slane %v1822, 5
        %v1825 = vor.u32 %v1821, %v1824
        %v1826 = vrot.slane %v1825, 4
        %v1828 = vshll.u32 %v238, 16
        %v1830 = vrot.slane %v1828, 5
        %v1831 = vsel %vm246, %v1826, %v1830
        %v1832 = vshrl.u32 %v238, 16
        %v1834 = vrot.slane %v1832, 4
        %v1835 = vor.u32 %v1834, %v1830
        %v1836 = vrot.slane %v1835, 4
        %v1838 = vshll.u32 %v239, 16
        %v1840 = vrot.slane %v1838, 5
        %v1841 = vsel %vm246, %v1836, %v1840
        %s1842 = scalar_lea.vmem %s1, 8
        %v1843 = vld [vmem:[%s1842] sm:$0x3]
        %v1844 = vunpack.c.l.b16 %v1831
        %v1845 = vunpack.c.l.b16 %v1841
        %v1846 = vpack.c.b16 %v1845, %v1844
        %v1848 = vsel %vm681, %v1846, 0
        %v1851 = vsel %vm730, %v1843, 0
        %1853 = vmatprep.subr.bf16.mxu0 0
        %1854 = vmatpush1.bf16.msra.mxu0 %v1851
        %1855 = vmatprep.subr.bf16.mxu0 0
        %1856 = vmatpush1.bf16.msra.mxu0 0
        %1857 = vmatprep.subr.bf16.mxu0 0
        %1858 = vmatpush1.bf16.msra.mxu0 0
        %1859 = vmatprep.subr.bf16.mxu0 0
        %1860 = vmatpush1.bf16.msra.mxu0 0
        %1861 = vmatprep.subr.bf16.mxu0 0
        %1862 = vmatpush1.bf16.msra.mxu0 0
        %1863 = vmatprep.subr.bf16.mxu0 0
        %1864 = vmatpush1.bf16.msra.mxu0 0
        %1865 = vmatprep.subr.bf16.mxu0 0
        %1866 = vmatpush1.bf16.msra.mxu0 0
        %1867 = vmatprep.subr.bf16.mxu0 0
        %1868 = vmatpush1.bf16.msra.mxu0 0
        %1869 = vmatprep.subr.bf16.mxu0 0
        %1870 = vmatpush1.bf16.msra.mxu0 0
        %1871 = vmatprep.subr.bf16.mxu0 0
        %1872 = vmatpush1.bf16.msra.mxu0 0
        %1873 = vmatprep.subr.bf16.mxu0 0
        %1874 = vmatpush1.bf16.msra.mxu0 0
        %1875 = vmatprep.subr.bf16.mxu0 0
        %1876 = vmatpush1.bf16.msra.mxu0 0
        %1877 = vmatprep.subr.bf16.mxu0 0
        %1878 = vmatpush1.bf16.msra.mxu0 0
        %1879 = vmatprep.subr.bf16.mxu0 0
        %1880 = vmatpush1.bf16.msra.mxu0 0
        %1881 = vmatprep.subr.bf16.mxu0 0
        %1882 = vmatpush1.bf16.msra.mxu0 0
        %1883 = vmatprep.subr.bf16.mxu0 0
        %1884 = vmatpush1.bf16.msra.mxu0 0
        %1885 = vmatprep.mubr.bf16.mxu0 0
        %1886 = vmatmul.mubr.bf16.gmra.mrb[0].mxu0 %v686
        %v1887 = vpop.f32.mrb[0].mxu0
        %v1888 = vadd.f32 0.0, %v1887
        %v1889 = vpop.f32.mrb[0].mxu0
        %v1890 = vpop.f32.mrb[0].mxu0
        %v1891 = vadd.f32 0.0, %v1890
        %v1892 = vpop.f32.mrb[0].mxu0
        %1893 = vmatprep.mubr.bf16.mxu0 0
        %1894 = vmatmul.mubr.bf16.gmra.mrb[0].mxu0 %v689
        %v1895 = vpop.f32.mrb[0].mxu0
        %v1896 = vadd.f32 0.0, %v1895
        %v1897 = vpop.f32.mrb[0].mxu0
        %v1898 = vpop.f32.mrb[0].mxu0
        %v1899 = vadd.f32 0.0, %v1898
        %v1900 = vpop.f32.mrb[0].mxu0
        %1901 = vmatprep.mubr.bf16.mxu0 0
        %1902 = vmatmul.mubr.bf16.gmra.mrb[0].mxu0 %v692
        %v1903 = vpop.f32.mrb[0].mxu0
        %v1904 = vadd.f32 0.0, %v1903
        %v1905 = vpop.f32.mrb[0].mxu0
        %v1906 = vpop.f32.mrb[0].mxu0
        %v1907 = vadd.f32 0.0, %v1906
        %v1908 = vpop.f32.mrb[0].mxu0
        %1909 = vmatprep.mubr.bf16.mxu0 0
        %1910 = vmatmul.mubr.bf16.gmra.mrb[0].mxu0 %v695
        %v1911 = vpop.f32.mrb[0].mxu0
        %v1912 = vadd.f32 0.0, %v1911
        %v1913 = vpop.f32.mrb[0].mxu0
        %v1914 = vpop.f32.mrb[0].mxu0
        %v1915 = vadd.f32 0.0, %v1914
        %v1916 = vpop.f32.mrb[0].mxu0
        %1917 = vmatprep.mubr.bf16.mxu0 0
        %1918 = vmatmul.mubr.bf16.gmra.mrb[0].mxu0 %v698
        %v1919 = vpop.f32.mrb[0].mxu0
        %v1920 = vadd.f32 0.0, %v1919
        %v1921 = vpop.f32.mrb[0].mxu0
        %v1922 = vpop.f32.mrb[0].mxu0
        %v1923 = vadd.f32 0.0, %v1922
        %v1924 = vpop.f32.mrb[0].mxu0
        %1925 = vmatprep.mubr.bf16.mxu0 0
        %1926 = vmatmul.mubr.bf16.gmra.mrb[0].mxu0 %v701
        %v1927 = vpop.f32.mrb[0].mxu0
        %v1928 = vadd.f32 0.0, %v1927
        %v1929 = vpop.f32.mrb[0].mxu0
        %v1930 = vpop.f32.mrb[0].mxu0
        %v1931 = vadd.f32 0.0, %v1930
        %v1932 = vpop.f32.mrb[0].mxu0
        %1933 = vmatprep.mubr.bf16.mxu0 0
        %1934 = vmatmul.mubr.bf16.gmra.mrb[0].mxu0 %v704
        %v1935 = vpop.f32.mrb[0].mxu0
        %v1936 = vadd.f32 0.0, %v1935
        %v1937 = vpop.f32.mrb[0].mxu0
        %v1938 = vpop.f32.mrb[0].mxu0
        %v1939 = vadd.f32 0.0, %v1938
        %v1940 = vpop.f32.mrb[0].mxu0
        %1941 = vmatprep.mubr.bf16.mxu0 0
        %1942 = vmatmul.mubr.bf16.gmra.mrb[0].mxu0 %v707
        %v1943 = vpop.f32.mrb[0].mxu0
        %v1944 = vadd.f32 0.0, %v1943
        %v1945 = vpop.f32.mrb[0].mxu0
        %v1946 = vpop.f32.mrb[0].mxu0
        %v1947 = vadd.f32 0.0, %v1946
        %v1948 = vpop.f32.mrb[0].mxu0
        %1949 = vmatprep.mubr.bf16.mxu0 0
        %1950 = vmatmul.mubr.bf16.gmra.mrb[0].mxu0 %v710
        %v1951 = vpop.f32.mrb[0].mxu0
        %v1952 = vadd.f32 0.0, %v1951
        %v1953 = vpop.f32.mrb[0].mxu0
        %v1954 = vpop.f32.mrb[0].mxu0
        %v1955 = vadd.f32 0.0, %v1954
        %v1956 = vpop.f32.mrb[0].mxu0
        %1957 = vmatprep.mubr.bf16.mxu0 0
        %1958 = vmatmul.mubr.bf16.gmra.mrb[0].mxu0 %v713
        %v1959 = vpop.f32.mrb[0].mxu0
        %v1960 = vadd.f32 0.0, %v1959
        %v1961 = vpop.f32.mrb[0].mxu0
        %v1962 = vpop.f32.mrb[0].mxu0
        %v1963 = vadd.f32 0.0, %v1962
        %v1964 = vpop.f32.mrb[0].mxu0
        %1965 = vmatprep.mubr.bf16.mxu0 0
        %1966 = vmatmul.mubr.bf16.gmra.mrb[0].mxu0 %v716
        %v1967 = vpop.f32.mrb[0].mxu0
        %v1968 = vadd.f32 0.0, %v1967
        %v1969 = vpop.f32.mrb[0].mxu0
        %v1970 = vpop.f32.mrb[0].mxu0
        %v1971 = vadd.f32 0.0, %v1970
        %v1972 = vpop.f32.mrb[0].mxu0
        %1973 = vmatprep.mubr.bf16.mxu0 0
        %1974 = vmatmul.mubr.bf16.gmra.mrb[0].mxu0 %v719
        %v1975 = vpop.f32.mrb[0].mxu0
        %v1976 = vadd.f32 0.0, %v1975
        %v1977 = vpop.f32.mrb[0].mxu0
        %v1978 = vpop.f32.mrb[0].mxu0
        %v1979 = vadd.f32 0.0, %v1978
        %v1980 = vpop.f32.mrb[0].mxu0
        %1981 = vmatprep.mubr.bf16.mxu0 0
        %1982 = vmatmul.mubr.bf16.gmra.mrb[0].mxu0 %v722
        %v1983 = vpop.f32.mrb[0].mxu0
        %v1984 = vadd.f32 0.0, %v1983
        %v1985 = vpop.f32.mrb[0].mxu0
        %v1986 = vpop.f32.mrb[0].mxu0
        %v1987 = vadd.f32 0.0, %v1986
        %v1988 = vpop.f32.mrb[0].mxu0
        %1989 = vmatprep.mubr.bf16.mxu0 0
        %1990 = vmatmul.mubr.bf16.gmra.mrb[0].mxu0 %v725
        %v1991 = vpop.f32.mrb[0].mxu0
        %v1992 = vadd.f32 0.0, %v1991
        %v1993 = vpop.f32.mrb[0].mxu0
        %v1994 = vpop.f32.mrb[0].mxu0
        %v1995 = vadd.f32 0.0, %v1994
        %v1996 = vpop.f32.mrb[0].mxu0
        %1997 = vmatprep.mubr.bf16.mxu0 0
        %1998 = vmatmul.mubr.bf16.gmra.mrb[0].mxu0 %v728
        %v1999 = vpop.f32.mrb[0].mxu0
        %v2000 = vadd.f32 0.0, %v1999
        %v2001 = vpop.f32.mrb[0].mxu0
        %v2002 = vpop.f32.mrb[0].mxu0
        %v2003 = vadd.f32 0.0, %v2002
        %v2004 = vpop.f32.mrb[0].mxu0
        %2005 = vmatprep.mubr.bf16.mxu0 0
        %2006 = vmatmul.mubr.bf16.gmra.mrb[0].mxu0 %v1848
        %v2007 = vpop.f32.mrb[0].mxu0
        %v2008 = vadd.f32 0.0, %v2007
        %v2009 = vpop.f32.mrb[0].mxu0
        %v2010 = vpop.f32.mrb[0].mxu0
        %v2011 = vadd.f32 0.0, %v2010
        %v2012 = vpop.f32.mrb[0].mxu0
        %2013 = vdwg.mxu0
        %v2014 = vadd.f32 %v1786, %v1888
        %v2015 = vadd.f32 %v1787, %v1891
        %v2016 = vadd.f32 %v1788, %v1896
        %v2017 = vadd.f32 %v1789, %v1899
        %v2018 = vadd.f32 %v1790, %v1904
        %v2019 = vadd.f32 %v1791, %v1907
        %v2020 = vadd.f32 %v1792, %v1912
        %v2021 = vadd.f32 %v1793, %v1915
        %v2022 = vadd.f32 %v1794, %v1920
        %v2023 = vadd.f32 %v1795, %v1923
        %v2024 = vadd.f32 %v1796, %v1928
        %v2025 = vadd.f32 %v1797, %v1931
        %v2026 = vadd.f32 %v1798, %v1936
        %v2027 = vadd.f32 %v1799, %v1939
        %v2028 = vadd.f32 %v1800, %v1944
        %v2029 = vadd.f32 %v1801, %v1947
        %v2030 = vadd.f32 %v1802, %v1952
        %v2031 = vadd.f32 %v1803, %v1955
        %v2032 = vadd.f32 %v1804, %v1960
        %v2033 = vadd.f32 %v1805, %v1963
        %v2034 = vadd.f32 %v1806, %v1968
        %v2035 = vadd.f32 %v1807, %v1971
        %v2036 = vadd.f32 %v1808, %v1976
        %v2037 = vadd.f32 %v1809, %v1979
        %v2038 = vadd.f32 %v1810, %v1984
        %v2039 = vadd.f32 %v1811, %v1987
        %v2040 = vadd.f32 %v1812, %v1992
        %v2041 = vadd.f32 %v1813, %v1995
        %v2042 = vadd.f32 %v1814, %v2000
        %v2043 = vadd.f32 %v1815, %v2003
        %v2044 = vadd.f32 %v1816, %v2008
        %v2045 = vadd.f32 %v1817, %v2011
        %v2047 = vrot.slane %v237, 5
        %v2048 = vrot.slane %v2047, 4
        %v2049 = vrot.slane %v238, 5
        %v2050 = vsel %vm1205, %v2048, %v2049
        %v2051 = vrot.slane %v2049, 4
        %v2052 = vrot.slane %v239, 5
        %v2053 = vsel %vm1205, %v2051, %v2052
        %s2054 = scalar_lea.vmem %s1, 10
        %v2055 = vld [vmem:[%s2054] sm:$0x3]
        %v2056 = vunpack.c.l.b16 %v2050
        %v2057 = vunpack.c.l.b16 %v2053
        %v2058 = vpack.c.b16 %v2057, %v2056
        %v2060 = vsel %vm681, %v2058, 0
        %v2063 = vsel %vm730, %v2055, 0
        %2065 = vmatprep.subr.bf16.mxu0 0
        %2066 = vmatpush1.bf16.msra.mxu0 %v2063
        %2067 = vmatprep.subr.bf16.mxu0 0
        %2068 = vmatpush1.bf16.msra.mxu0 0
        %2069 = vmatprep.subr.bf16.mxu0 0
        %2070 = vmatpush1.bf16.msra.mxu0 0
        %2071 = vmatprep.subr.bf16.mxu0 0
        %2072 = vmatpush1.bf16.msra.mxu0 0
        %2073 = vmatprep.subr.bf16.mxu0 0
        %2074 = vmatpush1.bf16.msra.mxu0 0
        %2075 = vmatprep.subr.bf16.mxu0 0
        %2076 = vmatpush1.bf16.msra.mxu0 0
        %2077 = vmatprep.subr.bf16.mxu0 0
        %2078 = vmatpush1.bf16.msra.mxu0 0
        %2079 = vmatprep.subr.bf16.mxu0 0
        %2080 = vmatpush1.bf16.msra.mxu0 0
        %2081 = vmatprep.subr.bf16.mxu0 0
        %2082 = vmatpush1.bf16.msra.mxu0 0
        %2083 = vmatprep.subr.bf16.mxu0 0
        %2084 = vmatpush1.bf16.msra.mxu0 0
        %2085 = vmatprep.subr.bf16.mxu0 0
        %2086 = vmatpush1.bf16.msra.mxu0 0
        %2087 = vmatprep.subr.bf16.mxu0 0
        %2088 = vmatpush1.bf16.msra.mxu0 0
        %2089 = vmatprep.subr.bf16.mxu0 0
        %2090 = vmatpush1.bf16.msra.mxu0 0
        %2091 = vmatprep.subr.bf16.mxu0 0
        %2092 = vmatpush1.bf16.msra.mxu0 0
        %2093 = vmatprep.subr.bf16.mxu0 0
        %2094 = vmatpush1.bf16.msra.mxu0 0
        %2095 = vmatprep.subr.bf16.mxu0 0
        %2096 = vmatpush1.bf16.msra.mxu0 0
        %2097 = vmatprep.mubr.bf16.mxu0 0
        %2098 = vmatmul.mubr.bf16.gmra.mrb[0].mxu0 %v1372
        %v2099 = vpop.f32.mrb[0].mxu0
        %v2100 = vadd.f32 0.0, %v2099
        %v2101 = vpop.f32.mrb[0].mxu0
        %v2102 = vpop.f32.mrb[0].mxu0
        %v2103 = vadd.f32 0.0, %v2102
        %v2104 = vpop.f32.mrb[0].mxu0
        %2105 = vmatprep.mubr.bf16.mxu0 0
        %2106 = vmatmul.mubr.bf16.gmra.mrb[0].mxu0 %v1375
        %v2107 = vpop.f32.mrb[0].mxu0
        %v2108 = vadd.f32 0.0, %v2107
        %v2109 = vpop.f32.mrb[0].mxu0
        %v2110 = vpop.f32.mrb[0].mxu0
        %v2111 = vadd.f32 0.0, %v2110
        %v2112 = vpop.f32.mrb[0].mxu0
        %2113 = vmatprep.mubr.bf16.mxu0 0
        %2114 = vmatmul.mubr.bf16.gmra.mrb[0].mxu0 %v1378
        %v2115 = vpop.f32.mrb[0].mxu0
        %v2116 = vadd.f32 0.0, %v2115
        %v2117 = vpop.f32.mrb[0].mxu0
        %v2118 = vpop.f32.mrb[0].mxu0
        %v2119 = vadd.f32 0.0, %v2118
        %v2120 = vpop.f32.mrb[0].mxu0
        %2121 = vmatprep.mubr.bf16.mxu0 0
        %2122 = vmatmul.mubr.bf16.gmra.mrb[0].mxu0 %v1381
        %v2123 = vpop.f32.mrb[0].mxu0
        %v2124 = vadd.f32 0.0, %v2123
        %v2125 = vpop.f32.mrb[0].mxu0
        %v2126 = vpop.f32.mrb[0].mxu0
        %v2127 = vadd.f32 0.0, %v2126
        %v2128 = vpop.f32.mrb[0].mxu0
        %2129 = vmatprep.mubr.bf16.mxu0 0
        %2130 = vmatmul.mubr.bf16.gmra.mrb[0].mxu0 %v1384
        %v2131 = vpop.f32.mrb[0].mxu0
        %v2132 = vadd.f32 0.0, %v2131
        %v2133 = vpop.f32.mrb[0].mxu0
        %v2134 = vpop.f32.mrb[0].mxu0
        %v2135 = vadd.f32 0.0, %v2134
        %v2136 = vpop.f32.mrb[0].mxu0
        %2137 = vmatprep.mubr.bf16.mxu0 0
        %2138 = vmatmul.mubr.bf16.gmra.mrb[0].mxu0 %v1387
        %v2139 = vpop.f32.mrb[0].mxu0
        %v2140 = vadd.f32 0.0, %v2139
        %v2141 = vpop.f32.mrb[0].mxu0
        %v2142 = vpop.f32.mrb[0].mxu0
        %v2143 = vadd.f32 0.0, %v2142
        %v2144 = vpop.f32.mrb[0].mxu0
        %2145 = vmatprep.mubr.bf16.mxu0 0
        %2146 = vmatmul.mubr.bf16.gmra.mrb[0].mxu0 %v1390
        %v2147 = vpop.f32.mrb[0].mxu0
        %v2148 = vadd.f32 0.0, %v2147
        %v2149 = vpop.f32.mrb[0].mxu0
        %v2150 = vpop.f32.mrb[0].mxu0
        %v2151 = vadd.f32 0.0, %v2150
        %v2152 = vpop.f32.mrb[0].mxu0
        %2153 = vmatprep.mubr.bf16.mxu0 0
        %2154 = vmatmul.mubr.bf16.gmra.mrb[0].mxu0 %v1393
        %v2155 = vpop.f32.mrb[0].mxu0
        %v2156 = vadd.f32 0.0, %v2155
        %v2157 = vpop.f32.mrb[0].mxu0
        %v2158 = vpop.f32.mrb[0].mxu0
        %v2159 = vadd.f32 0.0, %v2158
        %v2160 = vpop.f32.mrb[0].mxu0
        %2161 = vmatprep.mubr.bf16.mxu0 0
        %2162 = vmatmul.mubr.bf16.gmra.mrb[0].mxu0 %v1396
        %v2163 = vpop.f32.mrb[0].mxu0
        %v2164 = vadd.f32 0.0, %v2163
        %v2165 = vpop.f32.mrb[0].mxu0
        %v2166 = vpop.f32.mrb[0].mxu0
        %v2167 = vadd.f32 0.0, %v2166
        %v2168 = vpop.f32.mrb[0].mxu0
        %2169 = vmatprep.mubr.bf16.mxu0 0
        %2170 = vmatmul.mubr.bf16.gmra.mrb[0].mxu0 %v1399
        %v2171 = vpop.f32.mrb[0].mxu0
        %v2172 = vadd.f32 0.0, %v2171
        %v2173 = vpop.f32.mrb[0].mxu0
        %v2174 = vpop.f32.mrb[0].mxu0
        %v2175 = vadd.f32 0.0, %v2174
        %v2176 = vpop.f32.mrb[0].mxu0
        %2177 = vmatprep.mubr.bf16.mxu0 0
        %2178 = vmatmul.mubr.bf16.gmra.mrb[0].mxu0 %v1402
        %v2179 = vpop.f32.mrb[0].mxu0
        %v2180 = vadd.f32 0.0, %v2179
        %v2181 = vpop.f32.mrb[0].mxu0
        %v2182 = vpop.f32.mrb[0].mxu0
        %v2183 = vadd.f32 0.0, %v2182
        %v2184 = vpop.f32.mrb[0].mxu0
        %2185 = vmatprep.mubr.bf16.mxu0 0
        %2186 = vmatmul.mubr.bf16.gmra.mrb[0].mxu0 %v1405
        %v2187 = vpop.f32.mrb[0].mxu0
        %v2188 = vadd.f32 0.0, %v2187
        %v2189 = vpop.f32.mrb[0].mxu0
        %v2190 = vpop.f32.mrb[0].mxu0
        %v2191 = vadd.f32 0.0, %v2190
        %v2192 = vpop.f32.mrb[0].mxu0
        %2193 = vmatprep.mubr.bf16.mxu0 0
        %2194 = vmatmul.mubr.bf16.gmra.mrb[0].mxu0 %v1408
        %v2195 = vpop.f32.mrb[0].mxu0
        %v2196 = vadd.f32 0.0, %v2195
        %v2197 = vpop.f32.mrb[0].mxu0
        %v2198 = vpop.f32.mrb[0].mxu0
        %v2199 = vadd.f32 0.0, %v2198
        %v2200 = vpop.f32.mrb[0].mxu0
        %2201 = vmatprep.mubr.bf16.mxu0 0
        %2202 = vmatmul.mubr.bf16.gmra.mrb[0].mxu0 %v1411
        %v2203 = vpop.f32.mrb[0].mxu0
        %v2204 = vadd.f32 0.0, %v2203
        %v2205 = vpop.f32.mrb[0].mxu0
        %v2206 = vpop.f32.mrb[0].mxu0
        %v2207 = vadd.f32 0.0, %v2206
        %v2208 = vpop.f32.mrb[0].mxu0
        %2209 = vmatprep.mubr.bf16.mxu0 0
        %2210 = vmatmul.mubr.bf16.gmra.mrb[0].mxu0 %v1414
        %v2211 = vpop.f32.mrb[0].mxu0
        %v2212 = vadd.f32 0.0, %v2211
        %v2213 = vpop.f32.mrb[0].mxu0
        %v2214 = vpop.f32.mrb[0].mxu0
        %v2215 = vadd.f32 0.0, %v2214
        %v2216 = vpop.f32.mrb[0].mxu0
        %2217 = vmatprep.mubr.bf16.mxu0 0
        %2218 = vmatmul.mubr.bf16.gmra.mrb[0].mxu0 %v2060
        %v2219 = vpop.f32.mrb[0].mxu0
        %v2220 = vadd.f32 0.0, %v2219
        %v2221 = vpop.f32.mrb[0].mxu0
        %v2222 = vpop.f32.mrb[0].mxu0
        %v2223 = vadd.f32 0.0, %v2222
        %v2224 = vpop.f32.mrb[0].mxu0
        %2225 = vdwg.mxu0
        %v2226 = vadd.f32 %v2014, %v2100
        %v2227 = vadd.f32 %v2015, %v2103
        %v2228 = vadd.f32 %v2016, %v2108
        %v2229 = vadd.f32 %v2017, %v2111
        %v2230 = vadd.f32 %v2018, %v2116
        %v2231 = vadd.f32 %v2019, %v2119
        %v2232 = vadd.f32 %v2020, %v2124
        %v2233 = vadd.f32 %v2021, %v2127
        %v2234 = vadd.f32 %v2022, %v2132
        %v2235 = vadd.f32 %v2023, %v2135
        %v2236 = vadd.f32 %v2024, %v2140
        %v2237 = vadd.f32 %v2025, %v2143
        %v2238 = vadd.f32 %v2026, %v2148
        %v2239 = vadd.f32 %v2027, %v2151
        %v2240 = vadd.f32 %v2028, %v2156
        %v2241 = vadd.f32 %v2029, %v2159
        %v2242 = vadd.f32 %v2030, %v2164
        %v2243 = vadd.f32 %v2031, %v2167
        %v2244 = vadd.f32 %v2032, %v2172
        %v2245 = vadd.f32 %v2033, %v2175
        %v2246 = vadd.f32 %v2034, %v2180
        %v2247 = vadd.f32 %v2035, %v2183
        %v2248 = vadd.f32 %v2036, %v2188
        %v2249 = vadd.f32 %v2037, %v2191
        %v2250 = vadd.f32 %v2038, %v2196
        %v2251 = vadd.f32 %v2039, %v2199
        %v2252 = vadd.f32 %v2040, %v2204
        %v2253 = vadd.f32 %v2041, %v2207
        %v2254 = vadd.f32 %v2042, %v2212
        %v2255 = vadd.f32 %v2043, %v2215
        %v2256 = vadd.f32 %v2044, %v2220
        %v2257 = vadd.f32 %v2045, %v2223
        %s2258 = scalar_lea.vmem %s1, 12
        %v2259 = vld [vmem:[%s2258] sm:$0x3]
        %v2262 = vunpack.c.l.b16 %v240
        %v2263 = vunpack.c.l.b16 %v241
        %v2264 = vpack.c.b16 %v2263, %v2262
        %v2266 = vsel %vm681, %v2264, 0
        %v2269 = vsel %vm730, %v2259, 0
        %2271 = vmatprep.subr.bf16.mxu0 0
        %2272 = vmatpush1.bf16.msra.mxu0 %v2269
        %2273 = vmatprep.subr.bf16.mxu0 0
        %2274 = vmatpush1.bf16.msra.mxu0 0
        %2275 = vmatprep.subr.bf16.mxu0 0
        %2276 = vmatpush1.bf16.msra.mxu0 0
        %2277 = vmatprep.subr.bf16.mxu0 0
        %2278 = vmatpush1.bf16.msra.mxu0 0
        %2279 = vmatprep.subr.bf16.mxu0 0
        %2280 = vmatpush1.bf16.msra.mxu0 0
        %2281 = vmatprep.subr.bf16.mxu0 0
        %2282 = vmatpush1.bf16.msra.mxu0 0
        %2283 = vmatprep.subr.bf16.mxu0 0
        %2284 = vmatpush1.bf16.msra.mxu0 0
        %2285 = vmatprep.subr.bf16.mxu0 0
        %2286 = vmatpush1.bf16.msra.mxu0 0
        %2287 = vmatprep.subr.bf16.mxu0 0
        %2288 = vmatpush1.bf16.msra.mxu0 0
        %2289 = vmatprep.subr.bf16.mxu0 0
        %2290 = vmatpush1.bf16.msra.mxu0 0
        %2291 = vmatprep.subr.bf16.mxu0 0
        %2292 = vmatpush1.bf16.msra.mxu0 0
        %2293 = vmatprep.subr.bf16.mxu0 0
        %2294 = vmatpush1.bf16.msra.mxu0 0
        %2295 = vmatprep.subr.bf16.mxu0 0
        %2296 = vmatpush1.bf16.msra.mxu0 0
        %2297 = vmatprep.subr.bf16.mxu0 0
        %2298 = vmatpush1.bf16.msra.mxu0 0
        %2299 = vmatprep.subr.bf16.mxu0 0
        %2300 = vmatpush1.bf16.msra.mxu0 0
        %2301 = vmatprep.subr.bf16.mxu0 0
        %2302 = vmatpush1.bf16.msra.mxu0 0
        %2303 = vmatprep.mubr.bf16.mxu0 0
        %2304 = vmatmul.mubr.bf16.gmra.mrb[0].mxu0 %v982
        %v2305 = vpop.f32.mrb[0].mxu0
        %v2306 = vadd.f32 0.0, %v2305
        %v2307 = vpop.f32.mrb[0].mxu0
        %v2308 = vpop.f32.mrb[0].mxu0
        %v2309 = vadd.f32 0.0, %v2308
        %v2310 = vpop.f32.mrb[0].mxu0
        %2311 = vmatprep.mubr.bf16.mxu0 0
        %2312 = vmatmul.mubr.bf16.gmra.mrb[0].mxu0 %v985
        %v2313 = vpop.f32.mrb[0].mxu0
        %v2314 = vadd.f32 0.0, %v2313
        %v2315 = vpop.f32.mrb[0].mxu0
        %v2316 = vpop.f32.mrb[0].mxu0
        %v2317 = vadd.f32 0.0, %v2316
        %v2318 = vpop.f32.mrb[0].mxu0
        %2319 = vmatprep.mubr.bf16.mxu0 0
        %2320 = vmatmul.mubr.bf16.gmra.mrb[0].mxu0 %v988
        %v2321 = vpop.f32.mrb[0].mxu0
        %v2322 = vadd.f32 0.0, %v2321
        %v2323 = vpop.f32.mrb[0].mxu0
        %v2324 = vpop.f32.mrb[0].mxu0
        %v2325 = vadd.f32 0.0, %v2324
        %v2326 = vpop.f32.mrb[0].mxu0
        %2327 = vmatprep.mubr.bf16.mxu0 0
        %2328 = vmatmul.mubr.bf16.gmra.mrb[0].mxu0 %v991
        %v2329 = vpop.f32.mrb[0].mxu0
        %v2330 = vadd.f32 0.0, %v2329
        %v2331 = vpop.f32.mrb[0].mxu0
        %v2332 = vpop.f32.mrb[0].mxu0
        %v2333 = vadd.f32 0.0, %v2332
        %v2334 = vpop.f32.mrb[0].mxu0
        %2335 = vmatprep.mubr.bf16.mxu0 0
        %2336 = vmatmul.mubr.bf16.gmra.mrb[0].mxu0 %v994
        %v2337 = vpop.f32.mrb[0].mxu0
        %v2338 = vadd.f32 0.0, %v2337
        %v2339 = vpop.f32.mrb[0].mxu0
        %v2340 = vpop.f32.mrb[0].mxu0
        %v2341 = vadd.f32 0.0, %v2340
        %v2342 = vpop.f32.mrb[0].mxu0
        %2343 = vmatprep.mubr.bf16.mxu0 0
        %2344 = vmatmul.mubr.bf16.gmra.mrb[0].mxu0 %v997
        %v2345 = vpop.f32.mrb[0].mxu0
        %v2346 = vadd.f32 0.0, %v2345
        %v2347 = vpop.f32.mrb[0].mxu0
        %v2348 = vpop.f32.mrb[0].mxu0
        %v2349 = vadd.f32 0.0, %v2348
        %v2350 = vpop.f32.mrb[0].mxu0
        %2351 = vmatprep.mubr.bf16.mxu0 0
        %2352 = vmatmul.mubr.bf16.gmra.mrb[0].mxu0 %v1000
        %v2353 = vpop.f32.mrb[0].mxu0
        %v2354 = vadd.f32 0.0, %v2353
        %v2355 = vpop.f32.mrb[0].mxu0
        %v2356 = vpop.f32.mrb[0].mxu0
        %v2357 = vadd.f32 0.0, %v2356
        %v2358 = vpop.f32.mrb[0].mxu0
        %2359 = vmatprep.mubr.bf16.mxu0 0
        %2360 = vmatmul.mubr.bf16.gmra.mrb[0].mxu0 %v1003
        %v2361 = vpop.f32.mrb[0].mxu0
        %v2362 = vadd.f32 0.0, %v2361
        %v2363 = vpop.f32.mrb[0].mxu0
        %v2364 = vpop.f32.mrb[0].mxu0
        %v2365 = vadd.f32 0.0, %v2364
        %v2366 = vpop.f32.mrb[0].mxu0
        %2367 = vmatprep.mubr.bf16.mxu0 0
        %2368 = vmatmul.mubr.bf16.gmra.mrb[0].mxu0 %v1006
        %v2369 = vpop.f32.mrb[0].mxu0
        %v2370 = vadd.f32 0.0, %v2369
        %v2371 = vpop.f32.mrb[0].mxu0
        %v2372 = vpop.f32.mrb[0].mxu0
        %v2373 = vadd.f32 0.0, %v2372
        %v2374 = vpop.f32.mrb[0].mxu0
        %2375 = vmatprep.mubr.bf16.mxu0 0
        %2376 = vmatmul.mubr.bf16.gmra.mrb[0].mxu0 %v1009
        %v2377 = vpop.f32.mrb[0].mxu0
        %v2378 = vadd.f32 0.0, %v2377
        %v2379 = vpop.f32.mrb[0].mxu0
        %v2380 = vpop.f32.mrb[0].mxu0
        %v2381 = vadd.f32 0.0, %v2380
        %v2382 = vpop.f32.mrb[0].mxu0
        %2383 = vmatprep.mubr.bf16.mxu0 0
        %2384 = vmatmul.mubr.bf16.gmra.mrb[0].mxu0 %v1012
        %v2385 = vpop.f32.mrb[0].mxu0
        %v2386 = vadd.f32 0.0, %v2385
        %v2387 = vpop.f32.mrb[0].mxu0
        %v2388 = vpop.f32.mrb[0].mxu0
        %v2389 = vadd.f32 0.0, %v2388
        %v2390 = vpop.f32.mrb[0].mxu0
        %2391 = vmatprep.mubr.bf16.mxu0 0
        %2392 = vmatmul.mubr.bf16.gmra.mrb[0].mxu0 %v1015
        %v2393 = vpop.f32.mrb[0].mxu0
        %v2394 = vadd.f32 0.0, %v2393
        %v2395 = vpop.f32.mrb[0].mxu0
        %v2396 = vpop.f32.mrb[0].mxu0
        %v2397 = vadd.f32 0.0, %v2396
        %v2398 = vpop.f32.mrb[0].mxu0
        %2399 = vmatprep.mubr.bf16.mxu0 0
        %2400 = vmatmul.mubr.bf16.gmra.mrb[0].mxu0 %v1018
        %v2401 = vpop.f32.mrb[0].mxu0
        %v2402 = vadd.f32 0.0, %v2401
        %v2403 = vpop.f32.mrb[0].mxu0
        %v2404 = vpop.f32.mrb[0].mxu0
        %v2405 = vadd.f32 0.0, %v2404
        %v2406 = vpop.f32.mrb[0].mxu0
        %2407 = vmatprep.mubr.bf16.mxu0 0
        %2408 = vmatmul.mubr.bf16.gmra.mrb[0].mxu0 %v1021
        %v2409 = vpop.f32.mrb[0].mxu0
        %v2410 = vadd.f32 0.0, %v2409
        %v2411 = vpop.f32.mrb[0].mxu0
        %v2412 = vpop.f32.mrb[0].mxu0
        %v2413 = vadd.f32 0.0, %v2412
        %v2414 = vpop.f32.mrb[0].mxu0
        %2415 = vmatprep.mubr.bf16.mxu0 0
        %2416 = vmatmul.mubr.bf16.gmra.mrb[0].mxu0 %v1620
        %v2417 = vpop.f32.mrb[0].mxu0
        %v2418 = vadd.f32 0.0, %v2417
        %v2419 = vpop.f32.mrb[0].mxu0
        %v2420 = vpop.f32.mrb[0].mxu0
        %v2421 = vadd.f32 0.0, %v2420
        %v2422 = vpop.f32.mrb[0].mxu0
        %2423 = vmatprep.mubr.bf16.mxu0 0
        %2424 = vmatmul.mubr.bf16.gmra.mrb[0].mxu0 %v2266
        %v2425 = vpop.f32.mrb[0].mxu0
        %v2426 = vadd.f32 0.0, %v2425
        %v2427 = vpop.f32.mrb[0].mxu0
        %v2428 = vpop.f32.mrb[0].mxu0
        %v2429 = vadd.f32 0.0, %v2428
        %v2430 = vpop.f32.mrb[0].mxu0
        %2431 = vdwg.mxu0
        %v2432 = vadd.f32 %v2226, %v2306
        %v2433 = vadd.f32 %v2227, %v2309
        %v2434 = vadd.f32 %v2228, %v2314
        %v2435 = vadd.f32 %v2229, %v2317
        %v2436 = vadd.f32 %v2230, %v2322
        %v2437 = vadd.f32 %v2231, %v2325
        %v2438 = vadd.f32 %v2232, %v2330
        %v2439 = vadd.f32 %v2233, %v2333
        %v2440 = vadd.f32 %v2234, %v2338
        %v2441 = vadd.f32 %v2235, %v2341
        %v2442 = vadd.f32 %v2236, %v2346
        %v2443 = vadd.f32 %v2237, %v2349
        %v2444 = vadd.f32 %v2238, %v2354
        %v2445 = vadd.f32 %v2239, %v2357
        %v2446 = vadd.f32 %v2240, %v2362
        %v2447 = vadd.f32 %v2241, %v2365
        %v2448 = vadd.f32 %v2242, %v2370
        %v2449 = vadd.f32 %v2243, %v2373
        %v2450 = vadd.f32 %v2244, %v2378
        %v2451 = vadd.f32 %v2245, %v2381
        %v2452 = vadd.f32 %v2246, %v2386
        %v2453 = vadd.f32 %v2247, %v2389
        %v2454 = vadd.f32 %v2248, %v2394
        %v2455 = vadd.f32 %v2249, %v2397
        %v2456 = vadd.f32 %v2250, %v2402
        %v2457 = vadd.f32 %v2251, %v2405
        %v2458 = vadd.f32 %v2252, %v2410
        %v2459 = vadd.f32 %v2253, %v2413
        %v2460 = vadd.f32 %v2254, %v2418
        %v2461 = vadd.f32 %v2255, %v2421
        %v2462 = vadd.f32 %v2256, %v2426
        %v2463 = vadd.f32 %v2257, %v2429
        %v2465 = vshrl.u32 %v240, 16
        %v2467 = vrot.slane %v2465, 4
        %v2468 = vshll.u32 %v240, 16
        %v2470 = vrot.slane %v2468, 5
        %v2471 = vor.u32 %v2467, %v2470
        %v2472 = vrot.slane %v2471, 4
        %v2474 = vshll.u32 %v241, 16
        %v2476 = vrot.slane %v2474, 5
        %v2477 = vsel %vm246, %v2472, %v2476
        %v2478 = vshrl.u32 %v241, 16
        %v2480 = vrot.slane %v2478, 4
        %v2481 = vor.u32 %v2480, %v2476
        %v2482 = vrot.slane %v2481, 4
        %v2484 = vshll.u32 %v242, 16
        %v2486 = vrot.slane %v2484, 5
        %v2487 = vsel %vm246, %v2482, %v2486
        %s2488 = scalar_lea.vmem %s1, 14
        %v2489 = vld [vmem:[%s2488] sm:$0x3]
        %v2490 = vunpack.c.l.b16 %v2477
        %v2491 = vunpack.c.l.b16 %v2487
        %v2492 = vpack.c.b16 %v2491, %v2490
        %v2494 = vsel %vm681, %v2492, 0
        %v2497 = vsel %vm730, %v2489, 0
        %2499 = vmatprep.subr.bf16.mxu0 0
        %2500 = vmatpush1.bf16.msra.mxu0 %v2497
        %2501 = vmatprep.subr.bf16.mxu0 0
        %2502 = vmatpush1.bf16.msra.mxu0 0
        %2503 = vmatprep.subr.bf16.mxu0 0
        %2504 = vmatpush1.bf16.msra.mxu0 0
        %2505 = vmatprep.subr.bf16.mxu0 0
        %2506 = vmatpush1.bf16.msra.mxu0 0
        %2507 = vmatprep.subr.bf16.mxu0 0
        %2508 = vmatpush1.bf16.msra.mxu0 0
        %2509 = vmatprep.subr.bf16.mxu0 0
        %2510 = vmatpush1.bf16.msra.mxu0 0
        %2511 = vmatprep.subr.bf16.mxu0 0
        %2512 = vmatpush1.bf16.msra.mxu0 0
        %2513 = vmatprep.subr.bf16.mxu0 0
        %2514 = vmatpush1.bf16.msra.mxu0 0
        %2515 = vmatprep.subr.bf16.mxu0 0
        %2516 = vmatpush1.bf16.msra.mxu0 0
        %2517 = vmatprep.subr.bf16.mxu0 0
        %2518 = vmatpush1.bf16.msra.mxu0 0
        %2519 = vmatprep.subr.bf16.mxu0 0
        %2520 = vmatpush1.bf16.msra.mxu0 0
        %2521 = vmatprep.subr.bf16.mxu0 0
        %2522 = vmatpush1.bf16.msra.mxu0 0
        %2523 = vmatprep.subr.bf16.mxu0 0
        %2524 = vmatpush1.bf16.msra.mxu0 0
        %2525 = vmatprep.subr.bf16.mxu0 0
        %2526 = vmatpush1.bf16.msra.mxu0 0
        %2527 = vmatprep.subr.bf16.mxu0 0
        %2528 = vmatpush1.bf16.msra.mxu0 0
        %2529 = vmatprep.subr.bf16.mxu0 0
        %2530 = vmatpush1.bf16.msra.mxu0 0
        %2531 = vmatprep.mubr.bf16.mxu0 0
        %2532 = vmatmul.mubr.bf16.gmra.mrb[0].mxu0 %v689
        %v2533 = vpop.f32.mrb[0].mxu0
        %v2534 = vadd.f32 0.0, %v2533
        %v2535 = vpop.f32.mrb[0].mxu0
        %v2536 = vpop.f32.mrb[0].mxu0
        %v2537 = vadd.f32 0.0, %v2536
        %v2538 = vpop.f32.mrb[0].mxu0
        %2539 = vmatprep.mubr.bf16.mxu0 0
        %2540 = vmatmul.mubr.bf16.gmra.mrb[0].mxu0 %v692
        %v2541 = vpop.f32.mrb[0].mxu0
        %v2542 = vadd.f32 0.0, %v2541
        %v2543 = vpop.f32.mrb[0].mxu0
        %v2544 = vpop.f32.mrb[0].mxu0
        %v2545 = vadd.f32 0.0, %v2544
        %v2546 = vpop.f32.mrb[0].mxu0
        %2547 = vmatprep.mubr.bf16.mxu0 0
        %2548 = vmatmul.mubr.bf16.gmra.mrb[0].mxu0 %v695
        %v2549 = vpop.f32.mrb[0].mxu0
        %v2550 = vadd.f32 0.0, %v2549
        %v2551 = vpop.f32.mrb[0].mxu0
        %v2552 = vpop.f32.mrb[0].mxu0
        %v2553 = vadd.f32 0.0, %v2552
        %v2554 = vpop.f32.mrb[0].mxu0
        %2555 = vmatprep.mubr.bf16.mxu0 0
        %2556 = vmatmul.mubr.bf16.gmra.mrb[0].mxu0 %v698
        %v2557 = vpop.f32.mrb[0].mxu0
        %v2558 = vadd.f32 0.0, %v2557
        %v2559 = vpop.f32.mrb[0].mxu0
        %v2560 = vpop.f32.mrb[0].mxu0
        %v2561 = vadd.f32 0.0, %v2560
        %v2562 = vpop.f32.mrb[0].mxu0
        %2563 = vmatprep.mubr.bf16.mxu0 0
        %2564 = vmatmul.mubr.bf16.gmra.mrb[0].mxu0 %v701
        %v2565 = vpop.f32.mrb[0].mxu0
        %v2566 = vadd.f32 0.0, %v2565
        %v2567 = vpop.f32.mrb[0].mxu0
        %v2568 = vpop.f32.mrb[0].mxu0
        %v2569 = vadd.f32 0.0, %v2568
        %v2570 = vpop.f32.mrb[0].mxu0
        %2571 = vmatprep.mubr.bf16.mxu0 0
        %2572 = vmatmul.mubr.bf16.gmra.mrb[0].mxu0 %v704
        %v2573 = vpop.f32.mrb[0].mxu0
        %v2574 = vadd.f32 0.0, %v2573
        %v2575 = vpop.f32.mrb[0].mxu0
        %v2576 = vpop.f32.mrb[0].mxu0
        %v2577 = vadd.f32 0.0, %v2576
        %v2578 = vpop.f32.mrb[0].mxu0
        %2579 = vmatprep.mubr.bf16.mxu0 0
        %2580 = vmatmul.mubr.bf16.gmra.mrb[0].mxu0 %v707
        %v2581 = vpop.f32.mrb[0].mxu0
        %v2582 = vadd.f32 0.0, %v2581
        %v2583 = vpop.f32.mrb[0].mxu0
        %v2584 = vpop.f32.mrb[0].mxu0
        %v2585 = vadd.f32 0.0, %v2584
        %v2586 = vpop.f32.mrb[0].mxu0
        %2587 = vmatprep.mubr.bf16.mxu0 0
        %2588 = vmatmul.mubr.bf16.gmra.mrb[0].mxu0 %v710
        %v2589 = vpop.f32.mrb[0].mxu0
        %v2590 = vadd.f32 0.0, %v2589
        %v2591 = vpop.f32.mrb[0].mxu0
        %v2592 = vpop.f32.mrb[0].mxu0
        %v2593 = vadd.f32 0.0, %v2592
        %v2594 = vpop.f32.mrb[0].mxu0
        %2595 = vmatprep.mubr.bf16.mxu0 0
        %2596 = vmatmul.mubr.bf16.gmra.mrb[0].mxu0 %v713
        %v2597 = vpop.f32.mrb[0].mxu0
        %v2598 = vadd.f32 0.0, %v2597
        %v2599 = vpop.f32.mrb[0].mxu0
        %v2600 = vpop.f32.mrb[0].mxu0
        %v2601 = vadd.f32 0.0, %v2600
        %v2602 = vpop.f32.mrb[0].mxu0
        %2603 = vmatprep.mubr.bf16.mxu0 0
        %2604 = vmatmul.mubr.bf16.gmra.mrb[0].mxu0 %v716
        %v2605 = vpop.f32.mrb[0].mxu0
        %v2606 = vadd.f32 0.0, %v2605
        %v2607 = vpop.f32.mrb[0].mxu0
        %v2608 = vpop.f32.mrb[0].mxu0
        %v2609 = vadd.f32 0.0, %v2608
        %v2610 = vpop.f32.mrb[0].mxu0
        %2611 = vmatprep.mubr.bf16.mxu0 0
        %2612 = vmatmul.mubr.bf16.gmra.mrb[0].mxu0 %v719
        %v2613 = vpop.f32.mrb[0].mxu0
        %v2614 = vadd.f32 0.0, %v2613
        %v2615 = vpop.f32.mrb[0].mxu0
        %v2616 = vpop.f32.mrb[0].mxu0
        %v2617 = vadd.f32 0.0, %v2616
        %v2618 = vpop.f32.mrb[0].mxu0
        %2619 = vmatprep.mubr.bf16.mxu0 0
        %2620 = vmatmul.mubr.bf16.gmra.mrb[0].mxu0 %v722
        %v2621 = vpop.f32.mrb[0].mxu0
        %v2622 = vadd.f32 0.0, %v2621
        %v2623 = vpop.f32.mrb[0].mxu0
        %v2624 = vpop.f32.mrb[0].mxu0
        %v2625 = vadd.f32 0.0, %v2624
        %v2626 = vpop.f32.mrb[0].mxu0
        %2627 = vmatprep.mubr.bf16.mxu0 0
        %2628 = vmatmul.mubr.bf16.gmra.mrb[0].mxu0 %v725
        %v2629 = vpop.f32.mrb[0].mxu0
        %v2630 = vadd.f32 0.0, %v2629
        %v2631 = vpop.f32.mrb[0].mxu0
        %v2632 = vpop.f32.mrb[0].mxu0
        %v2633 = vadd.f32 0.0, %v2632
        %v2634 = vpop.f32.mrb[0].mxu0
        %2635 = vmatprep.mubr.bf16.mxu0 0
        %2636 = vmatmul.mubr.bf16.gmra.mrb[0].mxu0 %v728
        %v2637 = vpop.f32.mrb[0].mxu0
        %v2638 = vadd.f32 0.0, %v2637
        %v2639 = vpop.f32.mrb[0].mxu0
        %v2640 = vpop.f32.mrb[0].mxu0
        %v2641 = vadd.f32 0.0, %v2640
        %v2642 = vpop.f32.mrb[0].mxu0
        %2643 = vmatprep.mubr.bf16.mxu0 0
        %2644 = vmatmul.mubr.bf16.gmra.mrb[0].mxu0 %v1848
        %v2645 = vpop.f32.mrb[0].mxu0
        %v2646 = vadd.f32 0.0, %v2645
        %v2647 = vpop.f32.mrb[0].mxu0
        %v2648 = vpop.f32.mrb[0].mxu0
        %v2649 = vadd.f32 0.0, %v2648
        %v2650 = vpop.f32.mrb[0].mxu0
        %2651 = vmatprep.mubr.bf16.mxu0 0
        %2652 = vmatmul.mubr.bf16.gmra.mrb[0].mxu0 %v2494
        %v2653 = vpop.f32.mrb[0].mxu0
        %v2654 = vadd.f32 0.0, %v2653
        %v2655 = vpop.f32.mrb[0].mxu0
        %v2656 = vpop.f32.mrb[0].mxu0
        %v2657 = vadd.f32 0.0, %v2656
        %v2658 = vpop.f32.mrb[0].mxu0
        %2659 = vdwg.mxu0
        %v2660 = vadd.f32 %v2432, %v2534
        %v2661 = vadd.f32 %v2433, %v2537
        %v2662 = vadd.f32 %v2434, %v2542
        %v2663 = vadd.f32 %v2435, %v2545
        %v2664 = vadd.f32 %v2436, %v2550
        %v2665 = vadd.f32 %v2437, %v2553
        %v2666 = vadd.f32 %v2438, %v2558
        %v2667 = vadd.f32 %v2439, %v2561
        %v2668 = vadd.f32 %v2440, %v2566
        %v2669 = vadd.f32 %v2441, %v2569
        %v2670 = vadd.f32 %v2442, %v2574
        %v2671 = vadd.f32 %v2443, %v2577
        %v2672 = vadd.f32 %v2444, %v2582
        %v2673 = vadd.f32 %v2445, %v2585
        %v2674 = vadd.f32 %v2446, %v2590
        %v2675 = vadd.f32 %v2447, %v2593
        %v2676 = vadd.f32 %v2448, %v2598
        %v2677 = vadd.f32 %v2449, %v2601
        %v2678 = vadd.f32 %v2450, %v2606
        %v2679 = vadd.f32 %v2451, %v2609
        %v2680 = vadd.f32 %v2452, %v2614
        %v2681 = vadd.f32 %v2453, %v2617
        %v2682 = vadd.f32 %v2454, %v2622
        %v2683 = vadd.f32 %v2455, %v2625
        %v2684 = vadd.f32 %v2456, %v2630
        %v2685 = vadd.f32 %v2457, %v2633
        %v2686 = vadd.f32 %v2458, %v2638
        %v2687 = vadd.f32 %v2459, %v2641
        %v2688 = vadd.f32 %v2460, %v2646
        %v2689 = vadd.f32 %v2461, %v2649
        %v2690 = vadd.f32 %v2462, %v2654
        %v2691 = vadd.f32 %v2463, %v2657
        %v2693 = vrot.slane %v240, 5
        %v2694 = vrot.slane %v2693, 4
        %v2695 = vrot.slane %v241, 5
        %v2696 = vsel %vm1205, %v2694, %v2695
        %v2697 = vrot.slane %v2695, 4
        %v2698 = vrot.slane %v242, 5
        %v2699 = vsel %vm1205, %v2697, %v2698
        %s2700 = scalar_lea.vmem %s1, 16
        %v2701 = vld [vmem:[%s2700] sm:$0x3]
        %v2702 = vunpack.c.l.b16 %v2696
        %v2703 = vunpack.c.l.b16 %v2699
        %v2704 = vpack.c.b16 %v2703, %v2702
        %v2706 = vsel %vm681, %v2704, 0
        %v2709 = vsel %vm730, %v2701, 0
        %2711 = vmatprep.subr.bf16.mxu0 0
        %2712 = vmatpush1.bf16.msra.mxu0 %v2709
        %2713 = vmatprep.subr.bf16.mxu0 0
        %2714 = vmatpush1.bf16.msra.mxu0 0
        %2715 = vmatprep.subr.bf16.mxu0 0
        %2716 = vmatpush1.bf16.msra.mxu0 0
        %2717 = vmatprep.subr.bf16.mxu0 0
        %2718 = vmatpush1.bf16.msra.mxu0 0
        %2719 = vmatprep.subr.bf16.mxu0 0
        %2720 = vmatpush1.bf16.msra.mxu0 0
        %2721 = vmatprep.subr.bf16.mxu0 0
        %2722 = vmatpush1.bf16.msra.mxu0 0
        %2723 = vmatprep.subr.bf16.mxu0 0
        %2724 = vmatpush1.bf16.msra.mxu0 0
        %2725 = vmatprep.subr.bf16.mxu0 0
        %2726 = vmatpush1.bf16.msra.mxu0 0
        %2727 = vmatprep.subr.bf16.mxu0 0
        %2728 = vmatpush1.bf16.msra.mxu0 0
        %2729 = vmatprep.subr.bf16.mxu0 0
        %2730 = vmatpush1.bf16.msra.mxu0 0
        %2731 = vmatprep.subr.bf16.mxu0 0
        %2732 = vmatpush1.bf16.msra.mxu0 0
        %2733 = vmatprep.subr.bf16.mxu0 0
        %2734 = vmatpush1.bf16.msra.mxu0 0
        %2735 = vmatprep.subr.bf16.mxu0 0
        %2736 = vmatpush1.bf16.msra.mxu0 0
        %2737 = vmatprep.subr.bf16.mxu0 0
        %2738 = vmatpush1.bf16.msra.mxu0 0
        %2739 = vmatprep.subr.bf16.mxu0 0
        %2740 = vmatpush1.bf16.msra.mxu0 0
        %2741 = vmatprep.subr.bf16.mxu0 0
        %2742 = vmatpush1.bf16.msra.mxu0 0
        %2743 = vmatprep.mubr.bf16.mxu0 0
        %2744 = vmatmul.mubr.bf16.gmra.mrb[0].mxu0 %v1375
        %v2745 = vpop.f32.mrb[0].mxu0
        %v2746 = vadd.f32 0.0, %v2745
        %v2747 = vpop.f32.mrb[0].mxu0
        %v2748 = vpop.f32.mrb[0].mxu0
        %v2749 = vadd.f32 0.0, %v2748
        %v2750 = vpop.f32.mrb[0].mxu0
        %2751 = vmatprep.mubr.bf16.mxu0 0
        %2752 = vmatmul.mubr.bf16.gmra.mrb[0].mxu0 %v1378
        %v2753 = vpop.f32.mrb[0].mxu0
        %v2754 = vadd.f32 0.0, %v2753
        %v2755 = vpop.f32.mrb[0].mxu0
        %v2756 = vpop.f32.mrb[0].mxu0
        %v2757 = vadd.f32 0.0, %v2756
        %v2758 = vpop.f32.mrb[0].mxu0
        %2759 = vmatprep.mubr.bf16.mxu0 0
        %2760 = vmatmul.mubr.bf16.gmra.mrb[0].mxu0 %v1381
        %v2761 = vpop.f32.mrb[0].mxu0
        %v2762 = vadd.f32 0.0, %v2761
        %v2763 = vpop.f32.mrb[0].mxu0
        %v2764 = vpop.f32.mrb[0].mxu0
        %v2765 = vadd.f32 0.0, %v2764
        %v2766 = vpop.f32.mrb[0].mxu0
        %2767 = vmatprep.mubr.bf16.mxu0 0
        %2768 = vmatmul.mubr.bf16.gmra.mrb[0].mxu0 %v1384
        %v2769 = vpop.f32.mrb[0].mxu0
        %v2770 = vadd.f32 0.0, %v2769
        %v2771 = vpop.f32.mrb[0].mxu0
        %v2772 = vpop.f32.mrb[0].mxu0
        %v2773 = vadd.f32 0.0, %v2772
        %v2774 = vpop.f32.mrb[0].mxu0
        %2775 = vmatprep.mubr.bf16.mxu0 0
        %2776 = vmatmul.mubr.bf16.gmra.mrb[0].mxu0 %v1387
        %v2777 = vpop.f32.mrb[0].mxu0
        %v2778 = vadd.f32 0.0, %v2777
        %v2779 = vpop.f32.mrb[0].mxu0
        %v2780 = vpop.f32.mrb[0].mxu0
        %v2781 = vadd.f32 0.0, %v2780
        %v2782 = vpop.f32.mrb[0].mxu0
        %2783 = vmatprep.mubr.bf16.mxu0 0
        %2784 = vmatmul.mubr.bf16.gmra.mrb[0].mxu0 %v1390
        %v2785 = vpop.f32.mrb[0].mxu0
        %v2786 = vadd.f32 0.0, %v2785
        %v2787 = vpop.f32.mrb[0].mxu0
        %v2788 = vpop.f32.mrb[0].mxu0
        %v2789 = vadd.f32 0.0, %v2788
        %v2790 = vpop.f32.mrb[0].mxu0
        %2791 = vmatprep.mubr.bf16.mxu0 0
        %2792 = vmatmul.mubr.bf16.gmra.mrb[0].mxu0 %v1393
        %v2793 = vpop.f32.mrb[0].mxu0
        %v2794 = vadd.f32 0.0, %v2793
        %v2795 = vpop.f32.mrb[0].mxu0
        %v2796 = vpop.f32.mrb[0].mxu0
        %v2797 = vadd.f32 0.0, %v2796
        %v2798 = vpop.f32.mrb[0].mxu0
        %2799 = vmatprep.mubr.bf16.mxu0 0
        %2800 = vmatmul.mubr.bf16.gmra.mrb[0].mxu0 %v1396
        %v2801 = vpop.f32.mrb[0].mxu0
        %v2802 = vadd.f32 0.0, %v2801
        %v2803 = vpop.f32.mrb[0].mxu0
        %v2804 = vpop.f32.mrb[0].mxu0
        %v2805 = vadd.f32 0.0, %v2804
        %v2806 = vpop.f32.mrb[0].mxu0
        %2807 = vmatprep.mubr.bf16.mxu0 0
        %2808 = vmatmul.mubr.bf16.gmra.mrb[0].mxu0 %v1399
        %v2809 = vpop.f32.mrb[0].mxu0
        %v2810 = vadd.f32 0.0, %v2809
        %v2811 = vpop.f32.mrb[0].mxu0
        %v2812 = vpop.f32.mrb[0].mxu0
        %v2813 = vadd.f32 0.0, %v2812
        %v2814 = vpop.f32.mrb[0].mxu0
        %2815 = vmatprep.mubr.bf16.mxu0 0
        %2816 = vmatmul.mubr.bf16.gmra.mrb[0].mxu0 %v1402
        %v2817 = vpop.f32.mrb[0].mxu0
        %v2818 = vadd.f32 0.0, %v2817
        %v2819 = vpop.f32.mrb[0].mxu0
        %v2820 = vpop.f32.mrb[0].mxu0
        %v2821 = vadd.f32 0.0, %v2820
        %v2822 = vpop.f32.mrb[0].mxu0
        %2823 = vmatprep.mubr.bf16.mxu0 0
        %2824 = vmatmul.mubr.bf16.gmra.mrb[0].mxu0 %v1405
        %v2825 = vpop.f32.mrb[0].mxu0
        %v2826 = vadd.f32 0.0, %v2825
        %v2827 = vpop.f32.mrb[0].mxu0
        %v2828 = vpop.f32.mrb[0].mxu0
        %v2829 = vadd.f32 0.0, %v2828
        %v2830 = vpop.f32.mrb[0].mxu0
        %2831 = vmatprep.mubr.bf16.mxu0 0
        %2832 = vmatmul.mubr.bf16.gmra.mrb[0].mxu0 %v1408
        %v2833 = vpop.f32.mrb[0].mxu0
        %v2834 = vadd.f32 0.0, %v2833
        %v2835 = vpop.f32.mrb[0].mxu0
        %v2836 = vpop.f32.mrb[0].mxu0
        %v2837 = vadd.f32 0.0, %v2836
        %v2838 = vpop.f32.mrb[0].mxu0
        %2839 = vmatprep.mubr.bf16.mxu0 0
        %2840 = vmatmul.mubr.bf16.gmra.mrb[0].mxu0 %v1411
        %v2841 = vpop.f32.mrb[0].mxu0
        %v2842 = vadd.f32 0.0, %v2841
        %v2843 = vpop.f32.mrb[0].mxu0
        %v2844 = vpop.f32.mrb[0].mxu0
        %v2845 = vadd.f32 0.0, %v2844
        %v2846 = vpop.f32.mrb[0].mxu0
        %2847 = vmatprep.mubr.bf16.mxu0 0
        %2848 = vmatmul.mubr.bf16.gmra.mrb[0].mxu0 %v1414
        %v2849 = vpop.f32.mrb[0].mxu0
        %v2850 = vadd.f32 0.0, %v2849
        %v2851 = vpop.f32.mrb[0].mxu0
        %v2852 = vpop.f32.mrb[0].mxu0
        %v2853 = vadd.f32 0.0, %v2852
        %v2854 = vpop.f32.mrb[0].mxu0
        %2855 = vmatprep.mubr.bf16.mxu0 0
        %2856 = vmatmul.mubr.bf16.gmra.mrb[0].mxu0 %v2060
        %v2857 = vpop.f32.mrb[0].mxu0
        %v2858 = vadd.f32 0.0, %v2857
        %v2859 = vpop.f32.mrb[0].mxu0
        %v2860 = vpop.f32.mrb[0].mxu0
        %v2861 = vadd.f32 0.0, %v2860
        %v2862 = vpop.f32.mrb[0].mxu0
        %2863 = vmatprep.mubr.bf16.mxu0 0
        %2864 = vmatmul.mubr.bf16.gmra.mrb[0].mxu0 %v2706
        %v2865 = vpop.f32.mrb[0].mxu0
        %v2866 = vadd.f32 0.0, %v2865
        %v2867 = vpop.f32.mrb[0].mxu0
        %v2868 = vpop.f32.mrb[0].mxu0
        %v2869 = vadd.f32 0.0, %v2868
        %v2870 = vpop.f32.mrb[0].mxu0
        %2871 = vdwg.mxu0
        %v2872 = vadd.f32 %v2660, %v2746
        %v2873 = vadd.f32 %v2661, %v2749
        %v2874 = vadd.f32 %v2662, %v2754
        %v2875 = vadd.f32 %v2663, %v2757
        %v2876 = vadd.f32 %v2664, %v2762
        %v2877 = vadd.f32 %v2665, %v2765
        %v2878 = vadd.f32 %v2666, %v2770
        %v2879 = vadd.f32 %v2667, %v2773
        %v2880 = vadd.f32 %v2668, %v2778
        %v2881 = vadd.f32 %v2669, %v2781
        %v2882 = vadd.f32 %v2670, %v2786
        %v2883 = vadd.f32 %v2671, %v2789
        %v2884 = vadd.f32 %v2672, %v2794
        %v2885 = vadd.f32 %v2673, %v2797
        %v2886 = vadd.f32 %v2674, %v2802
        %v2887 = vadd.f32 %v2675, %v2805
        %v2888 = vadd.f32 %v2676, %v2810
        %v2889 = vadd.f32 %v2677, %v2813
        %v2890 = vadd.f32 %v2678, %v2818
        %v2891 = vadd.f32 %v2679, %v2821
        %v2892 = vadd.f32 %v2680, %v2826
        %v2893 = vadd.f32 %v2681, %v2829
        %v2894 = vadd.f32 %v2682, %v2834
        %v2895 = vadd.f32 %v2683, %v2837
        %v2896 = vadd.f32 %v2684, %v2842
        %v2897 = vadd.f32 %v2685, %v2845
        %v2898 = vadd.f32 %v2686, %v2850
        %v2899 = vadd.f32 %v2687, %v2853
        %v2900 = vadd.f32 %v2688, %v2858
        %v2901 = vadd.f32 %v2689, %v2861
        %v2902 = vadd.f32 %v2690, %v2866
        %v2903 = vadd.f32 %v2691, %v2869
        %v2904 = vld [vmem:[%s2] sm:$0x1]
        %v2906 = vlaneseq
        %v2907 = vshrl.u32 %v2906, 7
        %v2908 = vsub.s32 0, %v2907
        %v2909 = vrot.slane %v2904, %v2908
        %v2911 = vadd.f32 %v2872, %v2909
        %v2912 = vadd.f32 %v2873, %v2909
        %v2913 = vadd.f32 %v2874, %v2909
        %v2914 = vadd.f32 %v2875, %v2909
        %v2915 = vadd.f32 %v2876, %v2909
        %v2916 = vadd.f32 %v2877, %v2909
        %v2917 = vadd.f32 %v2878, %v2909
        %v2918 = vadd.f32 %v2879, %v2909
        %v2919 = vadd.f32 %v2880, %v2909
        %v2920 = vadd.f32 %v2881, %v2909
        %v2921 = vadd.f32 %v2882, %v2909
        %v2922 = vadd.f32 %v2883, %v2909
        %v2923 = vadd.f32 %v2884, %v2909
        %v2924 = vadd.f32 %v2885, %v2909
        %v2925 = vadd.f32 %v2886, %v2909
        %v2926 = vadd.f32 %v2887, %v2909
        %v2927 = vadd.f32 %v2888, %v2909
        %v2928 = vadd.f32 %v2889, %v2909
        %v2929 = vadd.f32 %v2890, %v2909
        %v2930 = vadd.f32 %v2891, %v2909
        %v2931 = vadd.f32 %v2892, %v2909
        %v2932 = vadd.f32 %v2893, %v2909
        %v2933 = vadd.f32 %v2894, %v2909
        %v2934 = vadd.f32 %v2895, %v2909
        %v2935 = vadd.f32 %v2896, %v2909
        %v2936 = vadd.f32 %v2897, %v2909
        %v2937 = vadd.f32 %v2898, %v2909
        %v2938 = vadd.f32 %v2899, %v2909
        %v2939 = vadd.f32 %v2900, %v2909
        %v2940 = vadd.f32 %v2901, %v2909
        %v2941 = vadd.f32 %v2902, %v2909
        %v2942 = vadd.f32 %v2903, %v2909
        %v2943 = vmax.f32 %v2911, 0.0
        %v2944 = vmax.f32 %v2912, 0.0
        %v2945 = vmax.f32 %v2913, 0.0
        %v2946 = vmax.f32 %v2914, 0.0
        %v2947 = vmax.f32 %v2915, 0.0
        %v2948 = vmax.f32 %v2916, 0.0
        %v2949 = vmax.f32 %v2917, 0.0
        %v2950 = vmax.f32 %v2918, 0.0
        %v2951 = vmax.f32 %v2919, 0.0
        %v2952 = vmax.f32 %v2920, 0.0
        %v2953 = vmax.f32 %v2921, 0.0
        %v2954 = vmax.f32 %v2922, 0.0
        %v2955 = vmax.f32 %v2923, 0.0
        %v2956 = vmax.f32 %v2924, 0.0
        %v2957 = vmax.f32 %v2925, 0.0
        %v2958 = vmax.f32 %v2926, 0.0
        %v2959 = vmax.f32 %v2927, 0.0
        %v2960 = vmax.f32 %v2928, 0.0
        %v2961 = vmax.f32 %v2929, 0.0
        %v2962 = vmax.f32 %v2930, 0.0
        %v2963 = vmax.f32 %v2931, 0.0
        %v2964 = vmax.f32 %v2932, 0.0
        %v2965 = vmax.f32 %v2933, 0.0
        %v2966 = vmax.f32 %v2934, 0.0
        %v2967 = vmax.f32 %v2935, 0.0
        %v2968 = vmax.f32 %v2936, 0.0
        %v2969 = vmax.f32 %v2937, 0.0
        %v2970 = vmax.f32 %v2938, 0.0
        %v2971 = vmax.f32 %v2939, 0.0
        %v2972 = vmax.f32 %v2940, 0.0
        %v2973 = vmax.f32 %v2941, 0.0
        %v2974 = vmax.f32 %v2942, 0.0
        %v2975 = vpack.c.bf16 %v2944, %v2943
        %v2976 = vpack.c.bf16 %v2946, %v2945
        %v2977 = vpack.c.bf16 %v2948, %v2947
        %v2978 = vpack.c.bf16 %v2950, %v2949
        %v2979 = vpack.c.bf16 %v2952, %v2951
        %v2980 = vpack.c.bf16 %v2954, %v2953
        %v2981 = vpack.c.bf16 %v2956, %v2955
        %v2982 = vpack.c.bf16 %v2958, %v2957
        %v2983 = vpack.c.bf16 %v2960, %v2959
        %v2984 = vpack.c.bf16 %v2962, %v2961
        %v2985 = vpack.c.bf16 %v2964, %v2963
        %v2986 = vpack.c.bf16 %v2966, %v2965
        %v2987 = vpack.c.bf16 %v2968, %v2967
        %v2988 = vpack.c.bf16 %v2970, %v2969
        %v2989 = vpack.c.bf16 %v2972, %v2971
        %v2990 = vpack.c.bf16 %v2974, %v2973
        %v3007 = vunpack.c.l.b16 %v2975
        %v3008 = vunpack.c.h.b16 %v2975
        %v3009 = vunpack.c.l.b16 %v2976
        %v3010 = vunpack.c.h.b16 %v2976
        %v3011 = vunpack.c.l.b16 %v2977
        %v3012 = vunpack.c.h.b16 %v2977
        %v3013 = vunpack.c.l.b16 %v2978
        %v3014 = vunpack.c.h.b16 %v2978
        %v3015 = vunpack.c.l.b16 %v2979
        %v3016 = vunpack.c.h.b16 %v2979
        %v3017 = vunpack.c.l.b16 %v2980
        %v3018 = vunpack.c.h.b16 %v2980
        %v3019 = vunpack.c.l.b16 %v2981
        %v3020 = vunpack.c.h.b16 %v2981
        %v3021 = vunpack.c.l.b16 %v2982
        %v3022 = vunpack.c.h.b16 %v2982
        %v3023 = vunpack.c.l.b16 %v2983
        %v3024 = vunpack.c.h.b16 %v2983
        %v3025 = vunpack.c.l.b16 %v2984
        %v3026 = vunpack.c.h.b16 %v2984
        %v3027 = vunpack.c.l.b16 %v2985
        %v3028 = vunpack.c.h.b16 %v2985
        %v3029 = vunpack.c.l.b16 %v2986
        %v3030 = vunpack.c.h.b16 %v2986
        %v3031 = vunpack.c.l.b16 %v2987
        %v3032 = vunpack.c.h.b16 %v2987
        %v3033 = vunpack.c.l.b16 %v2988
        %v3034 = vunpack.c.h.b16 %v2988
        %v3035 = vunpack.c.l.b16 %v2989
        %v3036 = vunpack.c.h.b16 %v2989
        %v3037 = vunpack.c.l.b16 %v2990
        %v3038 = vunpack.c.h.b16 %v2990
        %v3039 = vpack.c.b16 %v3007, %v3007
        %v3040 = vpack.c.b16 %v3008, %v3008
        %v3041 = vpack.c.b16 %v3009, %v3009
        %v3042 = vpack.c.b16 %v3010, %v3010
        %v3043 = vpack.c.b16 %v3011, %v3011
        %v3044 = vpack.c.b16 %v3012, %v3012
        %v3045 = vpack.c.b16 %v3013, %v3013
        %v3046 = vpack.c.b16 %v3014, %v3014
        %v3047 = vpack.c.b16 %v3015, %v3015
        %v3048 = vpack.c.b16 %v3016, %v3016
        %v3049 = vpack.c.b16 %v3017, %v3017
        %v3050 = vpack.c.b16 %v3018, %v3018
        %v3051 = vpack.c.b16 %v3019, %v3019
        %v3052 = vpack.c.b16 %v3020, %v3020
        %v3053 = vpack.c.b16 %v3021, %v3021
        %v3054 = vpack.c.b16 %v3022, %v3022
        %v3055 = vpack.c.b16 %v3023, %v3023
        %v3056 = vpack.c.b16 %v3024, %v3024
        %v3057 = vpack.c.b16 %v3025, %v3025
        %v3058 = vpack.c.b16 %v3026, %v3026
        %v3059 = vpack.c.b16 %v3027, %v3027
        %v3060 = vpack.c.b16 %v3028, %v3028
        %v3061 = vpack.c.b16 %v3029, %v3029
        %v3062 = vpack.c.b16 %v3030, %v3030
        %v3063 = vpack.c.b16 %v3031, %v3031
        %v3064 = vpack.c.b16 %v3032, %v3032
        %v3065 = vpack.c.b16 %v3033, %v3033
        %v3066 = vpack.c.b16 %v3034, %v3034
        %v3067 = vpack.c.b16 %v3035, %v3035
        %v3068 = vpack.c.b16 %v3036, %v3036
        %v3069 = vpack.c.b16 %v3037, %v3037
        %v3070 = vpack.c.b16 %v3038, %v3038
        %3103 = vst [vmem:[%s177] sm:$0xf] %v3039
        %3104 = vst [vmem:[%s177 + $0x4] sm:$0xf] %v3040
        %3105 = vst [vmem:[%s177 + $0x8] sm:$0xf] %v3041
        %3106 = vst [vmem:[%s177 + $0xc] sm:$0xf] %v3042
        %3107 = vst [vmem:[%s177 + $0x10] sm:$0xf] %v3043
        %3108 = vst [vmem:[%s177 + $0x14] sm:$0xf] %v3044
        %3109 = vst [vmem:[%s177 + $0x18] sm:$0xf] %v3045
        %3110 = vst [vmem:[%s177 + $0x1c] sm:$0xf] %v3046
        %3111 = vst [vmem:[%s177 + $0x20] sm:$0xf] %v3047
        %3112 = vst [vmem:[%s177 + $0x24] sm:$0xf] %v3048
        %3113 = vst [vmem:[%s177 + $0x28] sm:$0xf] %v3049
        %3114 = vst [vmem:[%s177 + $0x2c] sm:$0xf] %v3050
        %3115 = vst [vmem:[%s177 + $0x30] sm:$0xf] %v3051
        %3116 = vst [vmem:[%s177 + $0x34] sm:$0xf] %v3052
        %3117 = vst [vmem:[%s177 + $0x38] sm:$0xf] %v3053
        %3118 = vst [vmem:[%s177 + $0x3c] sm:$0xf] %v3054
        %3119 = vst [vmem:[%s177 + $0x40] sm:$0xf] %v3055
        %3120 = vst [vmem:[%s177 + $0x44] sm:$0xf] %v3056
        %3121 = vst [vmem:[%s177 + $0x48] sm:$0xf] %v3057
        %3122 = vst [vmem:[%s177 + $0x4c] sm:$0xf] %v3058
        %3123 = vst [vmem:[%s177 + $0x50] sm:$0xf] %v3059
        %3124 = vst [vmem:[%s177 + $0x54] sm:$0xf] %v3060
        %3125 = vst [vmem:[%s177 + $0x58] sm:$0xf] %v3061
        %3126 = vst [vmem:[%s177 + $0x5c] sm:$0xf] %v3062
        %3127 = vst [vmem:[%s177 + $0x60] sm:$0xf] %v3063
        %3128 = vst [vmem:[%s177 + $0x64] sm:$0xf] %v3064
        %3129 = vst [vmem:[%s177 + $0x68] sm:$0xf] %v3065
        %3130 = vst [vmem:[%s177 + $0x6c] sm:$0xf] %v3066
        %3131 = vst [vmem:[%s177 + $0x70] sm:$0xf] %v3067
        %3132 = vst [vmem:[%s177 + $0x74] sm:$0xf] %v3068
        %3133 = vst [vmem:[%s177 + $0x78] sm:$0xf] %v3069
        %3134 = vst [vmem:[%s177 + $0x7c] sm:$0xf] %v3070
        %s3135 = sand.u32 %s107, 1
        %s3136 = scalar_lea.sflag [#allocation3], %s3135
        %s3137 = sand.u32 %s107, 1
        %s3138 = smul.addr %s3137, 128
        %s3139 = scalar_lea.vmem [#allocation2], %s3138
        // Predicated region
        $region33: #{tpu_custom_call.1} parent=31 // pred_check
          %p3140 = pneg %p117
        $region34: #{tpu_custom_call.1} parent=31 // pred_check_branch
          %3142 = sbr.rel (%p3140) target = $region36
        $region35: #{tpu_custom_call.1} parent=31 // pred_region
          %s3143 = smul.u32 16, %s22
          %s3145 = ssub.s32 2048, 2048
          %3146 = vsyncadd %s3136, %s3145
          %s3147 = smul.addr %s3143, 2
          %s3148 = smul.addr %s21, 32
          %s3149 = sadd.s32 %s3147, %s3148
          %s3150 = smul.addr %s3149, 64
          %s3151 = scalar_lea.hbm %s3, %s3150
          %s3152 = sshll.u32 %s3139, 4
          %s3153 = int_to_ptr.vmem [resolvable:$true] %s3152
          %3158 = dma.vmem_to_hbm [thread:$0]  %s3153, 2048, %s3151, %s3136, 64, 64, 4
        $region36: #{tpu_custom_call.1} parent=31 // pred_fallthru
          _
      $region32: #{tpu_custom_call.1} parent=5 // pred_fallthru
        _
      %p3159 = scmp.le.s32.totalorder 2, %s12
      // Predicated region
      $region37: #{tpu_custom_call.1} parent=5 // pred_check
        %p3160 = pneg %p3159
      $region38: #{tpu_custom_call.1} parent=5 // pred_check_branch
        %3162 = sbr.rel (%p3160) target = $region40
      $region39: #{tpu_custom_call.1} parent=5 // pred_region
        %s3163 = ssub.s32 %s12, 2
        // Predicated region
        $region41: #{tpu_custom_call.1} parent=39 // pred_check
          %p3164 = pneg %p123
        $region42: #{tpu_custom_call.1} parent=39 // pred_check_branch
          %3166 = sbr.rel (%p3164) target = $region44
        $region43: #{tpu_custom_call.1} parent=39 // pred_region
          %s3167 = sand.u32 %s108, 1
          %s3168 = scalar_lea.sflag [#allocation3], %s3167
          %s3169 = sand.u32 %s108, 1
          %s3170 = smul.addr %s3169, 128
          %s3171 = scalar_lea.vmem [#allocation2], %s3170
          %3172 = dma.done %s3168, 2048
        $region44: #{tpu_custom_call.1} parent=39 // pred_fallthru
          _
      $region40: #{tpu_custom_call.1} parent=5 // pred_fallthru
        _
    $region6: #{tpu_custom_call.1} parent=1 // loop_footer
      %s16 = sadd.s32 1, %s12
    $region7: #{tpu_custom_call.1} parent=1 // loop_footer_branch
      %11 = sbr.rel target = $region3
    $region8: #{tpu_custom_call.1} parent=1 // loop_exit
      _
    %3173 = vsyncpa [#allocation3], 1
    %s3174 = scalar_lea.sflag [#allocation3], 1
    %3175 = vsyncpa %s3174, 1

</llo_original>
